<compile_context>
chip_gen: v7x
topology: tpu7x:2x2x1
jax: 0.10.0
libtpu: 0.0.40
codegen_flags: <defaults>
</compile_context>

<pallas_src>
import functools

import numpy as np
import jax
import jax.numpy as jnp
from jax.experimental import pallas as pl
from jax.experimental.pallas import tpu as pltpu


N_FEATURES = 10          # cfg.model.n_features (synthetic choice)
N_PAD = 128              # lane-dense padded width of the final layer output
IN_HW = 16               # 16 -> 8 -> 4 -> 2 after three stride-2 convs
FLAT_DIM = 32 * 2 * 2    # LazyLinear infers 128 input features


# ------------------------------ fused kernel --------------------------------

def _lmodel_kernel(p1_ref, w1_ref, b1_ref,
                   s2_ref, w2_ref, b2_ref,
                   s3_ref, w3_ref, b3_ref,
                   wf1_ref, bf1_ref, wf2_ref, bf2_ref, wf3_ref, bf3_ref,
                   o_ref, *, batch):
    f32 = jnp.float32

    # conv1 + ReLU: im2col patches (64*B, 9) @ (9, 32)   (patches built in wrapper)
    a1 = jnp.dot(p1_ref[...], w1_ref[...], preferred_element_type=f32)
    a1 = jnp.maximum(a1 + b1_ref[...], 0.0)

    # conv2 + ReLU: 9 taps, each (selection @ act) @ w_tap, accumulated in f32
    acc2 = jnp.zeros((s2_ref.shape[1], w2_ref.shape[2]), f32)
    for t in range(9):
        g = jnp.dot(s2_ref[t], a1, preferred_element_type=f32)
        acc2 = acc2 + jnp.dot(g, w2_ref[t], preferred_element_type=f32)
    a2 = jnp.maximum(acc2 + b2_ref[...], 0.0)

    # conv3 + ReLU
    acc3 = jnp.zeros((s3_ref.shape[1], w3_ref.shape[2]), f32)
    for t in range(9):
        g = jnp.dot(s3_ref[t], a2, preferred_element_type=f32)
        acc3 = acc3 + jnp.dot(g, w3_ref[t], preferred_element_type=f32)
    a3 = jnp.maximum(acc3 + b3_ref[...], 0.0)

    # Flatten(1) (PyTorch NCHW order is baked into wf1's row permutation) + fc1
    h = jnp.zeros((batch, wf1_ref.shape[2]), f32)
    for p in range(wf1_ref.shape[0]):          # 4 spatial positions of the 2x2 map
        h = h + jnp.dot(a3[p * batch:(p + 1) * batch, :], wf1_ref[p],
                        preferred_element_type=f32)
    h = jnp.maximum(h + bf1_ref[...], 0.0)
    # nn.Dropout(p=0.5): identity at inference/eval.
    h = jnp.dot(h, wf2_ref[...], preferred_element_type=f32)
    h = jnp.maximum(h + bf2_ref[...], 0.0)
    # nn.Dropout(p=0.5): identity at inference/eval.
    out = jnp.dot(h, wf3_ref[...], preferred_element_type=f32) + bf3_ref[...]
    o_ref[...] = out.astype(o_ref.dtype)


def _fullblock(shape):
    n = len(shape)
    return pl.BlockSpec(shape, lambda i, _n=n: (0,) * _n)


# --------------------------- parameter packing -------------------------------

def _make_selection(h_in, batch):
    """Per-tap 0/1 matrices for a 3x3 / stride-2 / pad-1 conv on a square map.

    s[t, (i*OW + j)*B + b, (hi*W + wi)*B + b] = 1 where (hi, wi) = (2i+kh-1,
    2j+kw-1) is in-bounds; out-of-bounds taps are all-zero rows (zero padding).
    """
    h_out = h_in // 2
    s = np.zeros((9, h_out * h_out * batch, h_in * h_in * batch), np.float32)
    for kh in range(3):
        for kw in range(3):
            t = kh * 3 + kw
            for i in range(h_out):
                for j in range(h_out):
                    hi, wi = 2 * i + kh - 1, 2 * j + kw - 1
                    if 0 <= hi < h_in and 0 <= wi < h_in:
                        for b in range(batch):
                            s[t, (i * h_out + j) * batch + b,
                              (hi * h_in + wi) * batch + b] = 1.0
    return jnp.asarray(s)


def init_params(key):
    ks = jax.random.split(key, 6)

    def w(k, shape, fan_in):
        return (jax.random.normal(k, shape, jnp.float32) / jnp.sqrt(fan_in))

    return {
        # conv weights stored as (kh, kw, cin, cout)
        "w1": w(ks[0], (3, 3, 1, 32), 9 * 1),   "b1": jnp.zeros((32,), jnp.float32),
        "w2": w(ks[1], (3, 3, 32, 32), 9 * 32), "b2": jnp.zeros((32,), jnp.float32),
        "w3": w(ks[2], (3, 3, 32, 32), 9 * 32), "b3": jnp.zeros((32,), jnp.float32),
        # fc weights stored as (in, out)  (== PyTorch weight.T)
        "fc1_w": w(ks[3], (FLAT_DIM, 512), FLAT_DIM), "fc1_b": jnp.zeros((512,), jnp.float32),
        "fc2_w": w(ks[4], (512, 256), 512),           "fc2_b": jnp.zeros((256,), jnp.float32),
        "fc3_w": w(ks[5], (256, N_FEATURES), 256),    "fc3_b": jnp.zeros((N_FEATURES,), jnp.float32),
    }


def pack_params(params, batch):
    """One-time (init) repack into the fused kernel's layouts."""
    w1 = params["w1"].reshape(9, 32)                 # rows = (kh, kw), Cin=1
    b1 = params["b1"].reshape(1, -1)
    w2 = params["w2"].reshape(9, 32, 32)             # [tap, ci, co]
    b2 = params["b2"].reshape(1, -1)
    w3 = params["w3"].reshape(9, 32, 32)
    b3 = params["b3"].reshape(1, -1)
    s2 = _make_selection(8, batch)                   # (9, 16*B, 64*B)
    s3 = _make_selection(4, batch)                   # (9, 4*B, 16*B)
    # fc1: PyTorch flatten index f = c*4 + p  ->  wf1[p, c, :] = fc1_w[c*4+p, :]
    wf1 = params["fc1_w"].reshape(32, 4, 512).transpose(1, 0, 2)
    bf1 = params["fc1_b"].reshape(1, -1)
    wf2 = params["fc2_w"]
    bf2 = params["fc2_b"].reshape(1, -1)
    # fc3 padded to a lane-dense 128-wide output.
    wf3 = jnp.zeros((256, N_PAD), jnp.float32).at[:, :N_FEATURES].set(params["fc3_w"])
    bf3 = jnp.zeros((1, N_PAD), jnp.float32).at[0, :N_FEATURES].set(params["fc3_b"])
    return (w1, b1, s2, w2, b2, s3, w3, b3, wf1, bf1, wf2, bf2, wf3, bf3)


# --------------------------------- forward -----------------------------------

def lmodel_forward(packed, x_nchw):
    B, _, H, W = x_nchw.shape
    OH, OW = H // 2, W // 2
    # conv1 im2col on the tiny raw input (XLA side, 2 KB -> 4.6 KB), rows
    # ordered (spatial-major, batch-minor) to match the in-kernel layout.
    xp = jnp.pad(x_nchw[:, 0], ((0, 0), (1, 1), (1, 1)))
    taps = [xp[:, kh:kh + 2 * OH:2, kw:kw + 2 * OW:2]
            for kh in range(3) for kw in range(3)]
    p1 = jnp.stack(taps, axis=-1)                          # (B, OH, OW, 9)
    p1 = jnp.transpose(p1, (1, 2, 0, 3)).reshape(OH * OW * B, 9)

    operands = (p1,) + tuple(packed)
    out = pl.pallas_call(
        functools.partial(_lmodel_kernel, batch=B),
        out_shape=jax.ShapeDtypeStruct((B, N_PAD), jnp.float32),
        grid=(1,),
        in_specs=[_fullblock(a.shape) for a in operands],
        out_specs=_fullblock((B, N_PAD)),
        compiler_params=pltpu.CompilerParams(dimension_semantics=("arbitrary",)),
    )(*operands)
    return out[:, :N_FEATURES]


# ----------------------- pure-JAX reference (for checking) -------------------

def reference_forward(params, x_nchw):
    hi = jax.lax.Precision.HIGHEST
    x = jnp.transpose(x_nchw, (0, 2, 3, 1))                # NHWC
    for l in (1, 2, 3):
        x = jax.lax.conv_general_dilated(
            x, params[f"w{l}"], window_strides=(2, 2), padding=((1, 1), (1, 1)),
            dimension_numbers=("NHWC", "HWIO", "NHWC"), precision=hi)
        x = jax.nn.relu(x + params[f"b{l}"])
    x = jnp.transpose(x, (0, 3, 1, 2)).reshape(x.shape[0], -1)   # NCHW Flatten(1)
    x = jax.nn.relu(jnp.dot(x, params["fc1_w"], precision=hi) + params["fc1_b"])
    x = jax.nn.relu(jnp.dot(x, params["fc2_w"], precision=hi) + params["fc2_b"])
    return jnp.dot(x, params["fc3_w"], precision=hi) + params["fc3_b"]


if __name__ == "__main__":
    key = jax.random.PRNGKey(0)
    pkey, xkey = jax.random.split(key)
    params = init_params(pkey)
    x = jax.random.normal(xkey, (2, 1, IN_HW, IN_HW), jnp.float32)

    packed = pack_params(params, batch=x.shape[0])
    out = jax.block_until_ready(jax.jit(lmodel_forward)(packed, x))
    assert out.shape == (x.shape[0], N_FEATURES), out.shape
    assert bool(jnp.all(jnp.isfinite(out)))

    # Numerical check against a plain-JAX implementation of the same module.
    ref = jax.block_until_ready(jax.jit(reference_forward)(params, x))
    max_err = float(jnp.max(jnp.abs(out - ref)))
    assert jnp.allclose(out, ref, rtol=2e-2, atol=2e-2), max_err

    print("KERNEL_OK")
</pallas_src>

<mosaic_0001>
module attributes {stable_mosaic.version = 11 : i64} {
  func.func @_lmodel_kernel(%arg0: i32, %arg1: memref<128x9xf32, #tpu.memory_space<vmem>>, %arg2: memref<9x32xf32, #tpu.memory_space<vmem>>, %arg3: memref<1x32xf32, #tpu.memory_space<vmem>>, %arg4: memref<9x32x128xf32, #tpu.memory_space<vmem>>, %arg5: memref<9x32x32xf32, #tpu.memory_space<vmem>>, %arg6: memref<1x32xf32, #tpu.memory_space<vmem>>, %arg7: memref<9x8x32xf32, #tpu.memory_space<vmem>>, %arg8: memref<9x32x32xf32, #tpu.memory_space<vmem>>, %arg9: memref<1x32xf32, #tpu.memory_space<vmem>>, %arg10: memref<4x32x512xf32, #tpu.memory_space<vmem>>, %arg11: memref<1x512xf32, #tpu.memory_space<vmem>>, %arg12: memref<512x256xf32, #tpu.memory_space<vmem>>, %arg13: memref<1x256xf32, #tpu.memory_space<vmem>>, %arg14: memref<256x128xf32, #tpu.memory_space<vmem>>, %arg15: memref<1x128xf32, #tpu.memory_space<vmem>>, %arg16: memref<2x128xf32, #tpu.memory_space<vmem>>) attributes {dimension_semantics = [#tpu.dimension_semantics<arbitrary>], iteration_bounds = array<i64: 1>, scalar_prefetch = 0 : i64, scratch_operands = 0 : i64, tpu.core_type = #tpu.core_type<tc>, window_params = [{pipeline_mode = #tpu.pipeline_mode<synchronous>, transform_indices = @transform_0, window_bounds = array<i64: 128, 9>}, {pipeline_mode = #tpu.pipeline_mode<synchronous>, transform_indices = @transform_1, window_bounds = array<i64: 9, 32>}, {pipeline_mode = #tpu.pipeline_mode<synchronous>, transform_indices = @transform_2, window_bounds = array<i64: 1, 32>}, {pipeline_mode = #tpu.pipeline_mode<synchronous>, transform_indices = @transform_3, window_bounds = array<i64: 9, 32, 128>}, {pipeline_mode = #tpu.pipeline_mode<synchronous>, transform_indices = @transform_4, window_bounds = array<i64: 9, 32, 32>}, {pipeline_mode = #tpu.pipeline_mode<synchronous>, transform_indices = @transform_5, window_bounds = array<i64: 1, 32>}, {pipeline_mode = #tpu.pipeline_mode<synchronous>, transform_indices = @transform_6, window_bounds = array<i64: 9, 8, 32>}, {pipeline_mode = #tpu.pipeline_mode<synchronous>, transform_indices = @transform_7, window_bounds = array<i64: 9, 32, 32>}, {pipeline_mode = #tpu.pipeline_mode<synchronous>, transform_indices = @transform_8, window_bounds = array<i64: 1, 32>}, {pipeline_mode = #tpu.pipeline_mode<synchronous>, transform_indices = @transform_9, window_bounds = array<i64: 4, 32, 512>}, {pipeline_mode = #tpu.pipeline_mode<synchronous>, transform_indices = @transform_10, window_bounds = array<i64: 1, 512>}, {pipeline_mode = #tpu.pipeline_mode<synchronous>, transform_indices = @transform_11, window_bounds = array<i64: 512, 256>}, {pipeline_mode = #tpu.pipeline_mode<synchronous>, transform_indices = @transform_12, window_bounds = array<i64: 1, 256>}, {pipeline_mode = #tpu.pipeline_mode<synchronous>, transform_indices = @transform_13, window_bounds = array<i64: 256, 128>}, {pipeline_mode = #tpu.pipeline_mode<synchronous>, transform_indices = @transform_14, window_bounds = array<i64: 1, 128>}, {pipeline_mode = #tpu.pipeline_mode<synchronous>, transform_indices = @transform_15, window_bounds = array<i64: 2, 128>}]} {
    %c0 = arith.constant 0 : index
    %c0_0 = arith.constant 0 : index
    %0 = vector.load %arg1[%c0, %c0_0] : memref<128x9xf32, #tpu.memory_space<vmem>>, vector<128x9xf32>
    %c0_1 = arith.constant 0 : index
    %c0_2 = arith.constant 0 : index
    %1 = vector.load %arg2[%c0_1, %c0_2] : memref<9x32xf32, #tpu.memory_space<vmem>>, vector<9x32xf32>
    %cst = arith.constant dense<0.000000e+00> : vector<128x32xf32>
    %2 = tpu.matmul %0, %1, %cst {dimension_numbers = #tpu.dot_dimension_numbers<[1], [0], [0], [1], [0, 0, 1, 1], [], []>} : vector<128x9xf32>, vector<9x32xf32>, vector<128x32xf32> -> vector<128x32xf32>
    %c0_3 = arith.constant 0 : index
    %c0_4 = arith.constant 0 : index
    %3 = vector.load %arg3[%c0_3, %c0_4] : memref<1x32xf32, #tpu.memory_space<vmem>>, vector<1x32xf32>
    %4 = vector.broadcast %3 : vector<1x32xf32> to vector<128x32xf32>
    %5 = arith.addf %2, %4 : vector<128x32xf32>
    %cst_5 = arith.constant 0.000000e+00 : f32
    %6 = vector.broadcast %cst_5 : f32 to vector<128x32xf32>
    %7 = arith.maximumf %5, %6 : vector<128x32xf32>
    %cst_6 = arith.constant 0.000000e+00 : f32
    %8 = vector.broadcast %cst_6 : f32 to vector<32x32xf32>
    %c0_7 = arith.constant 0 : index
    %c0_8 = arith.constant 0 : index
    %c0_9 = arith.constant 0 : index
    %9 = vector.load %arg4[%c0_7, %c0_8, %c0_9] : memref<9x32x128xf32, #tpu.memory_space<vmem>>, vector<1x32x128xf32>
    %10 = vector.shape_cast %9 : vector<1x32x128xf32> to vector<32x128xf32>
    %cst_10 = arith.constant dense<0.000000e+00> : vector<32x32xf32>
    %11 = tpu.matmul %10, %7, %cst_10 {dimension_numbers = #tpu.dot_dimension_numbers<[1], [0], [0], [1], [0, 0, 1, 1], [], []>} : vector<32x128xf32>, vector<128x32xf32>, vector<32x32xf32> -> vector<32x32xf32>
    %c0_11 = arith.constant 0 : index
    %c0_12 = arith.constant 0 : index
    %c0_13 = arith.constant 0 : index
    %12 = vector.load %arg5[%c0_11, %c0_12, %c0_13] : memref<9x32x32xf32, #tpu.memory_space<vmem>>, vector<1x32x32xf32>
    %13 = vector.shape_cast %12 : vector<1x32x32xf32> to vector<32x32xf32>
    %cst_14 = arith.constant dense<0.000000e+00> : vector<32x32xf32>
    %14 = tpu.matmul %11, %13, %cst_14 {dimension_numbers = #tpu.dot_dimension_numbers<[1], [0], [0], [1], [0, 0, 1, 1], [], []>} : vector<32x32xf32>, vector<32x32xf32>, vector<32x32xf32> -> vector<32x32xf32>
    %15 = arith.addf %8, %14 : vector<32x32xf32>
    %c1 = arith.constant 1 : index
    %c0_15 = arith.constant 0 : index
    %c0_16 = arith.constant 0 : index
    %16 = vector.load %arg4[%c1, %c0_15, %c0_16] : memref<9x32x128xf32, #tpu.memory_space<vmem>>, vector<1x32x128xf32>
    %17 = vector.shape_cast %16 : vector<1x32x128xf32> to vector<32x128xf32>
    %cst_17 = arith.constant dense<0.000000e+00> : vector<32x32xf32>
    %18 = tpu.matmul %17, %7, %cst_17 {dimension_numbers = #tpu.dot_dimension_numbers<[1], [0], [0], [1], [0, 0, 1, 1], [], []>} : vector<32x128xf32>, vector<128x32xf32>, vector<32x32xf32> -> vector<32x32xf32>
    %c1_18 = arith.constant 1 : index
    %c0_19 = arith.constant 0 : index
    %c0_20 = arith.constant 0 : index
    %19 = vector.load %arg5[%c1_18, %c0_19, %c0_20] : memref<9x32x32xf32, #tpu.memory_space<vmem>>, vector<1x32x32xf32>
    %20 = vector.shape_cast %19 : vector<1x32x32xf32> to vector<32x32xf32>
    %cst_21 = arith.constant dense<0.000000e+00> : vector<32x32xf32>
    %21 = tpu.matmul %18, %20, %cst_21 {dimension_numbers = #tpu.dot_dimension_numbers<[1], [0], [0], [1], [0, 0, 1, 1], [], []>} : vector<32x32xf32>, vector<32x32xf32>, vector<32x32xf32> -> vector<32x32xf32>
    %22 = arith.addf %15, %21 : vector<32x32xf32>
    %c2 = arith.constant 2 : index
    %c0_22 = arith.constant 0 : index
    %c0_23 = arith.constant 0 : index
    %23 = vector.load %arg4[%c2, %c0_22, %c0_23] : memref<9x32x128xf32, #tpu.memory_space<vmem>>, vector<1x32x128xf32>
    %24 = vector.shape_cast %23 : vector<1x32x128xf32> to vector<32x128xf32>
    %cst_24 = arith.constant dense<0.000000e+00> : vector<32x32xf32>
    %25 = tpu.matmul %24, %7, %cst_24 {dimension_numbers = #tpu.dot_dimension_numbers<[1], [0], [0], [1], [0, 0, 1, 1], [], []>} : vector<32x128xf32>, vector<128x32xf32>, vector<32x32xf32> -> vector<32x32xf32>
    %c2_25 = arith.constant 2 : index
    %c0_26 = arith.constant 0 : index
    %c0_27 = arith.constant 0 : index
    %26 = vector.load %arg5[%c2_25, %c0_26, %c0_27] : memref<9x32x32xf32, #tpu.memory_space<vmem>>, vector<1x32x32xf32>
    %27 = vector.shape_cast %26 : vector<1x32x32xf32> to vector<32x32xf32>
    %cst_28 = arith.constant dense<0.000000e+00> : vector<32x32xf32>
    %28 = tpu.matmul %25, %27, %cst_28 {dimension_numbers = #tpu.dot_dimension_numbers<[1], [0], [0], [1], [0, 0, 1, 1], [], []>} : vector<32x32xf32>, vector<32x32xf32>, vector<32x32xf32> -> vector<32x32xf32>
    %29 = arith.addf %22, %28 : vector<32x32xf32>
    %c3 = arith.constant 3 : index
    %c0_29 = arith.constant 0 : index
    %c0_30 = arith.constant 0 : index
    %30 = vector.load %arg4[%c3, %c0_29, %c0_30] : memref<9x32x128xf32, #tpu.memory_space<vmem>>, vector<1x32x128xf32>
    %31 = vector.shape_cast %30 : vector<1x32x128xf32> to vector<32x128xf32>
    %cst_31 = arith.constant dense<0.000000e+00> : vector<32x32xf32>
    %32 = tpu.matmul %31, %7, %cst_31 {dimension_numbers = #tpu.dot_dimension_numbers<[1], [0], [0], [1], [0, 0, 1, 1], [], []>} : vector<32x128xf32>, vector<128x32xf32>, vector<32x32xf32> -> vector<32x32xf32>
    %c3_32 = arith.constant 3 : index
    %c0_33 = arith.constant 0 : index
    %c0_34 = arith.constant 0 : index
    %33 = vector.load %arg5[%c3_32, %c0_33, %c0_34] : memref<9x32x32xf32, #tpu.memory_space<vmem>>, vector<1x32x32xf32>
    %34 = vector.shape_cast %33 : vector<1x32x32xf32> to vector<32x32xf32>
    %cst_35 = arith.constant dense<0.000000e+00> : vector<32x32xf32>
    %35 = tpu.matmul %32, %34, %cst_35 {dimension_numbers = #tpu.dot_dimension_numbers<[1], [0], [0], [1], [0, 0, 1, 1], [], []>} : vector<32x32xf32>, vector<32x32xf32>, vector<32x32xf32> -> vector<32x32xf32>
    %36 = arith.addf %29, %35 : vector<32x32xf32>
    %c4 = arith.constant 4 : index
    %c0_36 = arith.constant 0 : index
    %c0_37 = arith.constant 0 : index
    %37 = vector.load %arg4[%c4, %c0_36, %c0_37] : memref<9x32x128xf32, #tpu.memory_space<vmem>>, vector<1x32x128xf32>
    %38 = vector.shape_cast %37 : vector<1x32x128xf32> to vector<32x128xf32>
    %cst_38 = arith.constant dense<0.000000e+00> : vector<32x32xf32>
    %39 = tpu.matmul %38, %7, %cst_38 {dimension_numbers = #tpu.dot_dimension_numbers<[1], [0], [0], [1], [0, 0, 1, 1], [], []>} : vector<32x128xf32>, vector<128x32xf32>, vector<32x32xf32> -> vector<32x32xf32>
    %c4_39 = arith.constant 4 : index
    %c0_40 = arith.constant 0 : index
    %c0_41 = arith.constant 0 : index
    %40 = vector.load %arg5[%c4_39, %c0_40, %c0_41] : memref<9x32x32xf32, #tpu.memory_space<vmem>>, vector<1x32x32xf32>
    %41 = vector.shape_cast %40 : vector<1x32x32xf32> to vector<32x32xf32>
    %cst_42 = arith.constant dense<0.000000e+00> : vector<32x32xf32>
    %42 = tpu.matmul %39, %41, %cst_42 {dimension_numbers = #tpu.dot_dimension_numbers<[1], [0], [0], [1], [0, 0, 1, 1], [], []>} : vector<32x32xf32>, vector<32x32xf32>, vector<32x32xf32> -> vector<32x32xf32>
    %43 = arith.addf %36, %42 : vector<32x32xf32>
    %c5 = arith.constant 5 : index
    %c0_43 = arith.constant 0 : index
    %c0_44 = arith.constant 0 : index
    %44 = vector.load %arg4[%c5, %c0_43, %c0_44] : memref<9x32x128xf32, #tpu.memory_space<vmem>>, vector<1x32x128xf32>
    %45 = vector.shape_cast %44 : vector<1x32x128xf32> to vector<32x128xf32>
    %cst_45 = arith.constant dense<0.000000e+00> : vector<32x32xf32>
    %46 = tpu.matmul %45, %7, %cst_45 {dimension_numbers = #tpu.dot_dimension_numbers<[1], [0], [0], [1], [0, 0, 1, 1], [], []>} : vector<32x128xf32>, vector<128x32xf32>, vector<32x32xf32> -> vector<32x32xf32>
    %c5_46 = arith.constant 5 : index
    %c0_47 = arith.constant 0 : index
    %c0_48 = arith.constant 0 : index
    %47 = vector.load %arg5[%c5_46, %c0_47, %c0_48] : memref<9x32x32xf32, #tpu.memory_space<vmem>>, vector<1x32x32xf32>
    %48 = vector.shape_cast %47 : vector<1x32x32xf32> to vector<32x32xf32>
    %cst_49 = arith.constant dense<0.000000e+00> : vector<32x32xf32>
    %49 = tpu.matmul %46, %48, %cst_49 {dimension_numbers = #tpu.dot_dimension_numbers<[1], [0], [0], [1], [0, 0, 1, 1], [], []>} : vector<32x32xf32>, vector<32x32xf32>, vector<32x32xf32> -> vector<32x32xf32>
    %50 = arith.addf %43, %49 : vector<32x32xf32>
    %c6 = arith.constant 6 : index
    %c0_50 = arith.constant 0 : index
    %c0_51 = arith.constant 0 : index
    %51 = vector.load %arg4[%c6, %c0_50, %c0_51] : memref<9x32x128xf32, #tpu.memory_space<vmem>>, vector<1x32x128xf32>
    %52 = vector.shape_cast %51 : vector<1x32x128xf32> to vector<32x128xf32>
    %cst_52 = arith.constant dense<0.000000e+00> : vector<32x32xf32>
    %53 = tpu.matmul %52, %7, %cst_52 {dimension_numbers = #tpu.dot_dimension_numbers<[1], [0], [0], [1], [0, 0, 1, 1], [], []>} : vector<32x128xf32>, vector<128x32xf32>, vector<32x32xf32> -> vector<32x32xf32>
    %c6_53 = arith.constant 6 : index
    %c0_54 = arith.constant 0 : index
    %c0_55 = arith.constant 0 : index
    %54 = vector.load %arg5[%c6_53, %c0_54, %c0_55] : memref<9x32x32xf32, #tpu.memory_space<vmem>>, vector<1x32x32xf32>
    %55 = vector.shape_cast %54 : vector<1x32x32xf32> to vector<32x32xf32>
    %cst_56 = arith.constant dense<0.000000e+00> : vector<32x32xf32>
    %56 = tpu.matmul %53, %55, %cst_56 {dimension_numbers = #tpu.dot_dimension_numbers<[1], [0], [0], [1], [0, 0, 1, 1], [], []>} : vector<32x32xf32>, vector<32x32xf32>, vector<32x32xf32> -> vector<32x32xf32>
    %57 = arith.addf %50, %56 : vector<32x32xf32>
    %c7 = arith.constant 7 : index
    %c0_57 = arith.constant 0 : index
    %c0_58 = arith.constant 0 : index
    %58 = vector.load %arg4[%c7, %c0_57, %c0_58] : memref<9x32x128xf32, #tpu.memory_space<vmem>>, vector<1x32x128xf32>
    %59 = vector.shape_cast %58 : vector<1x32x128xf32> to vector<32x128xf32>
    %cst_59 = arith.constant dense<0.000000e+00> : vector<32x32xf32>
    %60 = tpu.matmul %59, %7, %cst_59 {dimension_numbers = #tpu.dot_dimension_numbers<[1], [0], [0], [1], [0, 0, 1, 1], [], []>} : vector<32x128xf32>, vector<128x32xf32>, vector<32x32xf32> -> vector<32x32xf32>
    %c7_60 = arith.constant 7 : index
    %c0_61 = arith.constant 0 : index
    %c0_62 = arith.constant 0 : index
    %61 = vector.load %arg5[%c7_60, %c0_61, %c0_62] : memref<9x32x32xf32, #tpu.memory_space<vmem>>, vector<1x32x32xf32>
    %62 = vector.shape_cast %61 : vector<1x32x32xf32> to vector<32x32xf32>
    %cst_63 = arith.constant dense<0.000000e+00> : vector<32x32xf32>
    %63 = tpu.matmul %60, %62, %cst_63 {dimension_numbers = #tpu.dot_dimension_numbers<[1], [0], [0], [1], [0, 0, 1, 1], [], []>} : vector<32x32xf32>, vector<32x32xf32>, vector<32x32xf32> -> vector<32x32xf32>
    %64 = arith.addf %57, %63 : vector<32x32xf32>
    %c8 = arith.constant 8 : index
    %c0_64 = arith.constant 0 : index
    %c0_65 = arith.constant 0 : index
    %65 = vector.load %arg4[%c8, %c0_64, %c0_65] : memref<9x32x128xf32, #tpu.memory_space<vmem>>, vector<1x32x128xf32>
    %66 = vector.shape_cast %65 : vector<1x32x128xf32> to vector<32x128xf32>
    %cst_66 = arith.constant dense<0.000000e+00> : vector<32x32xf32>
    %67 = tpu.matmul %66, %7, %cst_66 {dimension_numbers = #tpu.dot_dimension_numbers<[1], [0], [0], [1], [0, 0, 1, 1], [], []>} : vector<32x128xf32>, vector<128x32xf32>, vector<32x32xf32> -> vector<32x32xf32>
    %c8_67 = arith.constant 8 : index
    %c0_68 = arith.constant 0 : index
    %c0_69 = arith.constant 0 : index
    %68 = vector.load %arg5[%c8_67, %c0_68, %c0_69] : memref<9x32x32xf32, #tpu.memory_space<vmem>>, vector<1x32x32xf32>
    %69 = vector.shape_cast %68 : vector<1x32x32xf32> to vector<32x32xf32>
    %cst_70 = arith.constant dense<0.000000e+00> : vector<32x32xf32>
    %70 = tpu.matmul %67, %69, %cst_70 {dimension_numbers = #tpu.dot_dimension_numbers<[1], [0], [0], [1], [0, 0, 1, 1], [], []>} : vector<32x32xf32>, vector<32x32xf32>, vector<32x32xf32> -> vector<32x32xf32>
    %71 = arith.addf %64, %70 : vector<32x32xf32>
    %c0_71 = arith.constant 0 : index
    %c0_72 = arith.constant 0 : index
    %72 = vector.load %arg6[%c0_71, %c0_72] : memref<1x32xf32, #tpu.memory_space<vmem>>, vector<1x32xf32>
    %73 = vector.broadcast %72 : vector<1x32xf32> to vector<32x32xf32>
    %74 = arith.addf %71, %73 : vector<32x32xf32>
    %cst_73 = arith.constant 0.000000e+00 : f32
    %75 = vector.broadcast %cst_73 : f32 to vector<32x32xf32>
    %76 = arith.maximumf %74, %75 : vector<32x32xf32>
    %cst_74 = arith.constant 0.000000e+00 : f32
    %77 = vector.broadcast %cst_74 : f32 to vector<8x32xf32>
    %c0_75 = arith.constant 0 : index
    %c0_76 = arith.constant 0 : index
    %c0_77 = arith.constant 0 : index
    %78 = vector.load %arg7[%c0_75, %c0_76, %c0_77] : memref<9x8x32xf32, #tpu.memory_space<vmem>>, vector<1x8x32xf32>
    %79 = vector.shape_cast %78 : vector<1x8x32xf32> to vector<8x32xf32>
    %cst_78 = arith.constant dense<0.000000e+00> : vector<8x32xf32>
    %80 = tpu.matmul %79, %76, %cst_78 {dimension_numbers = #tpu.dot_dimension_numbers<[1], [0], [0], [1], [0, 0, 1, 1], [], []>} : vector<8x32xf32>, vector<32x32xf32>, vector<8x32xf32> -> vector<8x32xf32>
    %c0_79 = arith.constant 0 : index
    %c0_80 = arith.constant 0 : index
    %c0_81 = arith.constant 0 : index
    %81 = vector.load %arg8[%c0_79, %c0_80, %c0_81] : memref<9x32x32xf32, #tpu.memory_space<vmem>>, vector<1x32x32xf32>
    %82 = vector.shape_cast %81 : vector<1x32x32xf32> to vector<32x32xf32>
    %cst_82 = arith.constant dense<0.000000e+00> : vector<8x32xf32>
    %83 = tpu.matmul %80, %82, %cst_82 {dimension_numbers = #tpu.dot_dimension_numbers<[1], [0], [0], [1], [0, 0, 1, 1], [], []>} : vector<8x32xf32>, vector<32x32xf32>, vector<8x32xf32> -> vector<8x32xf32>
    %84 = arith.addf %77, %83 : vector<8x32xf32>
    %c1_83 = arith.constant 1 : index
    %c0_84 = arith.constant 0 : index
    %c0_85 = arith.constant 0 : index
    %85 = vector.load %arg7[%c1_83, %c0_84, %c0_85] : memref<9x8x32xf32, #tpu.memory_space<vmem>>, vector<1x8x32xf32>
    %86 = vector.shape_cast %85 : vector<1x8x32xf32> to vector<8x32xf32>
    %cst_86 = arith.constant dense<0.000000e+00> : vector<8x32xf32>
    %87 = tpu.matmul %86, %76, %cst_86 {dimension_numbers = #tpu.dot_dimension_numbers<[1], [0], [0], [1], [0, 0, 1, 1], [], []>} : vector<8x32xf32>, vector<32x32xf32>, vector<8x32xf32> -> vector<8x32xf32>
    %c1_87 = arith.constant 1 : index
    %c0_88 = arith.constant 0 : index
    %c0_89 = arith.constant 0 : index
    %88 = vector.load %arg8[%c1_87, %c0_88, %c0_89] : memref<9x32x32xf32, #tpu.memory_space<vmem>>, vector<1x32x32xf32>
    %89 = vector.shape_cast %88 : vector<1x32x32xf32> to vector<32x32xf32>
    %cst_90 = arith.constant dense<0.000000e+00> : vector<8x32xf32>
    %90 = tpu.matmul %87, %89, %cst_90 {dimension_numbers = #tpu.dot_dimension_numbers<[1], [0], [0], [1], [0, 0, 1, 1], [], []>} : vector<8x32xf32>, vector<32x32xf32>, vector<8x32xf32> -> vector<8x32xf32>
    %91 = arith.addf %84, %90 : vector<8x32xf32>
    %c2_91 = arith.constant 2 : index
    %c0_92 = arith.constant 0 : index
    %c0_93 = arith.constant 0 : index
    %92 = vector.load %arg7[%c2_91, %c0_92, %c0_93] : memref<9x8x32xf32, #tpu.memory_space<vmem>>, vector<1x8x32xf32>
    %93 = vector.shape_cast %92 : vector<1x8x32xf32> to vector<8x32xf32>
    %cst_94 = arith.constant dense<0.000000e+00> : vector<8x32xf32>
    %94 = tpu.matmul %93, %76, %cst_94 {dimension_numbers = #tpu.dot_dimension_numbers<[1], [0], [0], [1], [0, 0, 1, 1], [], []>} : vector<8x32xf32>, vector<32x32xf32>, vector<8x32xf32> -> vector<8x32xf32>
    %c2_95 = arith.constant 2 : index
    %c0_96 = arith.constant 0 : index
    %c0_97 = arith.constant 0 : index
    %95 = vector.load %arg8[%c2_95, %c0_96, %c0_97] : memref<9x32x32xf32, #tpu.memory_space<vmem>>, vector<1x32x32xf32>
    %96 = vector.shape_cast %95 : vector<1x32x32xf32> to vector<32x32xf32>
    %cst_98 = arith.constant dense<0.000000e+00> : vector<8x32xf32>
    %97 = tpu.matmul %94, %96, %cst_98 {dimension_numbers = #tpu.dot_dimension_numbers<[1], [0], [0], [1], [0, 0, 1, 1], [], []>} : vector<8x32xf32>, vector<32x32xf32>, vector<8x32xf32> -> vector<8x32xf32>
    %98 = arith.addf %91, %97 : vector<8x32xf32>
    %c3_99 = arith.constant 3 : index
    %c0_100 = arith.constant 0 : index
    %c0_101 = arith.constant 0 : index
    %99 = vector.load %arg7[%c3_99, %c0_100, %c0_101] : memref<9x8x32xf32, #tpu.memory_space<vmem>>, vector<1x8x32xf32>
    %100 = vector.shape_cast %99 : vector<1x8x32xf32> to vector<8x32xf32>
    %cst_102 = arith.constant dense<0.000000e+00> : vector<8x32xf32>
    %101 = tpu.matmul %100, %76, %cst_102 {dimension_numbers = #tpu.dot_dimension_numbers<[1], [0], [0], [1], [0, 0, 1, 1], [], []>} : vector<8x32xf32>, vector<32x32xf32>, vector<8x32xf32> -> vector<8x32xf32>
    %c3_103 = arith.constant 3 : index
    %c0_104 = arith.constant 0 : index
    %c0_105 = arith.constant 0 : index
    %102 = vector.load %arg8[%c3_103, %c0_104, %c0_105] : memref<9x32x32xf32, #tpu.memory_space<vmem>>, vector<1x32x32xf32>
    %103 = vector.shape_cast %102 : vector<1x32x32xf32> to vector<32x32xf32>
    %cst_106 = arith.constant dense<0.000000e+00> : vector<8x32xf32>
    %104 = tpu.matmul %101, %103, %cst_106 {dimension_numbers = #tpu.dot_dimension_numbers<[1], [0], [0], [1], [0, 0, 1, 1], [], []>} : vector<8x32xf32>, vector<32x32xf32>, vector<8x32xf32> -> vector<8x32xf32>
    %105 = arith.addf %98, %104 : vector<8x32xf32>
    %c4_107 = arith.constant 4 : index
    %c0_108 = arith.constant 0 : index
    %c0_109 = arith.constant 0 : index
    %106 = vector.load %arg7[%c4_107, %c0_108, %c0_109] : memref<9x8x32xf32, #tpu.memory_space<vmem>>, vector<1x8x32xf32>
    %107 = vector.shape_cast %106 : vector<1x8x32xf32> to vector<8x32xf32>
    %cst_110 = arith.constant dense<0.000000e+00> : vector<8x32xf32>
    %108 = tpu.matmul %107, %76, %cst_110 {dimension_numbers = #tpu.dot_dimension_numbers<[1], [0], [0], [1], [0, 0, 1, 1], [], []>} : vector<8x32xf32>, vector<32x32xf32>, vector<8x32xf32> -> vector<8x32xf32>
    %c4_111 = arith.constant 4 : index
    %c0_112 = arith.constant 0 : index
    %c0_113 = arith.constant 0 : index
    %109 = vector.load %arg8[%c4_111, %c0_112, %c0_113] : memref<9x32x32xf32, #tpu.memory_space<vmem>>, vector<1x32x32xf32>
    %110 = vector.shape_cast %109 : vector<1x32x32xf32> to vector<32x32xf32>
    %cst_114 = arith.constant dense<0.000000e+00> : vector<8x32xf32>
    %111 = tpu.matmul %108, %110, %cst_114 {dimension_numbers = #tpu.dot_dimension_numbers<[1], [0], [0], [1], [0, 0, 1, 1], [], []>} : vector<8x32xf32>, vector<32x32xf32>, vector<8x32xf32> -> vector<8x32xf32>
    %112 = arith.addf %105, %111 : vector<8x32xf32>
    %c5_115 = arith.constant 5 : index
    %c0_116 = arith.constant 0 : index
    %c0_117 = arith.constant 0 : index
    %113 = vector.load %arg7[%c5_115, %c0_116, %c0_117] : memref<9x8x32xf32, #tpu.memory_space<vmem>>, vector<1x8x32xf32>
    %114 = vector.shape_cast %113 : vector<1x8x32xf32> to vector<8x32xf32>
    %cst_118 = arith.constant dense<0.000000e+00> : vector<8x32xf32>
    %115 = tpu.matmul %114, %76, %cst_118 {dimension_numbers = #tpu.dot_dimension_numbers<[1], [0], [0], [1], [0, 0, 1, 1], [], []>} : vector<8x32xf32>, vector<32x32xf32>, vector<8x32xf32> -> vector<8x32xf32>
    %c5_119 = arith.constant 5 : index
    %c0_120 = arith.constant 0 : index
    %c0_121 = arith.constant 0 : index
    %116 = vector.load %arg8[%c5_119, %c0_120, %c0_121] : memref<9x32x32xf32, #tpu.memory_space<vmem>>, vector<1x32x32xf32>
    %117 = vector.shape_cast %116 : vector<1x32x32xf32> to vector<32x32xf32>
    %cst_122 = arith.constant dense<0.000000e+00> : vector<8x32xf32>
    %118 = tpu.matmul %115, %117, %cst_122 {dimension_numbers = #tpu.dot_dimension_numbers<[1], [0], [0], [1], [0, 0, 1, 1], [], []>} : vector<8x32xf32>, vector<32x32xf32>, vector<8x32xf32> -> vector<8x32xf32>
    %119 = arith.addf %112, %118 : vector<8x32xf32>
    %c6_123 = arith.constant 6 : index
    %c0_124 = arith.constant 0 : index
    %c0_125 = arith.constant 0 : index
    %120 = vector.load %arg7[%c6_123, %c0_124, %c0_125] : memref<9x8x32xf32, #tpu.memory_space<vmem>>, vector<1x8x32xf32>
    %121 = vector.shape_cast %120 : vector<1x8x32xf32> to vector<8x32xf32>
    %cst_126 = arith.constant dense<0.000000e+00> : vector<8x32xf32>
    %122 = tpu.matmul %121, %76, %cst_126 {dimension_numbers = #tpu.dot_dimension_numbers<[1], [0], [0], [1], [0, 0, 1, 1], [], []>} : vector<8x32xf32>, vector<32x32xf32>, vector<8x32xf32> -> vector<8x32xf32>
    %c6_127 = arith.constant 6 : index
    %c0_128 = arith.constant 0 : index
    %c0_129 = arith.constant 0 : index
    %123 = vector.load %arg8[%c6_127, %c0_128, %c0_129] : memref<9x32x32xf32, #tpu.memory_space<vmem>>, vector<1x32x32xf32>
    %124 = vector.shape_cast %123 : vector<1x32x32xf32> to vector<32x32xf32>
    %cst_130 = arith.constant dense<0.000000e+00> : vector<8x32xf32>
    %125 = tpu.matmul %122, %124, %cst_130 {dimension_numbers = #tpu.dot_dimension_numbers<[1], [0], [0], [1], [0, 0, 1, 1], [], []>} : vector<8x32xf32>, vector<32x32xf32>, vector<8x32xf32> -> vector<8x32xf32>
    %126 = arith.addf %119, %125 : vector<8x32xf32>
    %c7_131 = arith.constant 7 : index
    %c0_132 = arith.constant 0 : index
    %c0_133 = arith.constant 0 : index
    %127 = vector.load %arg7[%c7_131, %c0_132, %c0_133] : memref<9x8x32xf32, #tpu.memory_space<vmem>>, vector<1x8x32xf32>
    %128 = vector.shape_cast %127 : vector<1x8x32xf32> to vector<8x32xf32>
    %cst_134 = arith.constant dense<0.000000e+00> : vector<8x32xf32>
    %129 = tpu.matmul %128, %76, %cst_134 {dimension_numbers = #tpu.dot_dimension_numbers<[1], [0], [0], [1], [0, 0, 1, 1], [], []>} : vector<8x32xf32>, vector<32x32xf32>, vector<8x32xf32> -> vector<8x32xf32>
    %c7_135 = arith.constant 7 : index
    %c0_136 = arith.constant 0 : index
    %c0_137 = arith.constant 0 : index
    %130 = vector.load %arg8[%c7_135, %c0_136, %c0_137] : memref<9x32x32xf32, #tpu.memory_space<vmem>>, vector<1x32x32xf32>
    %131 = vector.shape_cast %130 : vector<1x32x32xf32> to vector<32x32xf32>
    %cst_138 = arith.constant dense<0.000000e+00> : vector<8x32xf32>
    %132 = tpu.matmul %129, %131, %cst_138 {dimension_numbers = #tpu.dot_dimension_numbers<[1], [0], [0], [1], [0, 0, 1, 1], [], []>} : vector<8x32xf32>, vector<32x32xf32>, vector<8x32xf32> -> vector<8x32xf32>
    %133 = arith.addf %126, %132 : vector<8x32xf32>
    %c8_139 = arith.constant 8 : index
    %c0_140 = arith.constant 0 : index
    %c0_141 = arith.constant 0 : index
    %134 = vector.load %arg7[%c8_139, %c0_140, %c0_141] : memref<9x8x32xf32, #tpu.memory_space<vmem>>, vector<1x8x32xf32>
    %135 = vector.shape_cast %134 : vector<1x8x32xf32> to vector<8x32xf32>
    %cst_142 = arith.constant dense<0.000000e+00> : vector<8x32xf32>
    %136 = tpu.matmul %135, %76, %cst_142 {dimension_numbers = #tpu.dot_dimension_numbers<[1], [0], [0], [1], [0, 0, 1, 1], [], []>} : vector<8x32xf32>, vector<32x32xf32>, vector<8x32xf32> -> vector<8x32xf32>
    %c8_143 = arith.constant 8 : index
    %c0_144 = arith.constant 0 : index
    %c0_145 = arith.constant 0 : index
    %137 = vector.load %arg8[%c8_143, %c0_144, %c0_145] : memref<9x32x32xf32, #tpu.memory_space<vmem>>, vector<1x32x32xf32>
    %138 = vector.shape_cast %137 : vector<1x32x32xf32> to vector<32x32xf32>
    %cst_146 = arith.constant dense<0.000000e+00> : vector<8x32xf32>
    %139 = tpu.matmul %136, %138, %cst_146 {dimension_numbers = #tpu.dot_dimension_numbers<[1], [0], [0], [1], [0, 0, 1, 1], [], []>} : vector<8x32xf32>, vector<32x32xf32>, vector<8x32xf32> -> vector<8x32xf32>
    %140 = arith.addf %133, %139 : vector<8x32xf32>
    %c0_147 = arith.constant 0 : index
    %c0_148 = arith.constant 0 : index
    %141 = vector.load %arg9[%c0_147, %c0_148] : memref<1x32xf32, #tpu.memory_space<vmem>>, vector<1x32xf32>
    %142 = vector.broadcast %141 : vector<1x32xf32> to vector<8x32xf32>
    %143 = arith.addf %140, %142 : vector<8x32xf32>
    %cst_149 = arith.constant 0.000000e+00 : f32
    %144 = vector.broadcast %cst_149 : f32 to vector<8x32xf32>
    %145 = arith.maximumf %143, %144 : vector<8x32xf32>
    %cst_150 = arith.constant 0.000000e+00 : f32
    %146 = vector.broadcast %cst_150 : f32 to vector<2x512xf32>
    %147 = vector.extract_strided_slice %145 {offsets = [0, 0], sizes = [2, 32], strides = [1, 1]} : vector<8x32xf32> to vector<2x32xf32>
    %c0_151 = arith.constant 0 : index
    %c0_152 = arith.constant 0 : index
    %c0_153 = arith.constant 0 : index
    %148 = vector.load %arg10[%c0_151, %c0_152, %c0_153] : memref<4x32x512xf32, #tpu.memory_space<vmem>>, vector<1x32x512xf32>
    %149 = vector.shape_cast %148 : vector<1x32x512xf32> to vector<32x512xf32>
    %cst_154 = arith.constant dense<0.000000e+00> : vector<2x512xf32>
    %150 = tpu.matmul %147, %149, %cst_154 {dimension_numbers = #tpu.dot_dimension_numbers<[1], [0], [0], [1], [0, 0, 1, 1], [], []>} : vector<2x32xf32>, vector<32x512xf32>, vector<2x512xf32> -> vector<2x512xf32>
    %151 = arith.addf %146, %150 : vector<2x512xf32>
    %152 = vector.extract_strided_slice %145 {offsets = [2, 0], sizes = [2, 32], strides = [1, 1]} : vector<8x32xf32> to vector<2x32xf32>
    %c1_155 = arith.constant 1 : index
    %c0_156 = arith.constant 0 : index
    %c0_157 = arith.constant 0 : index
    %153 = vector.load %arg10[%c1_155, %c0_156, %c0_157] : memref<4x32x512xf32, #tpu.memory_space<vmem>>, vector<1x32x512xf32>
    %154 = vector.shape_cast %153 : vector<1x32x512xf32> to vector<32x512xf32>
    %cst_158 = arith.constant dense<0.000000e+00> : vector<2x512xf32>
    %155 = tpu.matmul %152, %154, %cst_158 {dimension_numbers = #tpu.dot_dimension_numbers<[1], [0], [0], [1], [0, 0, 1, 1], [], []>} : vector<2x32xf32>, vector<32x512xf32>, vector<2x512xf32> -> vector<2x512xf32>
    %156 = arith.addf %151, %155 : vector<2x512xf32>
    %157 = vector.extract_strided_slice %145 {offsets = [4, 0], sizes = [2, 32], strides = [1, 1]} : vector<8x32xf32> to vector<2x32xf32>
    %c2_159 = arith.constant 2 : index
    %c0_160 = arith.constant 0 : index
    %c0_161 = arith.constant 0 : index
    %158 = vector.load %arg10[%c2_159, %c0_160, %c0_161] : memref<4x32x512xf32, #tpu.memory_space<vmem>>, vector<1x32x512xf32>
    %159 = vector.shape_cast %158 : vector<1x32x512xf32> to vector<32x512xf32>
    %cst_162 = arith.constant dense<0.000000e+00> : vector<2x512xf32>
    %160 = tpu.matmul %157, %159, %cst_162 {dimension_numbers = #tpu.dot_dimension_numbers<[1], [0], [0], [1], [0, 0, 1, 1], [], []>} : vector<2x32xf32>, vector<32x512xf32>, vector<2x512xf32> -> vector<2x512xf32>
    %161 = arith.addf %156, %160 : vector<2x512xf32>
    %162 = vector.extract_strided_slice %145 {offsets = [6, 0], sizes = [2, 32], strides = [1, 1]} : vector<8x32xf32> to vector<2x32xf32>
    %c3_163 = arith.constant 3 : index
    %c0_164 = arith.constant 0 : index
    %c0_165 = arith.constant 0 : index
    %163 = vector.load %arg10[%c3_163, %c0_164, %c0_165] : memref<4x32x512xf32, #tpu.memory_space<vmem>>, vector<1x32x512xf32>
    %164 = vector.shape_cast %163 : vector<1x32x512xf32> to vector<32x512xf32>
    %cst_166 = arith.constant dense<0.000000e+00> : vector<2x512xf32>
    %165 = tpu.matmul %162, %164, %cst_166 {dimension_numbers = #tpu.dot_dimension_numbers<[1], [0], [0], [1], [0, 0, 1, 1], [], []>} : vector<2x32xf32>, vector<32x512xf32>, vector<2x512xf32> -> vector<2x512xf32>
    %166 = arith.addf %161, %165 : vector<2x512xf32>
    %c0_167 = arith.constant 0 : index
    %c0_168 = arith.constant 0 : index
    %167 = vector.load %arg11[%c0_167, %c0_168] : memref<1x512xf32, #tpu.memory_space<vmem>>, vector<1x512xf32>
    %168 = vector.broadcast %167 : vector<1x512xf32> to vector<2x512xf32>
    %169 = arith.addf %166, %168 : vector<2x512xf32>
    %cst_169 = arith.constant 0.000000e+00 : f32
    %170 = vector.broadcast %cst_169 : f32 to vector<2x512xf32>
    %171 = arith.maximumf %169, %170 : vector<2x512xf32>
    %c0_170 = arith.constant 0 : index
    %c0_171 = arith.constant 0 : index
    %172 = vector.load %arg12[%c0_170, %c0_171] : memref<512x256xf32, #tpu.memory_space<vmem>>, vector<512x256xf32>
    %cst_172 = arith.constant dense<0.000000e+00> : vector<2x256xf32>
    %173 = tpu.matmul %171, %172, %cst_172 {dimension_numbers = #tpu.dot_dimension_numbers<[1], [0], [0], [1], [0, 0, 1, 1], [], []>} : vector<2x512xf32>, vector<512x256xf32>, vector<2x256xf32> -> vector<2x256xf32>
    %c0_173 = arith.constant 0 : index
    %c0_174 = arith.constant 0 : index
    %174 = vector.load %arg13[%c0_173, %c0_174] : memref<1x256xf32, #tpu.memory_space<vmem>>, vector<1x256xf32>
    %175 = vector.broadcast %174 : vector<1x256xf32> to vector<2x256xf32>
    %176 = arith.addf %173, %175 : vector<2x256xf32>
    %cst_175 = arith.constant 0.000000e+00 : f32
    %177 = vector.broadcast %cst_175 : f32 to vector<2x256xf32>
    %178 = arith.maximumf %176, %177 : vector<2x256xf32>
    %c0_176 = arith.constant 0 : index
    %c0_177 = arith.constant 0 : index
    %179 = vector.load %arg14[%c0_176, %c0_177] : memref<256x128xf32, #tpu.memory_space<vmem>>, vector<256x128xf32>
    %cst_178 = arith.constant dense<0.000000e+00> : vector<2x128xf32>
    %180 = tpu.matmul %178, %179, %cst_178 {dimension_numbers = #tpu.dot_dimension_numbers<[1], [0], [0], [1], [0, 0, 1, 1], [], []>} : vector<2x256xf32>, vector<256x128xf32>, vector<2x128xf32> -> vector<2x128xf32>
    %c0_179 = arith.constant 0 : index
    %c0_180 = arith.constant 0 : index
    %181 = vector.load %arg15[%c0_179, %c0_180] : memref<1x128xf32, #tpu.memory_space<vmem>>, vector<1x128xf32>
    %182 = vector.broadcast %181 : vector<1x128xf32> to vector<2x128xf32>
    %183 = arith.addf %180, %182 : vector<2x128xf32>
    %c0_181 = arith.constant 0 : index
    %c0_182 = arith.constant 0 : index
    %184 = vector.load %arg16[%c0_181, %c0_182] : memref<2x128xf32, #tpu.memory_space<vmem>>, vector<2x128xf32>
    tpu.vector_store %arg16[%c0_181, %c0_182], %183 {strides = array<i32>} : memref<2x128xf32, #tpu.memory_space<vmem>>, vector<2x128xf32>,
    return
  }
  func.func @transform_0(%arg0: i32) -> (i32, i32) {
    %c0_i32 = arith.constant 0 : i32
    %c0_i32_0 = arith.constant 0 : i32
    %c0_i32_1 = arith.constant 0 : i32
    return %c0_i32, %c0_i32_0 : i32, i32
  }
  func.func @transform_1(%arg0: i32) -> (i32, i32) {
    %c0_i32 = arith.constant 0 : i32
    %c0_i32_0 = arith.constant 0 : i32
    %c0_i32_1 = arith.constant 0 : i32
    return %c0_i32, %c0_i32_0 : i32, i32
  }
  func.func @transform_2(%arg0: i32) -> (i32, i32) {
    %c0_i32 = arith.constant 0 : i32
    %c0_i32_0 = arith.constant 0 : i32
    %c0_i32_1 = arith.constant 0 : i32
    return %c0_i32, %c0_i32_0 : i32, i32
  }
  func.func @transform_3(%arg0: i32) -> (i32, i32, i32) {
    %c0_i32 = arith.constant 0 : i32
    %c0_i32_0 = arith.constant 0 : i32
    %c0_i32_1 = arith.constant 0 : i32
    %c0_i32_2 = arith.constant 0 : i32
    return %c0_i32, %c0_i32_0, %c0_i32_1 : i32, i32, i32
  }
  func.func @transform_4(%arg0: i32) -> (i32, i32, i32) {
    %c0_i32 = arith.constant 0 : i32
    %c0_i32_0 = arith.constant 0 : i32
    %c0_i32_1 = arith.constant 0 : i32
    %c0_i32_2 = arith.constant 0 : i32
    return %c0_i32, %c0_i32_0, %c0_i32_1 : i32, i32, i32
  }
  func.func @transform_5(%arg0: i32) -> (i32, i32) {
    %c0_i32 = arith.constant 0 : i32
    %c0_i32_0 = arith.constant 0 : i32
    %c0_i32_1 = arith.constant 0 : i32
    return %c0_i32, %c0_i32_0 : i32, i32
  }
  func.func @transform_6(%arg0: i32) -> (i32, i32, i32) {
    %c0_i32 = arith.constant 0 : i32
    %c0_i32_0 = arith.constant 0 : i32
    %c0_i32_1 = arith.constant 0 : i32
    %c0_i32_2 = arith.constant 0 : i32
    return %c0_i32, %c0_i32_0, %c0_i32_1 : i32, i32, i32
  }
  func.func @transform_7(%arg0: i32) -> (i32, i32, i32) {
    %c0_i32 = arith.constant 0 : i32
    %c0_i32_0 = arith.constant 0 : i32
    %c0_i32_1 = arith.constant 0 : i32
    %c0_i32_2 = arith.constant 0 : i32
    return %c0_i32, %c0_i32_0, %c0_i32_1 : i32, i32, i32
  }
  func.func @transform_8(%arg0: i32) -> (i32, i32) {
    %c0_i32 = arith.constant 0 : i32
    %c0_i32_0 = arith.constant 0 : i32
    %c0_i32_1 = arith.constant 0 : i32
    return %c0_i32, %c0_i32_0 : i32, i32
  }
  func.func @transform_9(%arg0: i32) -> (i32, i32, i32) {
    %c0_i32 = arith.constant 0 : i32
    %c0_i32_0 = arith.constant 0 : i32
    %c0_i32_1 = arith.constant 0 : i32
    %c0_i32_2 = arith.constant 0 : i32
    return %c0_i32, %c0_i32_0, %c0_i32_1 : i32, i32, i32
  }
  func.func @transform_10(%arg0: i32) -> (i32, i32) {
    %c0_i32 = arith.constant 0 : i32
    %c0_i32_0 = arith.constant 0 : i32
    %c0_i32_1 = arith.constant 0 : i32
    return %c0_i32, %c0_i32_0 : i32, i32
  }
  func.func @transform_11(%arg0: i32) -> (i32, i32) {
    %c0_i32 = arith.constant 0 : i32
    %c0_i32_0 = arith.constant 0 : i32
    %c0_i32_1 = arith.constant 0 : i32
    return %c0_i32, %c0_i32_0 : i32, i32
  }
  func.func @transform_12(%arg0: i32) -> (i32, i32) {
    %c0_i32 = arith.constant 0 : i32
    %c0_i32_0 = arith.constant 0 : i32
    %c0_i32_1 = arith.constant 0 : i32
    return %c0_i32, %c0_i32_0 : i32, i32
  }
  func.func @transform_13(%arg0: i32) -> (i32, i32) {
    %c0_i32 = arith.constant 0 : i32
    %c0_i32_0 = arith.constant 0 : i32
    %c0_i32_1 = arith.constant 0 : i32
    return %c0_i32, %c0_i32_0 : i32, i32
  }
  func.func @transform_14(%arg0: i32) -> (i32, i32) {
    %c0_i32 = arith.constant 0 : i32
    %c0_i32_0 = arith.constant 0 : i32
    %c0_i32_1 = arith.constant 0 : i32
    return %c0_i32, %c0_i32_0 : i32, i32
  }
  func.func @transform_15(%arg0: i32) -> (i32, i32) {
    %c0_i32 = arith.constant 0 : i32
    %c0_i32_0 = arith.constant 0 : i32
    %c0_i32_1 = arith.constant 0 : i32
    return %c0_i32, %c0_i32_0 : i32, i32
  }
}

</mosaic_0001>

<llo_original>
// kernel: lmodel_forward.1
$region0: #{lmodel_forward.1}
  #allocation0 [shape = 'u32[]', space=smem, size = 0x4, offset = 0x4, fixed_abs, tag = 'smem constant byte address 0x4 - core index']
  #allocation1 [shape = 'u32[144,128]{1,0:T(1,128)}', space=vmem, size = 0x12000, scoped, tag = 'internal scratch']
  %s0 = inlined_call_operand.vmem [shape: f32[128,9], index: 0, kind: input, shape index: {}]
  %s1 = inlined_call_operand.vmem [shape: f32[9,32], index: 1, kind: input, shape index: {}]
  %s2 = inlined_call_operand.vmem [shape: f32[1,32], index: 2, kind: input, shape index: {}]
  %s3 = inlined_call_operand.vmem [shape: f32[9,32,128], index: 3, kind: input, shape index: {}]
  %s4 = inlined_call_operand.hbm [shape: f32[9,32,32], index: 4, kind: input, shape index: {}]
  %s5 = inlined_call_operand.vmem [shape: f32[1,32], index: 5, kind: input, shape index: {}]
  %s6 = inlined_call_operand.vmem [shape: f32[9,8,32], index: 6, kind: input, shape index: {}]
  %s7 = inlined_call_operand.hbm [shape: f32[9,32,32], index: 7, kind: input, shape index: {}]
  %s8 = inlined_call_operand.vmem [shape: f32[1,32], index: 8, kind: input, shape index: {}]
  %s9 = inlined_call_operand.vmem [shape: f32[4,32,512], index: 9, kind: input, shape index: {}]
  %s10 = inlined_call_operand.vmem [shape: f32[1,512], index: 10, kind: input, shape index: {}]
  %s11 = inlined_call_operand.hbm [shape: f32[512,256], index: 11, kind: input, shape index: {}]
  %s12 = inlined_call_operand.vmem [shape: f32[1,256], index: 12, kind: input, shape index: {}]
  %s13 = inlined_call_operand.hbm [shape: f32[256,128], index: 13, kind: input, shape index: {}]
  %s14 = inlined_call_operand.vmem [shape: f32[1,128], index: 14, kind: input, shape index: {}]
  %s15 = inlined_call_operand.hbm [shape: f32[2,128], index: 15, kind: output, shape index: {}]
  %s16 = sld [smem:[#allocation0]]
  $region86: #{lmodel_forward.1} parent=0
    _
  %s18 = ssub.s32 1, %s16
  %s19 = scalar_select 0, %s18, %s16
  $region1: #{lmodel_forward.1} parent=0
    #allocation2 [shape = 'u8[147456]{0}', space=vmem, size = 0x24000, scoped, tag = 'input window, operand 4, single buffered']
    #allocation3 [shape = 's32[1]{0}', space=sflag, size = 0x4, scoped, tag = 'scoped memory for lmodel_forward.1']
    #allocation4 [shape = 's32[1]{0}', space=sflag, size = 0x4, scoped, tag = 'scoped memory for lmodel_forward.1']
    #allocation5 [shape = 'u8[147456]{0}', space=vmem, size = 0x24000, scoped, tag = 'input window, operand 7, single buffered']
    #allocation6 [shape = 's32[1]{0}', space=sflag, size = 0x4, scoped, tag = 'scoped memory for lmodel_forward.1']
    #allocation7 [shape = 'u8[524288]{0}', space=vmem, size = 0x80000, scoped, tag = 'input window, operand 11, single buffered']
    #allocation8 [shape = 'u8[131072]{0}', space=vmem, size = 0x20000, scoped, tag = 'input window, operand 13, single buffered']
    #allocation9 [shape = 's32[1]{0}', space=sflag, size = 0x4, scoped, tag = 'scoped memory for lmodel_forward.1']
    #allocation10 [shape = 'u8[1024]{0}', space=vmem, size = 0x400, scoped, tag = 'output window, operand 0, single buffered']
    %20 = vsyncpa [#allocation3], 0
    %21 = vsyncpa [#allocation6], 0
    %22 = vsyncpa [#allocation9], 0
    %23 = vsyncpa [#allocation4], 0
    // Predicated region
    $region2: #{lmodel_forward.1} parent=1 // pred_check
      _
    $region3: #{lmodel_forward.1} parent=1 // pred_check_branch
      %25 = sbr.rel (0) target = $region5
    $region4: #{lmodel_forward.1} parent=1 // pred_region
      _
    $region5: #{lmodel_forward.1} parent=1 // pred_fallthru
      _
    // Predicated region
    $region6: #{lmodel_forward.1} parent=1 // pred_check
      _
    $region7: #{lmodel_forward.1} parent=1 // pred_check_branch
      %27 = sbr.rel (0) target = $region9
    $region8: #{lmodel_forward.1} parent=1 // pred_region
      _
    $region9: #{lmodel_forward.1} parent=1 // pred_fallthru
      _
    // Predicated region
    $region10: #{lmodel_forward.1} parent=1 // pred_check
      _
    $region11: #{lmodel_forward.1} parent=1 // pred_check_branch
      %29 = sbr.rel (0) target = $region13
    $region12: #{lmodel_forward.1} parent=1 // pred_region
      _
    $region13: #{lmodel_forward.1} parent=1 // pred_fallthru
      _
    // Predicated region
    $region14: #{lmodel_forward.1} parent=1 // pred_check
      _
    $region15: #{lmodel_forward.1} parent=1 // pred_check_branch
      %31 = sbr.rel (0) target = $region17
    $region16: #{lmodel_forward.1} parent=1 // pred_region
      _
    $region17: #{lmodel_forward.1} parent=1 // pred_fallthru
      _
    // Predicated region
    $region18: #{lmodel_forward.1} parent=1 // pred_check
      _
    $region19: #{lmodel_forward.1} parent=1 // pred_check_branch
      %33 = sbr.rel (0) target = $region21
    $region20: #{lmodel_forward.1} parent=1 // pred_region
      %s35 = ssub.s32 4608, 4608
      %36 = vsyncadd [#allocation3], %s35
      %s37 = sshll.u32 [#allocation2], 4
      %s38 = int_to_ptr.vmem [resolvable:$true] %s37
      %43 = dma.hbm_to_vmem [thread:$0]  %s4, 4608, %s38, [#allocation3], 128, 128, 8
    $region21: #{lmodel_forward.1} parent=1 // pred_fallthru
      _
    // Predicated region
    $region22: #{lmodel_forward.1} parent=1 // pred_check
      _
    $region23: #{lmodel_forward.1} parent=1 // pred_check_branch
      %45 = sbr.rel (0) target = $region25
    $region24: #{lmodel_forward.1} parent=1 // pred_region
      _
    $region25: #{lmodel_forward.1} parent=1 // pred_fallthru
      _
    // Predicated region
    $region26: #{lmodel_forward.1} parent=1 // pred_check
      _
    $region27: #{lmodel_forward.1} parent=1 // pred_check_branch
      %47 = sbr.rel (0) target = $region29
    $region28: #{lmodel_forward.1} parent=1 // pred_region
      _
    $region29: #{lmodel_forward.1} parent=1 // pred_fallthru
      _
    // Predicated region
    $region30: #{lmodel_forward.1} parent=1 // pred_check
      _
    $region31: #{lmodel_forward.1} parent=1 // pred_check_branch
      %49 = sbr.rel (0) target = $region33
    $region32: #{lmodel_forward.1} parent=1 // pred_region
      %s51 = ssub.s32 4608, 4608
      %52 = vsyncadd [#allocation6], %s51
      %s53 = sshll.u32 [#allocation5], 4
      %s54 = int_to_ptr.vmem [resolvable:$true] %s53
      %59 = dma.hbm_to_vmem [thread:$0]  %s7, 4608, %s54, [#allocation6], 128, 128, 8
    $region33: #{lmodel_forward.1} parent=1 // pred_fallthru
      _
    // Predicated region
    $region34: #{lmodel_forward.1} parent=1 // pred_check
      _
    $region35: #{lmodel_forward.1} parent=1 // pred_check_branch
      %61 = sbr.rel (0) target = $region37
    $region36: #{lmodel_forward.1} parent=1 // pred_region
      _
    $region37: #{lmodel_forward.1} parent=1 // pred_fallthru
      _
    // Predicated region
    $region38: #{lmodel_forward.1} parent=1 // pred_check
      _
    $region39: #{lmodel_forward.1} parent=1 // pred_check_branch
      %63 = sbr.rel (0) target = $region41
    $region40: #{lmodel_forward.1} parent=1 // pred_region
      _
    $region41: #{lmodel_forward.1} parent=1 // pred_fallthru
      _
    // Predicated region
    $region42: #{lmodel_forward.1} parent=1 // pred_check
      _
    $region43: #{lmodel_forward.1} parent=1 // pred_check_branch
      %65 = sbr.rel (0) target = $region45
    $region44: #{lmodel_forward.1} parent=1 // pred_region
      _
    $region45: #{lmodel_forward.1} parent=1 // pred_fallthru
      _
    // Predicated region
    $region46: #{lmodel_forward.1} parent=1 // pred_check
      _
    $region47: #{lmodel_forward.1} parent=1 // pred_check_branch
      %67 = sbr.rel (0) target = $region49
    $region48: #{lmodel_forward.1} parent=1 // pred_region
      %s69 = ssub.s32 16384, 16384
      %70 = vsyncadd [#allocation6], %s69
      %s71 = sshll.u32 [#allocation7], 4
      %s72 = int_to_ptr.vmem [resolvable:$true] %s71
      %77 = dma.hbm_to_vmem [thread:$0]  %s11, 16384, %s72, [#allocation6], 256, 256, 16
    $region49: #{lmodel_forward.1} parent=1 // pred_fallthru
      _
    // Predicated region
    $region50: #{lmodel_forward.1} parent=1 // pred_check
      _
    $region51: #{lmodel_forward.1} parent=1 // pred_check_branch
      %79 = sbr.rel (0) target = $region53
    $region52: #{lmodel_forward.1} parent=1 // pred_region
      _
    $region53: #{lmodel_forward.1} parent=1 // pred_fallthru
      _
    // Predicated region
    $region54: #{lmodel_forward.1} parent=1 // pred_check
      _
    $region55: #{lmodel_forward.1} parent=1 // pred_check_branch
      %81 = sbr.rel (0) target = $region57
    $region56: #{lmodel_forward.1} parent=1 // pred_region
      %s83 = ssub.s32 4096, 4096
      %84 = vsyncadd [#allocation9], %s83
      %s85 = sshll.u32 [#allocation8], 4
      %s86 = int_to_ptr.vmem [resolvable:$true] %s85
      %91 = dma.hbm_to_vmem [thread:$0]  %s13, 4096, %s86, [#allocation9], 128, 128, 8
    $region57: #{lmodel_forward.1} parent=1 // pred_fallthru
      _
    // Predicated region
    $region58: #{lmodel_forward.1} parent=1 // pred_check
      _
    $region59: #{lmodel_forward.1} parent=1 // pred_check_branch
      %93 = sbr.rel (0) target = $region61
    $region60: #{lmodel_forward.1} parent=1 // pred_region
      _
    $region61: #{lmodel_forward.1} parent=1 // pred_fallthru
      _
    // Predicated region
    $region62: #{lmodel_forward.1} parent=1 // pred_check
      _
    $region63: #{lmodel_forward.1} parent=1 // pred_check_branch
      %95 = sbr.rel (0) target = $region65
    $region64: #{lmodel_forward.1} parent=1 // pred_region
      %96 = dma.done [#allocation3], 4608
    $region65: #{lmodel_forward.1} parent=1 // pred_fallthru
      _
    // Predicated region
    $region66: #{lmodel_forward.1} parent=1 // pred_check
      _
    $region67: #{lmodel_forward.1} parent=1 // pred_check_branch
      %98 = sbr.rel (0) target = $region69
    $region68: #{lmodel_forward.1} parent=1 // pred_region
      %99 = dma.done [#allocation6], 4608
    $region69: #{lmodel_forward.1} parent=1 // pred_fallthru
      _
    // Predicated region
    $region70: #{lmodel_forward.1} parent=1 // pred_check
      _
    $region71: #{lmodel_forward.1} parent=1 // pred_check_branch
      %101 = sbr.rel (0) target = $region73
    $region72: #{lmodel_forward.1} parent=1 // pred_region
      %102 = dma.done [#allocation6], 16384
    $region73: #{lmodel_forward.1} parent=1 // pred_fallthru
      _
    // Predicated region
    $region74: #{lmodel_forward.1} parent=1 // pred_check
      _
    $region75: #{lmodel_forward.1} parent=1 // pred_check_branch
      %104 = sbr.rel (0) target = $region77
    $region76: #{lmodel_forward.1} parent=1 // pred_region
      %105 = dma.done [#allocation9], 4096
    $region77: #{lmodel_forward.1} parent=1 // pred_fallthru
      _
    %v106 = vld [vmem:[%s0] sm:$0xff]
    %v107 = vld [vmem:[%s0 + $0x8] sm:$0xff]
    %v108 = vld [vmem:[%s0 + $0x10] sm:$0xff]
    %v109 = vld [vmem:[%s0 + $0x18] sm:$0xff]
    %v110 = vld [vmem:[%s0 + $0x20] sm:$0xff]
    %v111 = vld [vmem:[%s0 + $0x28] sm:$0xff]
    %v112 = vld [vmem:[%s0 + $0x30] sm:$0xff]
    %v113 = vld [vmem:[%s0 + $0x38] sm:$0xff]
    %v114 = vld [vmem:[%s0 + $0x40] sm:$0xff]
    %v115 = vld [vmem:[%s0 + $0x48] sm:$0xff]
    %v116 = vld [vmem:[%s0 + $0x50] sm:$0xff]
    %v117 = vld [vmem:[%s0 + $0x58] sm:$0xff]
    %v118 = vld [vmem:[%s0 + $0x60] sm:$0xff]
    %v119 = vld [vmem:[%s0 + $0x68] sm:$0xff]
    %v120 = vld [vmem:[%s0 + $0x70] sm:$0xff]
    %v121 = vld [vmem:[%s0 + $0x78] sm:$0xff]
    %v122 = vld [vmem:[%s1] sm:$0xff]
    %v123 = vld [vmem:[%s1 + $0x8] sm:$0x1]
    %v124 = vld [vmem:[%s2] sm:$0x1]
    %v126 = vlaneseq
    %v127 = vshrl.u32 %v126, 7
    %v128 = vsub.s32 0, %v127
    %v129 = vrot.slane %v124, %v128
    %vm131 = vcmask 72704
    %v133 = vsel %vm131, %v106, 0
    %v136 = vsel %vm131, %v107, 0
    %v139 = vsel %vm131, %v108, 0
    %v142 = vsel %vm131, %v109, 0
    %v145 = vsel %vm131, %v110, 0
    %v148 = vsel %vm131, %v111, 0
    %v151 = vsel %vm131, %v112, 0
    %v154 = vsel %vm131, %v113, 0
    %v157 = vsel %vm131, %v114, 0
    %v160 = vsel %vm131, %v115, 0
    %v163 = vsel %vm131, %v116, 0
    %v166 = vsel %vm131, %v117, 0
    %v169 = vsel %vm131, %v118, 0
    %v172 = vsel %vm131, %v119, 0
    %v175 = vsel %vm131, %v120, 0
    %v178 = vsel %vm131, %v121, 0
    %vm180 = vcmask 1040384
    %v182 = vsel %vm180, %v123, 0
    %184 = vmatprep.subr.mxu0 0.0
    %185 = vmatpush1.msra.mxu0 %v122
    %186 = vmatprep.subr.mxu0 0.0
    %187 = vmatpush1.msra.mxu0 %v182
    %188 = vmatprep.subr.mxu0 0.0
    %189 = vmatpush1.msra.mxu0 0.0
    %190 = vmatprep.subr.mxu0 0.0
    %191 = vmatpush1.msra.mxu0 0.0
    %192 = vmatprep.subr.mxu0 0.0
    %193 = vmatpush1.msra.mxu0 0.0
    %194 = vmatprep.subr.mxu0 0.0
    %195 = vmatpush1.msra.mxu0 0.0
    %196 = vmatprep.subr.mxu0 0.0
    %197 = vmatpush1.msra.mxu0 0.0
    %198 = vmatprep.subr.mxu0 0.0
    %199 = vmatpush1.msra.mxu0 0.0
    %200 = vmatprep.subr.mxu0 0.0
    %201 = vmatpush1.msra.mxu0 0.0
    %202 = vmatprep.subr.mxu0 0.0
    %203 = vmatpush1.msra.mxu0 0.0
    %204 = vmatprep.subr.mxu0 0.0
    %205 = vmatpush1.msra.mxu0 0.0
    %206 = vmatprep.subr.mxu0 0.0
    %207 = vmatpush1.msra.mxu0 0.0
    %208 = vmatprep.subr.mxu0 0.0
    %209 = vmatpush1.msra.mxu0 0.0
    %210 = vmatprep.subr.mxu0 0.0
    %211 = vmatpush1.msra.mxu0 0.0
    %212 = vmatprep.subr.mxu0 0.0
    %213 = vmatpush1.msra.mxu0 0.0
    %214 = vmatprep.subr.mxu0 0.0
    %215 = vmatpush1.msra.mxu0 0.0
    %216 = vmatprep.subr.mxu0 0.0
    %217 = vmatpush1.msra.mxu0 0.0
    %218 = vmatprep.subr.mxu0 0.0
    %219 = vmatpush1.msra.mxu0 0.0
    %220 = vmatprep.subr.mxu0 0.0
    %221 = vmatpush1.msra.mxu0 0.0
    %222 = vmatprep.subr.mxu0 0.0
    %223 = vmatpush1.msra.mxu0 0.0
    %224 = vmatprep.subr.mxu0 0.0
    %225 = vmatpush1.msra.mxu0 0.0
    %226 = vmatprep.subr.mxu0 0.0
    %227 = vmatpush1.msra.mxu0 0.0
    %228 = vmatprep.subr.mxu0 0.0
    %229 = vmatpush1.msra.mxu0 0.0
    %230 = vmatprep.subr.mxu0 0.0
    %231 = vmatpush1.msra.mxu0 0.0
    %232 = vmatprep.subr.mxu0 0.0
    %233 = vmatpush1.msra.mxu0 0.0
    %234 = vmatprep.subr.mxu0 0.0
    %235 = vmatpush1.msra.mxu0 0.0
    %236 = vmatprep.subr.mxu0 0.0
    %237 = vmatpush1.msra.mxu0 0.0
    %238 = vmatprep.subr.mxu0 0.0
    %239 = vmatpush1.msra.mxu0 0.0
    %240 = vmatprep.subr.mxu0 0.0
    %241 = vmatpush1.msra.mxu0 0.0
    %242 = vmatprep.subr.mxu0 0.0
    %243 = vmatpush1.msra.mxu0 0.0
    %244 = vmatprep.subr.mxu0 0.0
    %245 = vmatpush1.msra.mxu0 0.0
    %246 = vmatprep.subr.mxu0 0.0
    %247 = vmatpush1.msra.mxu0 0.0
    %248 = vmatprep.mubr.f32.mxu0 0.0
    %249 = vmatmul.mubr.f32.gmra.mrb[0].mxu0 %v133
    %v250 = vpop.f32.mrb[0].mxu0
    %v251 = vadd.f32 %v129, %v250
    %v252 = vpop.f32.mrb[0].mxu0
    %253 = vmatprep.mubr.f32.mxu0 0.0
    %254 = vmatmul.mubr.f32.gmra.mrb[0].mxu0 %v136
    %v255 = vpop.f32.mrb[0].mxu0
    %v256 = vadd.f32 %v129, %v255
    %v257 = vpop.f32.mrb[0].mxu0
    %258 = vmatprep.mubr.f32.mxu0 0.0
    %259 = vmatmul.mubr.f32.gmra.mrb[0].mxu0 %v139
    %v260 = vpop.f32.mrb[0].mxu0
    %v261 = vadd.f32 %v129, %v260
    %v262 = vpop.f32.mrb[0].mxu0
    %263 = vmatprep.mubr.f32.mxu0 0.0
    %264 = vmatmul.mubr.f32.gmra.mrb[0].mxu0 %v142
    %v265 = vpop.f32.mrb[0].mxu0
    %v266 = vadd.f32 %v129, %v265
    %v267 = vpop.f32.mrb[0].mxu0
    %268 = vmatprep.mubr.f32.mxu0 0.0
    %269 = vmatmul.mubr.f32.gmra.mrb[0].mxu0 %v145
    %v270 = vpop.f32.mrb[0].mxu0
    %v271 = vadd.f32 %v129, %v270
    %v272 = vpop.f32.mrb[0].mxu0
    %273 = vmatprep.mubr.f32.mxu0 0.0
    %274 = vmatmul.mubr.f32.gmra.mrb[0].mxu0 %v148
    %v275 = vpop.f32.mrb[0].mxu0
    %v276 = vadd.f32 %v129, %v275
    %v277 = vpop.f32.mrb[0].mxu0
    %278 = vmatprep.mubr.f32.mxu0 0.0
    %279 = vmatmul.mubr.f32.gmra.mrb[0].mxu0 %v151
    %v280 = vpop.f32.mrb[0].mxu0
    %v281 = vadd.f32 %v129, %v280
    %v282 = vpop.f32.mrb[0].mxu0
    %283 = vmatprep.mubr.f32.mxu0 0.0
    %284 = vmatmul.mubr.f32.gmra.mrb[0].mxu0 %v154
    %v285 = vpop.f32.mrb[0].mxu0
    %v286 = vadd.f32 %v129, %v285
    %v287 = vpop.f32.mrb[0].mxu0
    %288 = vmatprep.mubr.f32.mxu0 0.0
    %289 = vmatmul.mubr.f32.gmra.mrb[0].mxu0 %v157
    %v290 = vpop.f32.mrb[0].mxu0
    %v291 = vadd.f32 %v129, %v290
    %v292 = vpop.f32.mrb[0].mxu0
    %293 = vmatprep.mubr.f32.mxu0 0.0
    %294 = vmatmul.mubr.f32.gmra.mrb[0].mxu0 %v160
    %v295 = vpop.f32.mrb[0].mxu0
    %v296 = vadd.f32 %v129, %v295
    %v297 = vpop.f32.mrb[0].mxu0
    %298 = vmatprep.mubr.f32.mxu0 0.0
    %299 = vmatmul.mubr.f32.gmra.mrb[0].mxu0 %v163
    %v300 = vpop.f32.mrb[0].mxu0
    %v301 = vadd.f32 %v129, %v300
    %v302 = vpop.f32.mrb[0].mxu0
    %303 = vmatprep.mubr.f32.mxu0 0.0
    %304 = vmatmul.mubr.f32.gmra.mrb[0].mxu0 %v166
    %v305 = vpop.f32.mrb[0].mxu0
    %v306 = vadd.f32 %v129, %v305
    %v307 = vpop.f32.mrb[0].mxu0
    %308 = vmatprep.mubr.f32.mxu0 0.0
    %309 = vmatmul.mubr.f32.gmra.mrb[0].mxu0 %v169
    %v310 = vpop.f32.mrb[0].mxu0
    %v311 = vadd.f32 %v129, %v310
    %v312 = vpop.f32.mrb[0].mxu0
    %313 = vmatprep.mubr.f32.mxu0 0.0
    %314 = vmatmul.mubr.f32.gmra.mrb[0].mxu0 %v172
    %v315 = vpop.f32.mrb[0].mxu0
    %v316 = vadd.f32 %v129, %v315
    %v317 = vpop.f32.mrb[0].mxu0
    %318 = vmatprep.mubr.f32.mxu0 0.0
    %319 = vmatmul.mubr.f32.gmra.mrb[0].mxu0 %v175
    %v320 = vpop.f32.mrb[0].mxu0
    %v321 = vadd.f32 %v129, %v320
    %v322 = vpop.f32.mrb[0].mxu0
    %323 = vmatprep.mubr.f32.mxu0 0.0
    %324 = vmatmul.mubr.f32.gmra.mrb[0].mxu0 %v178
    %v325 = vpop.f32.mrb[0].mxu0
    %v326 = vadd.f32 %v129, %v325
    %v327 = vpop.f32.mrb[0].mxu0
    %328 = vdwg.mxu0
    %v329 = vmax.f32 %v251, 0.0
    %v330 = vmax.f32 %v256, 0.0
    %v331 = vmax.f32 %v261, 0.0
    %v332 = vmax.f32 %v266, 0.0
    %v333 = vmax.f32 %v271, 0.0
    %v334 = vmax.f32 %v276, 0.0
    %v335 = vmax.f32 %v281, 0.0
    %v336 = vmax.f32 %v286, 0.0
    %v337 = vmax.f32 %v291, 0.0
    %v338 = vmax.f32 %v296, 0.0
    %v339 = vmax.f32 %v301, 0.0
    %v340 = vmax.f32 %v306, 0.0
    %v341 = vmax.f32 %v311, 0.0
    %v342 = vmax.f32 %v316, 0.0
    %v343 = vmax.f32 %v321, 0.0
    %v344 = vmax.f32 %v326, 0.0
    %v345 = vld [vmem:[%s3] sm:$0xff]
    %v346 = vld [vmem:[%s3 + $0x8] sm:$0xff]
    %v347 = vld [vmem:[%s3 + $0x10] sm:$0xff]
    %v348 = vld [vmem:[%s3 + $0x18] sm:$0xff]
    %349 = vmatprep.subr.mxu0 0.0
    %350 = vmatpush1.msra.mxu0 %v329
    %351 = vmatprep.subr.mxu0 0.0
    %352 = vmatpush1.msra.mxu0 %v330
    %353 = vmatprep.subr.mxu0 0.0
    %354 = vmatpush1.msra.mxu0 %v331
    %355 = vmatprep.subr.mxu0 0.0
    %356 = vmatpush1.msra.mxu0 %v332
    %357 = vmatprep.subr.mxu0 0.0
    %358 = vmatpush1.msra.mxu0 %v333
    %359 = vmatprep.subr.mxu0 0.0
    %360 = vmatpush1.msra.mxu0 %v334
    %361 = vmatprep.subr.mxu0 0.0
    %362 = vmatpush1.msra.mxu0 %v335
    %363 = vmatprep.subr.mxu0 0.0
    %364 = vmatpush1.msra.mxu0 %v336
    %365 = vmatprep.subr.mxu0 0.0
    %366 = vmatpush1.msra.mxu0 %v337
    %367 = vmatprep.subr.mxu0 0.0
    %368 = vmatpush1.msra.mxu0 %v338
    %369 = vmatprep.subr.mxu0 0.0
    %370 = vmatpush1.msra.mxu0 %v339
    %371 = vmatprep.subr.mxu0 0.0
    %372 = vmatpush1.msra.mxu0 %v340
    %373 = vmatprep.subr.mxu0 0.0
    %374 = vmatpush1.msra.mxu0 %v341
    %375 = vmatprep.subr.mxu0 0.0
    %376 = vmatpush1.msra.mxu0 %v342
    %377 = vmatprep.subr.mxu0 0.0
    %378 = vmatpush1.msra.mxu0 %v343
    %379 = vmatprep.subr.mxu0 0.0
    %380 = vmatpush1.msra.mxu0 %v344
    %381 = vmatprep.subr.mxu0 0.0
    %382 = vmatpush1.msra.mxu0 0.0
    %383 = vmatprep.subr.mxu0 0.0
    %384 = vmatpush1.msra.mxu0 0.0
    %385 = vmatprep.subr.mxu0 0.0
    %386 = vmatpush1.msra.mxu0 0.0
    %387 = vmatprep.subr.mxu0 0.0
    %388 = vmatpush1.msra.mxu0 0.0
    %389 = vmatprep.subr.mxu0 0.0
    %390 = vmatpush1.msra.mxu0 0.0
    %391 = vmatprep.subr.mxu0 0.0
    %392 = vmatpush1.msra.mxu0 0.0
    %393 = vmatprep.subr.mxu0 0.0
    %394 = vmatpush1.msra.mxu0 0.0
    %395 = vmatprep.subr.mxu0 0.0
    %396 = vmatpush1.msra.mxu0 0.0
    %397 = vmatprep.subr.mxu0 0.0
    %398 = vmatpush1.msra.mxu0 0.0
    %399 = vmatprep.subr.mxu0 0.0
    %400 = vmatpush1.msra.mxu0 0.0
    %401 = vmatprep.subr.mxu0 0.0
    %402 = vmatpush1.msra.mxu0 0.0
    %403 = vmatprep.subr.mxu0 0.0
    %404 = vmatpush1.msra.mxu0 0.0
    %405 = vmatprep.subr.mxu0 0.0
    %406 = vmatpush1.msra.mxu0 0.0
    %407 = vmatprep.subr.mxu0 0.0
    %408 = vmatpush1.msra.mxu0 0.0
    %409 = vmatprep.subr.mxu0 0.0
    %410 = vmatpush1.msra.mxu0 0.0
    %411 = vmatprep.subr.mxu0 0.0
    %412 = vmatpush1.msra.mxu0 0.0
    %413 = vmatprep.mubr.f32.mxu0 0.0
    %414 = vmatmul.mubr.f32.gmra.mrb[0].mxu0 %v345
    %v415 = vpop.f32.mrb[0].mxu0
    %v416 = vadd.f32 0.0, %v415
    %v417 = vpop.f32.mrb[0].mxu0
    %418 = vmatprep.mubr.f32.mxu0 0.0
    %419 = vmatmul.mubr.f32.gmra.mrb[0].mxu0 %v346
    %v420 = vpop.f32.mrb[0].mxu0
    %v421 = vadd.f32 0.0, %v420
    %v422 = vpop.f32.mrb[0].mxu0
    %423 = vmatprep.mubr.f32.mxu0 0.0
    %424 = vmatmul.mubr.f32.gmra.mrb[0].mxu0 %v347
    %v425 = vpop.f32.mrb[0].mxu0
    %v426 = vadd.f32 0.0, %v425
    %v427 = vpop.f32.mrb[0].mxu0
    %428 = vmatprep.mubr.f32.mxu0 0.0
    %429 = vmatmul.mubr.f32.gmra.mrb[0].mxu0 %v348
    %v430 = vpop.f32.mrb[0].mxu0
    %v431 = vadd.f32 0.0, %v430
    %v432 = vpop.f32.mrb[0].mxu0
    %433 = vdwg.mxu0
    %v434 = vld [vmem:[#allocation2] sm:$0xff]
    %v435 = vld [vmem:[#allocation2 + $0x8] sm:$0xff]
    %v436 = vld [vmem:[#allocation2 + $0x10] sm:$0xff]
    %v437 = vld [vmem:[#allocation2 + $0x18] sm:$0xff]
    %s438 = scalar_lea.vmem %s3, 32
    %v439 = vld [vmem:[%s438] sm:$0xff]
    %v440 = vld [vmem:[%s438 + $0x8] sm:$0xff]
    %v441 = vld [vmem:[%s438 + $0x10] sm:$0xff]
    %v442 = vld [vmem:[%s438 + $0x18] sm:$0xff]
    %443 = vmatprep.subr.mxu0 0.0
    %444 = vmatpush1.msra.mxu0 %v329
    %445 = vmatprep.subr.mxu0 0.0
    %446 = vmatpush1.msra.mxu0 %v330
    %447 = vmatprep.subr.mxu0 0.0
    %448 = vmatpush1.msra.mxu0 %v331
    %449 = vmatprep.subr.mxu0 0.0
    %450 = vmatpush1.msra.mxu0 %v332
    %451 = vmatprep.subr.mxu0 0.0
    %452 = vmatpush1.msra.mxu0 %v333
    %453 = vmatprep.subr.mxu0 0.0
    %454 = vmatpush1.msra.mxu0 %v334
    %455 = vmatprep.subr.mxu0 0.0
    %456 = vmatpush1.msra.mxu0 %v335
    %457 = vmatprep.subr.mxu0 0.0
    %458 = vmatpush1.msra.mxu0 %v336
    %459 = vmatprep.subr.mxu0 0.0
    %460 = vmatpush1.msra.mxu0 %v337
    %461 = vmatprep.subr.mxu0 0.0
    %462 = vmatpush1.msra.mxu0 %v338
    %463 = vmatprep.subr.mxu0 0.0
    %464 = vmatpush1.msra.mxu0 %v339
    %465 = vmatprep.subr.mxu0 0.0
    %466 = vmatpush1.msra.mxu0 %v340
    %467 = vmatprep.subr.mxu0 0.0
    %468 = vmatpush1.msra.mxu0 %v341
    %469 = vmatprep.subr.mxu0 0.0
    %470 = vmatpush1.msra.mxu0 %v342
    %471 = vmatprep.subr.mxu0 0.0
    %472 = vmatpush1.msra.mxu0 %v343
    %473 = vmatprep.subr.mxu0 0.0
    %474 = vmatpush1.msra.mxu0 %v344
    %475 = vmatprep.subr.mxu0 0.0
    %476 = vmatpush1.msra.mxu0 0.0
    %477 = vmatprep.subr.mxu0 0.0
    %478 = vmatpush1.msra.mxu0 0.0
    %479 = vmatprep.subr.mxu0 0.0
    %480 = vmatpush1.msra.mxu0 0.0
    %481 = vmatprep.subr.mxu0 0.0
    %482 = vmatpush1.msra.mxu0 0.0
    %483 = vmatprep.subr.mxu0 0.0
    %484 = vmatpush1.msra.mxu0 0.0
    %485 = vmatprep.subr.mxu0 0.0
    %486 = vmatpush1.msra.mxu0 0.0
    %487 = vmatprep.subr.mxu0 0.0
    %488 = vmatpush1.msra.mxu0 0.0
    %489 = vmatprep.subr.mxu0 0.0
    %490 = vmatpush1.msra.mxu0 0.0
    %491 = vmatprep.subr.mxu0 0.0
    %492 = vmatpush1.msra.mxu0 0.0
    %493 = vmatprep.subr.mxu0 0.0
    %494 = vmatpush1.msra.mxu0 0.0
    %495 = vmatprep.subr.mxu0 0.0
    %496 = vmatpush1.msra.mxu0 0.0
    %497 = vmatprep.subr.mxu0 0.0
    %498 = vmatpush1.msra.mxu0 0.0
    %499 = vmatprep.subr.mxu0 0.0
    %500 = vmatpush1.msra.mxu0 0.0
    %501 = vmatprep.subr.mxu0 0.0
    %502 = vmatpush1.msra.mxu0 0.0
    %503 = vmatprep.subr.mxu0 0.0
    %504 = vmatpush1.msra.mxu0 0.0
    %505 = vmatprep.subr.mxu0 0.0
    %506 = vmatpush1.msra.mxu0 0.0
    %507 = vmatprep.mubr.f32.mxu0 0.0
    %508 = vmatmul.mubr.f32.gmra.mrb[0].mxu0 %v439
    %v509 = vpop.f32.mrb[0].mxu0
    %v510 = vadd.f32 0.0, %v509
    %v511 = vpop.f32.mrb[0].mxu0
    %512 = vmatprep.mubr.f32.mxu0 0.0
    %513 = vmatmul.mubr.f32.gmra.mrb[0].mxu0 %v440
    %v514 = vpop.f32.mrb[0].mxu0
    %v515 = vadd.f32 0.0, %v514
    %v516 = vpop.f32.mrb[0].mxu0
    %517 = vmatprep.mubr.f32.mxu0 0.0
    %518 = vmatmul.mubr.f32.gmra.mrb[0].mxu0 %v441
    %v519 = vpop.f32.mrb[0].mxu0
    %v520 = vadd.f32 0.0, %v519
    %v521 = vpop.f32.mrb[0].mxu0
    %522 = vmatprep.mubr.f32.mxu0 0.0
    %523 = vmatmul.mubr.f32.gmra.mrb[0].mxu0 %v442
    %v524 = vpop.f32.mrb[0].mxu0
    %v525 = vadd.f32 0.0, %v524
    %v526 = vpop.f32.mrb[0].mxu0
    %527 = vdwg.mxu0
    %s528 = scalar_lea.vmem [#allocation2], 32
    %v529 = vld [vmem:[%s528] sm:$0xff]
    %v530 = vld [vmem:[%s528 + $0x8] sm:$0xff]
    %v531 = vld [vmem:[%s528 + $0x10] sm:$0xff]
    %v532 = vld [vmem:[%s528 + $0x18] sm:$0xff]
    %vm533 = vcmask 261120
    %v535 = vsel %vm533, %v510, 0
    %v538 = vsel %vm533, %v515, 0
    %v541 = vsel %vm533, %v520, 0
    %v544 = vsel %vm533, %v525, 0
    %546 = vmatprep.subr.mxu0 0.0
    %547 = vmatpush1.msra.mxu0 %v529
    %548 = vmatprep.subr.mxu0 0.0
    %549 = vmatpush1.msra.mxu0 %v530
    %550 = vmatprep.subr.mxu0 0.0
    %551 = vmatpush1.msra.mxu0 %v531
    %552 = vmatprep.subr.mxu0 0.0
    %553 = vmatpush1.msra.mxu0 %v532
    %554 = vmatprep.subr.mxu0 0.0
    %555 = vmatpush1.msra.mxu0 0.0
    %556 = vmatprep.subr.mxu0 0.0
    %557 = vmatpush1.msra.mxu0 0.0
    %558 = vmatprep.subr.mxu0 0.0
    %559 = vmatpush1.msra.mxu0 0.0
    %560 = vmatprep.subr.mxu0 0.0
    %561 = vmatpush1.msra.mxu0 0.0
    %562 = vmatprep.subr.mxu0 0.0
    %563 = vmatpush1.msra.mxu0 0.0
    %564 = vmatprep.subr.mxu0 0.0
    %565 = vmatpush1.msra.mxu0 0.0
    %566 = vmatprep.subr.mxu0 0.0
    %567 = vmatpush1.msra.mxu0 0.0
    %568 = vmatprep.subr.mxu0 0.0
    %569 = vmatpush1.msra.mxu0 0.0
    %570 = vmatprep.subr.mxu0 0.0
    %571 = vmatpush1.msra.mxu0 0.0
    %572 = vmatprep.subr.mxu0 0.0
    %573 = vmatpush1.msra.mxu0 0.0
    %574 = vmatprep.subr.mxu0 0.0
    %575 = vmatpush1.msra.mxu0 0.0
    %576 = vmatprep.subr.mxu0 0.0
    %577 = vmatpush1.msra.mxu0 0.0
    %578 = vmatprep.subr.mxu0 0.0
    %579 = vmatpush1.msra.mxu0 0.0
    %580 = vmatprep.subr.mxu0 0.0
    %581 = vmatpush1.msra.mxu0 0.0
    %582 = vmatprep.subr.mxu0 0.0
    %583 = vmatpush1.msra.mxu0 0.0
    %584 = vmatprep.subr.mxu0 0.0
    %585 = vmatpush1.msra.mxu0 0.0
    %586 = vmatprep.subr.mxu0 0.0
    %587 = vmatpush1.msra.mxu0 0.0
    %588 = vmatprep.subr.mxu0 0.0
    %589 = vmatpush1.msra.mxu0 0.0
    %590 = vmatprep.subr.mxu0 0.0
    %591 = vmatpush1.msra.mxu0 0.0
    %592 = vmatprep.subr.mxu0 0.0
    %593 = vmatpush1.msra.mxu0 0.0
    %594 = vmatprep.subr.mxu0 0.0
    %595 = vmatpush1.msra.mxu0 0.0
    %596 = vmatprep.subr.mxu0 0.0
    %597 = vmatpush1.msra.mxu0 0.0
    %598 = vmatprep.subr.mxu0 0.0
    %599 = vmatpush1.msra.mxu0 0.0
    %600 = vmatprep.subr.mxu0 0.0
    %601 = vmatpush1.msra.mxu0 0.0
    %602 = vmatprep.subr.mxu0 0.0
    %603 = vmatpush1.msra.mxu0 0.0
    %604 = vmatprep.subr.mxu0 0.0
    %605 = vmatpush1.msra.mxu0 0.0
    %606 = vmatprep.subr.mxu0 0.0
    %607 = vmatpush1.msra.mxu0 0.0
    %608 = vmatprep.subr.mxu0 0.0
    %609 = vmatpush1.msra.mxu0 0.0
    %610 = vmatprep.mubr.f32.mxu0 0.0
    %611 = vmatmul.mubr.f32.gmra.mrb[0].mxu0 %v535
    %v612 = vpop.f32.mrb[0].mxu0
    %v613 = vadd.f32 0.0, %v612
    %v614 = vpop.f32.mrb[0].mxu0
    %615 = vmatprep.mubr.f32.mxu0 0.0
    %616 = vmatmul.mubr.f32.gmra.mrb[0].mxu0 %v538
    %v617 = vpop.f32.mrb[0].mxu0
    %v618 = vadd.f32 0.0, %v617
    %v619 = vpop.f32.mrb[0].mxu0
    %620 = vmatprep.mubr.f32.mxu0 0.0
    %621 = vmatmul.mubr.f32.gmra.mrb[0].mxu0 %v541
    %v622 = vpop.f32.mrb[0].mxu0
    %v623 = vadd.f32 0.0, %v622
    %v624 = vpop.f32.mrb[0].mxu0
    %625 = vmatprep.mubr.f32.mxu0 0.0
    %626 = vmatmul.mubr.f32.gmra.mrb[0].mxu0 %v544
    %v627 = vpop.f32.mrb[0].mxu0
    %v628 = vadd.f32 0.0, %v627
    %v629 = vpop.f32.mrb[0].mxu0
    %630 = vdwg.mxu0
    %v632 = vsel %vm533, %v416, 0
    %v635 = vsel %vm533, %v421, 0
    %v638 = vsel %vm533, %v426, 0
    %v641 = vsel %vm533, %v431, 0
    %643 = vmatprep.subr.mxu0 0.0
    %644 = vmatpush1.msra.mxu0 %v434
    %645 = vmatprep.subr.mxu0 0.0
    %646 = vmatpush1.msra.mxu0 %v435
    %647 = vmatprep.subr.mxu0 0.0
    %648 = vmatpush1.msra.mxu0 %v436
    %649 = vmatprep.subr.mxu0 0.0
    %650 = vmatpush1.msra.mxu0 %v437
    %651 = vmatprep.subr.mxu0 0.0
    %652 = vmatpush1.msra.mxu0 0.0
    %653 = vmatprep.subr.mxu0 0.0
    %654 = vmatpush1.msra.mxu0 0.0
    %655 = vmatprep.subr.mxu0 0.0
    %656 = vmatpush1.msra.mxu0 0.0
    %657 = vmatprep.subr.mxu0 0.0
    %658 = vmatpush1.msra.mxu0 0.0
    %659 = vmatprep.subr.mxu0 0.0
    %660 = vmatpush1.msra.mxu0 0.0
    %661 = vmatprep.subr.mxu0 0.0
    %662 = vmatpush1.msra.mxu0 0.0
    %663 = vmatprep.subr.mxu0 0.0
    %664 = vmatpush1.msra.mxu0 0.0
    %665 = vmatprep.subr.mxu0 0.0
    %666 = vmatpush1.msra.mxu0 0.0
    %667 = vmatprep.subr.mxu0 0.0
    %668 = vmatpush1.msra.mxu0 0.0
    %669 = vmatprep.subr.mxu0 0.0
    %670 = vmatpush1.msra.mxu0 0.0
    %671 = vmatprep.subr.mxu0 0.0
    %672 = vmatpush1.msra.mxu0 0.0
    %673 = vmatprep.subr.mxu0 0.0
    %674 = vmatpush1.msra.mxu0 0.0
    %675 = vmatprep.subr.mxu0 0.0
    %676 = vmatpush1.msra.mxu0 0.0
    %677 = vmatprep.subr.mxu0 0.0
    %678 = vmatpush1.msra.mxu0 0.0
    %679 = vmatprep.subr.mxu0 0.0
    %680 = vmatpush1.msra.mxu0 0.0
    %681 = vmatprep.subr.mxu0 0.0
    %682 = vmatpush1.msra.mxu0 0.0
    %683 = vmatprep.subr.mxu0 0.0
    %684 = vmatpush1.msra.mxu0 0.0
    %685 = vmatprep.subr.mxu0 0.0
    %686 = vmatpush1.msra.mxu0 0.0
    %687 = vmatprep.subr.mxu0 0.0
    %688 = vmatpush1.msra.mxu0 0.0
    %689 = vmatprep.subr.mxu0 0.0
    %690 = vmatpush1.msra.mxu0 0.0
    %691 = vmatprep.subr.mxu0 0.0
    %692 = vmatpush1.msra.mxu0 0.0
    %693 = vmatprep.subr.mxu0 0.0
    %694 = vmatpush1.msra.mxu0 0.0
    %695 = vmatprep.subr.mxu0 0.0
    %696 = vmatpush1.msra.mxu0 0.0
    %697 = vmatprep.subr.mxu0 0.0
    %698 = vmatpush1.msra.mxu0 0.0
    %699 = vmatprep.subr.mxu0 0.0
    %700 = vmatpush1.msra.mxu0 0.0
    %701 = vmatprep.subr.mxu0 0.0
    %702 = vmatpush1.msra.mxu0 0.0
    %703 = vmatprep.subr.mxu0 0.0
    %704 = vmatpush1.msra.mxu0 0.0
    %705 = vmatprep.subr.mxu0 0.0
    %706 = vmatpush1.msra.mxu0 0.0
    %707 = vmatprep.mubr.f32.mxu0 0.0
    %708 = vmatmul.mubr.f32.gmra.mrb[0].mxu0 %v632
    %v709 = vpop.f32.mrb[0].mxu0
    %v710 = vadd.f32 %v613, %v709
    %v711 = vpop.f32.mrb[0].mxu0
    %712 = vmatprep.mubr.f32.mxu0 0.0
    %713 = vmatmul.mubr.f32.gmra.mrb[0].mxu0 %v635
    %v714 = vpop.f32.mrb[0].mxu0
    %v715 = vadd.f32 %v618, %v714
    %v716 = vpop.f32.mrb[0].mxu0
    %717 = vmatprep.mubr.f32.mxu0 0.0
    %718 = vmatmul.mubr.f32.gmra.mrb[0].mxu0 %v638
    %v719 = vpop.f32.mrb[0].mxu0
    %v720 = vadd.f32 %v623, %v719
    %v721 = vpop.f32.mrb[0].mxu0
    %722 = vmatprep.mubr.f32.mxu0 0.0
    %723 = vmatmul.mubr.f32.gmra.mrb[0].mxu0 %v641
    %v724 = vpop.f32.mrb[0].mxu0
    %v725 = vadd.f32 %v628, %v724
    %v726 = vpop.f32.mrb[0].mxu0
    %727 = vdwg.mxu0
    %s728 = scalar_lea.vmem %s3, 64
    %v729 = vld [vmem:[%s728] sm:$0xff]
    %v730 = vld [vmem:[%s728 + $0x8] sm:$0xff]
    %v731 = vld [vmem:[%s728 + $0x10] sm:$0xff]
    %v732 = vld [vmem:[%s728 + $0x18] sm:$0xff]
    %733 = vmatprep.subr.mxu0 0.0
    %734 = vmatpush1.msra.mxu0 %v329
    %735 = vmatprep.subr.mxu0 0.0
    %736 = vmatpush1.msra.mxu0 %v330
    %737 = vmatprep.subr.mxu0 0.0
    %738 = vmatpush1.msra.mxu0 %v331
    %739 = vmatprep.subr.mxu0 0.0
    %740 = vmatpush1.msra.mxu0 %v332
    %741 = vmatprep.subr.mxu0 0.0
    %742 = vmatpush1.msra.mxu0 %v333
    %743 = vmatprep.subr.mxu0 0.0
    %744 = vmatpush1.msra.mxu0 %v334
    %745 = vmatprep.subr.mxu0 0.0
    %746 = vmatpush1.msra.mxu0 %v335
    %747 = vmatprep.subr.mxu0 0.0
    %748 = vmatpush1.msra.mxu0 %v336
    %749 = vmatprep.subr.mxu0 0.0
    %750 = vmatpush1.msra.mxu0 %v337
    %751 = vmatprep.subr.mxu0 0.0
    %752 = vmatpush1.msra.mxu0 %v338
    %753 = vmatprep.subr.mxu0 0.0
    %754 = vmatpush1.msra.mxu0 %v339
    %755 = vmatprep.subr.mxu0 0.0
    %756 = vmatpush1.msra.mxu0 %v340
    %757 = vmatprep.subr.mxu0 0.0
    %758 = vmatpush1.msra.mxu0 %v341
    %759 = vmatprep.subr.mxu0 0.0
    %760 = vmatpush1.msra.mxu0 %v342
    %761 = vmatprep.subr.mxu0 0.0
    %762 = vmatpush1.msra.mxu0 %v343
    %763 = vmatprep.subr.mxu0 0.0
    %764 = vmatpush1.msra.mxu0 %v344
    %765 = vmatprep.subr.mxu0 0.0
    %766 = vmatpush1.msra.mxu0 0.0
    %767 = vmatprep.subr.mxu0 0.0
    %768 = vmatpush1.msra.mxu0 0.0
    %769 = vmatprep.subr.mxu0 0.0
    %770 = vmatpush1.msra.mxu0 0.0
    %771 = vmatprep.subr.mxu0 0.0
    %772 = vmatpush1.msra.mxu0 0.0
    %773 = vmatprep.subr.mxu0 0.0
    %774 = vmatpush1.msra.mxu0 0.0
    %775 = vmatprep.subr.mxu0 0.0
    %776 = vmatpush1.msra.mxu0 0.0
    %777 = vmatprep.subr.mxu0 0.0
    %778 = vmatpush1.msra.mxu0 0.0
    %779 = vmatprep.subr.mxu0 0.0
    %780 = vmatpush1.msra.mxu0 0.0
    %781 = vmatprep.subr.mxu0 0.0
    %782 = vmatpush1.msra.mxu0 0.0
    %783 = vmatprep.subr.mxu0 0.0
    %784 = vmatpush1.msra.mxu0 0.0
    %785 = vmatprep.subr.mxu0 0.0
    %786 = vmatpush1.msra.mxu0 0.0
    %787 = vmatprep.subr.mxu0 0.0
    %788 = vmatpush1.msra.mxu0 0.0
    %789 = vmatprep.subr.mxu0 0.0
    %790 = vmatpush1.msra.mxu0 0.0
    %791 = vmatprep.subr.mxu0 0.0
    %792 = vmatpush1.msra.mxu0 0.0
    %793 = vmatprep.subr.mxu0 0.0
    %794 = vmatpush1.msra.mxu0 0.0
    %795 = vmatprep.subr.mxu0 0.0
    %796 = vmatpush1.msra.mxu0 0.0
    %797 = vmatprep.mubr.f32.mxu0 0.0
    %798 = vmatmul.mubr.f32.gmra.mrb[0].mxu0 %v729
    %v799 = vpop.f32.mrb[0].mxu0
    %v800 = vadd.f32 0.0, %v799
    %v801 = vpop.f32.mrb[0].mxu0
    %802 = vmatprep.mubr.f32.mxu0 0.0
    %803 = vmatmul.mubr.f32.gmra.mrb[0].mxu0 %v730
    %v804 = vpop.f32.mrb[0].mxu0
    %v805 = vadd.f32 0.0, %v804
    %v806 = vpop.f32.mrb[0].mxu0
    %807 = vmatprep.mubr.f32.mxu0 0.0
    %808 = vmatmul.mubr.f32.gmra.mrb[0].mxu0 %v731
    %v809 = vpop.f32.mrb[0].mxu0
    %v810 = vadd.f32 0.0, %v809
    %v811 = vpop.f32.mrb[0].mxu0
    %812 = vmatprep.mubr.f32.mxu0 0.0
    %813 = vmatmul.mubr.f32.gmra.mrb[0].mxu0 %v732
    %v814 = vpop.f32.mrb[0].mxu0
    %v815 = vadd.f32 0.0, %v814
    %v816 = vpop.f32.mrb[0].mxu0
    %817 = vdwg.mxu0
    %s818 = scalar_lea.vmem [#allocation2], 64
    %v819 = vld [vmem:[%s818] sm:$0xff]
    %v820 = vld [vmem:[%s818 + $0x8] sm:$0xff]
    %v821 = vld [vmem:[%s818 + $0x10] sm:$0xff]
    %v822 = vld [vmem:[%s818 + $0x18] sm:$0xff]
    %v824 = vsel %vm533, %v800, 0
    %v827 = vsel %vm533, %v805, 0
    %v830 = vsel %vm533, %v810, 0
    %v833 = vsel %vm533, %v815, 0
    %835 = vmatprep.subr.mxu0 0.0
    %836 = vmatpush1.msra.mxu0 %v819
    %837 = vmatprep.subr.mxu0 0.0
    %838 = vmatpush1.msra.mxu0 %v820
    %839 = vmatprep.subr.mxu0 0.0
    %840 = vmatpush1.msra.mxu0 %v821
    %841 = vmatprep.subr.mxu0 0.0
    %842 = vmatpush1.msra.mxu0 %v822
    %843 = vmatprep.subr.mxu0 0.0
    %844 = vmatpush1.msra.mxu0 0.0
    %845 = vmatprep.subr.mxu0 0.0
    %846 = vmatpush1.msra.mxu0 0.0
    %847 = vmatprep.subr.mxu0 0.0
    %848 = vmatpush1.msra.mxu0 0.0
    %849 = vmatprep.subr.mxu0 0.0
    %850 = vmatpush1.msra.mxu0 0.0
    %851 = vmatprep.subr.mxu0 0.0
    %852 = vmatpush1.msra.mxu0 0.0
    %853 = vmatprep.subr.mxu0 0.0
    %854 = vmatpush1.msra.mxu0 0.0
    %855 = vmatprep.subr.mxu0 0.0
    %856 = vmatpush1.msra.mxu0 0.0
    %857 = vmatprep.subr.mxu0 0.0
    %858 = vmatpush1.msra.mxu0 0.0
    %859 = vmatprep.subr.mxu0 0.0
    %860 = vmatpush1.msra.mxu0 0.0
    %861 = vmatprep.subr.mxu0 0.0
    %862 = vmatpush1.msra.mxu0 0.0
    %863 = vmatprep.subr.mxu0 0.0
    %864 = vmatpush1.msra.mxu0 0.0
    %865 = vmatprep.subr.mxu0 0.0
    %866 = vmatpush1.msra.mxu0 0.0
    %867 = vmatprep.subr.mxu0 0.0
    %868 = vmatpush1.msra.mxu0 0.0
    %869 = vmatprep.subr.mxu0 0.0
    %870 = vmatpush1.msra.mxu0 0.0
    %871 = vmatprep.subr.mxu0 0.0
    %872 = vmatpush1.msra.mxu0 0.0
    %873 = vmatprep.subr.mxu0 0.0
    %874 = vmatpush1.msra.mxu0 0.0
    %875 = vmatprep.subr.mxu0 0.0
    %876 = vmatpush1.msra.mxu0 0.0
    %877 = vmatprep.subr.mxu0 0.0
    %878 = vmatpush1.msra.mxu0 0.0
    %879 = vmatprep.subr.mxu0 0.0
    %880 = vmatpush1.msra.mxu0 0.0
    %881 = vmatprep.subr.mxu0 0.0
    %882 = vmatpush1.msra.mxu0 0.0
    %883 = vmatprep.subr.mxu0 0.0
    %884 = vmatpush1.msra.mxu0 0.0
    %885 = vmatprep.subr.mxu0 0.0
    %886 = vmatpush1.msra.mxu0 0.0
    %887 = vmatprep.subr.mxu0 0.0
    %888 = vmatpush1.msra.mxu0 0.0
    %889 = vmatprep.subr.mxu0 0.0
    %890 = vmatpush1.msra.mxu0 0.0
    %891 = vmatprep.subr.mxu0 0.0
    %892 = vmatpush1.msra.mxu0 0.0
    %893 = vmatprep.subr.mxu0 0.0
    %894 = vmatpush1.msra.mxu0 0.0
    %895 = vmatprep.subr.mxu0 0.0
    %896 = vmatpush1.msra.mxu0 0.0
    %897 = vmatprep.subr.mxu0 0.0
    %898 = vmatpush1.msra.mxu0 0.0
    %899 = vmatprep.mubr.f32.mxu0 0.0
    %900 = vmatmul.mubr.f32.gmra.mrb[0].mxu0 %v824
    %v901 = vpop.f32.mrb[0].mxu0
    %v902 = vadd.f32 0.0, %v901
    %v903 = vpop.f32.mrb[0].mxu0
    %904 = vmatprep.mubr.f32.mxu0 0.0
    %905 = vmatmul.mubr.f32.gmra.mrb[0].mxu0 %v827
    %v906 = vpop.f32.mrb[0].mxu0
    %v907 = vadd.f32 0.0, %v906
    %v908 = vpop.f32.mrb[0].mxu0
    %909 = vmatprep.mubr.f32.mxu0 0.0
    %910 = vmatmul.mubr.f32.gmra.mrb[0].mxu0 %v830
    %v911 = vpop.f32.mrb[0].mxu0
    %v912 = vadd.f32 0.0, %v911
    %v913 = vpop.f32.mrb[0].mxu0
    %914 = vmatprep.mubr.f32.mxu0 0.0
    %915 = vmatmul.mubr.f32.gmra.mrb[0].mxu0 %v833
    %v916 = vpop.f32.mrb[0].mxu0
    %v917 = vadd.f32 0.0, %v916
    %v918 = vpop.f32.mrb[0].mxu0
    %919 = vdwg.mxu0
    %v920 = vadd.f32 %v710, %v902
    %v921 = vadd.f32 %v715, %v907
    %v922 = vadd.f32 %v720, %v912
    %v923 = vadd.f32 %v725, %v917
    %s924 = scalar_lea.vmem %s3, 96
    %v925 = vld [vmem:[%s924] sm:$0xff]
    %v926 = vld [vmem:[%s924 + $0x8] sm:$0xff]
    %v927 = vld [vmem:[%s924 + $0x10] sm:$0xff]
    %v928 = vld [vmem:[%s924 + $0x18] sm:$0xff]
    %929 = vmatprep.subr.mxu0 0.0
    %930 = vmatpush1.msra.mxu0 %v329
    %931 = vmatprep.subr.mxu0 0.0
    %932 = vmatpush1.msra.mxu0 %v330
    %933 = vmatprep.subr.mxu0 0.0
    %934 = vmatpush1.msra.mxu0 %v331
    %935 = vmatprep.subr.mxu0 0.0
    %936 = vmatpush1.msra.mxu0 %v332
    %937 = vmatprep.subr.mxu0 0.0
    %938 = vmatpush1.msra.mxu0 %v333
    %939 = vmatprep.subr.mxu0 0.0
    %940 = vmatpush1.msra.mxu0 %v334
    %941 = vmatprep.subr.mxu0 0.0
    %942 = vmatpush1.msra.mxu0 %v335
    %943 = vmatprep.subr.mxu0 0.0
    %944 = vmatpush1.msra.mxu0 %v336
    %945 = vmatprep.subr.mxu0 0.0
    %946 = vmatpush1.msra.mxu0 %v337
    %947 = vmatprep.subr.mxu0 0.0
    %948 = vmatpush1.msra.mxu0 %v338
    %949 = vmatprep.subr.mxu0 0.0
    %950 = vmatpush1.msra.mxu0 %v339
    %951 = vmatprep.subr.mxu0 0.0
    %952 = vmatpush1.msra.mxu0 %v340
    %953 = vmatprep.subr.mxu0 0.0
    %954 = vmatpush1.msra.mxu0 %v341
    %955 = vmatprep.subr.mxu0 0.0
    %956 = vmatpush1.msra.mxu0 %v342
    %957 = vmatprep.subr.mxu0 0.0
    %958 = vmatpush1.msra.mxu0 %v343
    %959 = vmatprep.subr.mxu0 0.0
    %960 = vmatpush1.msra.mxu0 %v344
    %961 = vmatprep.subr.mxu0 0.0
    %962 = vmatpush1.msra.mxu0 0.0
    %963 = vmatprep.subr.mxu0 0.0
    %964 = vmatpush1.msra.mxu0 0.0
    %965 = vmatprep.subr.mxu0 0.0
    %966 = vmatpush1.msra.mxu0 0.0
    %967 = vmatprep.subr.mxu0 0.0
    %968 = vmatpush1.msra.mxu0 0.0
    %969 = vmatprep.subr.mxu0 0.0
    %970 = vmatpush1.msra.mxu0 0.0
    %971 = vmatprep.subr.mxu0 0.0
    %972 = vmatpush1.msra.mxu0 0.0
    %973 = vmatprep.subr.mxu0 0.0
    %974 = vmatpush1.msra.mxu0 0.0
    %975 = vmatprep.subr.mxu0 0.0
    %976 = vmatpush1.msra.mxu0 0.0
    %977 = vmatprep.subr.mxu0 0.0
    %978 = vmatpush1.msra.mxu0 0.0
    %979 = vmatprep.subr.mxu0 0.0
    %980 = vmatpush1.msra.mxu0 0.0
    %981 = vmatprep.subr.mxu0 0.0
    %982 = vmatpush1.msra.mxu0 0.0
    %983 = vmatprep.subr.mxu0 0.0
    %984 = vmatpush1.msra.mxu0 0.0
    %985 = vmatprep.subr.mxu0 0.0
    %986 = vmatpush1.msra.mxu0 0.0
    %987 = vmatprep.subr.mxu0 0.0
    %988 = vmatpush1.msra.mxu0 0.0
    %989 = vmatprep.subr.mxu0 0.0
    %990 = vmatpush1.msra.mxu0 0.0
    %991 = vmatprep.subr.mxu0 0.0
    %992 = vmatpush1.msra.mxu0 0.0
    %993 = vmatprep.mubr.f32.mxu0 0.0
    %994 = vmatmul.mubr.f32.gmra.mrb[0].mxu0 %v925
    %v995 = vpop.f32.mrb[0].mxu0
    %v996 = vadd.f32 0.0, %v995
    %v997 = vpop.f32.mrb[0].mxu0
    %998 = vmatprep.mubr.f32.mxu0 0.0
    %999 = vmatmul.mubr.f32.gmra.mrb[0].mxu0 %v926
    %v1000 = vpop.f32.mrb[0].mxu0
    %v1001 = vadd.f32 0.0, %v1000
    %v1002 = vpop.f32.mrb[0].mxu0
    %1003 = vmatprep.mubr.f32.mxu0 0.0
    %1004 = vmatmul.mubr.f32.gmra.mrb[0].mxu0 %v927
    %v1005 = vpop.f32.mrb[0].mxu0
    %v1006 = vadd.f32 0.0, %v1005
    %v1007 = vpop.f32.mrb[0].mxu0
    %1008 = vmatprep.mubr.f32.mxu0 0.0
    %1009 = vmatmul.mubr.f32.gmra.mrb[0].mxu0 %v928
    %v1010 = vpop.f32.mrb[0].mxu0
    %v1011 = vadd.f32 0.0, %v1010
    %v1012 = vpop.f32.mrb[0].mxu0
    %1013 = vdwg.mxu0
    %s1014 = scalar_lea.vmem [#allocation2], 96
    %v1015 = vld [vmem:[%s1014] sm:$0xff]
    %v1016 = vld [vmem:[%s1014 + $0x8] sm:$0xff]
    %v1017 = vld [vmem:[%s1014 + $0x10] sm:$0xff]
    %v1018 = vld [vmem:[%s1014 + $0x18] sm:$0xff]
    %v1020 = vsel %vm533, %v996, 0
    %v1023 = vsel %vm533, %v1001, 0
    %v1026 = vsel %vm533, %v1006, 0
    %v1029 = vsel %vm533, %v1011, 0
    %1031 = vmatprep.subr.mxu0 0.0
    %1032 = vmatpush1.msra.mxu0 %v1015
    %1033 = vmatprep.subr.mxu0 0.0
    %1034 = vmatpush1.msra.mxu0 %v1016
    %1035 = vmatprep.subr.mxu0 0.0
    %1036 = vmatpush1.msra.mxu0 %v1017
    %1037 = vmatprep.subr.mxu0 0.0
    %1038 = vmatpush1.msra.mxu0 %v1018
    %1039 = vmatprep.subr.mxu0 0.0
    %1040 = vmatpush1.msra.mxu0 0.0
    %1041 = vmatprep.subr.mxu0 0.0
    %1042 = vmatpush1.msra.mxu0 0.0
    %1043 = vmatprep.subr.mxu0 0.0
    %1044 = vmatpush1.msra.mxu0 0.0
    %1045 = vmatprep.subr.mxu0 0.0
    %1046 = vmatpush1.msra.mxu0 0.0
    %1047 = vmatprep.subr.mxu0 0.0
    %1048 = vmatpush1.msra.mxu0 0.0
    %1049 = vmatprep.subr.mxu0 0.0
    %1050 = vmatpush1.msra.mxu0 0.0
    %1051 = vmatprep.subr.mxu0 0.0
    %1052 = vmatpush1.msra.mxu0 0.0
    %1053 = vmatprep.subr.mxu0 0.0
    %1054 = vmatpush1.msra.mxu0 0.0
    %1055 = vmatprep.subr.mxu0 0.0
    %1056 = vmatpush1.msra.mxu0 0.0
    %1057 = vmatprep.subr.mxu0 0.0
    %1058 = vmatpush1.msra.mxu0 0.0
    %1059 = vmatprep.subr.mxu0 0.0
    %1060 = vmatpush1.msra.mxu0 0.0
    %1061 = vmatprep.subr.mxu0 0.0
    %1062 = vmatpush1.msra.mxu0 0.0
    %1063 = vmatprep.subr.mxu0 0.0
    %1064 = vmatpush1.msra.mxu0 0.0
    %1065 = vmatprep.subr.mxu0 0.0
    %1066 = vmatpush1.msra.mxu0 0.0
    %1067 = vmatprep.subr.mxu0 0.0
    %1068 = vmatpush1.msra.mxu0 0.0
    %1069 = vmatprep.subr.mxu0 0.0
    %1070 = vmatpush1.msra.mxu0 0.0
    %1071 = vmatprep.subr.mxu0 0.0
    %1072 = vmatpush1.msra.mxu0 0.0
    %1073 = vmatprep.subr.mxu0 0.0
    %1074 = vmatpush1.msra.mxu0 0.0
    %1075 = vmatprep.subr.mxu0 0.0
    %1076 = vmatpush1.msra.mxu0 0.0
    %1077 = vmatprep.subr.mxu0 0.0
    %1078 = vmatpush1.msra.mxu0 0.0
    %1079 = vmatprep.subr.mxu0 0.0
    %1080 = vmatpush1.msra.mxu0 0.0
    %1081 = vmatprep.subr.mxu0 0.0
    %1082 = vmatpush1.msra.mxu0 0.0
    %1083 = vmatprep.subr.mxu0 0.0
    %1084 = vmatpush1.msra.mxu0 0.0
    %1085 = vmatprep.subr.mxu0 0.0
    %1086 = vmatpush1.msra.mxu0 0.0
    %1087 = vmatprep.subr.mxu0 0.0
    %1088 = vmatpush1.msra.mxu0 0.0
    %1089 = vmatprep.subr.mxu0 0.0
    %1090 = vmatpush1.msra.mxu0 0.0
    %1091 = vmatprep.subr.mxu0 0.0
    %1092 = vmatpush1.msra.mxu0 0.0
    %1093 = vmatprep.subr.mxu0 0.0
    %1094 = vmatpush1.msra.mxu0 0.0
    %1095 = vmatprep.mubr.f32.mxu0 0.0
    %1096 = vmatmul.mubr.f32.gmra.mrb[0].mxu0 %v1020
    %v1097 = vpop.f32.mrb[0].mxu0
    %v1098 = vadd.f32 0.0, %v1097
    %v1099 = vpop.f32.mrb[0].mxu0
    %1100 = vmatprep.mubr.f32.mxu0 0.0
    %1101 = vmatmul.mubr.f32.gmra.mrb[0].mxu0 %v1023
    %v1102 = vpop.f32.mrb[0].mxu0
    %v1103 = vadd.f32 0.0, %v1102
    %v1104 = vpop.f32.mrb[0].mxu0
    %1105 = vmatprep.mubr.f32.mxu0 0.0
    %1106 = vmatmul.mubr.f32.gmra.mrb[0].mxu0 %v1026
    %v1107 = vpop.f32.mrb[0].mxu0
    %v1108 = vadd.f32 0.0, %v1107
    %v1109 = vpop.f32.mrb[0].mxu0
    %1110 = vmatprep.mubr.f32.mxu0 0.0
    %1111 = vmatmul.mubr.f32.gmra.mrb[0].mxu0 %v1029
    %v1112 = vpop.f32.mrb[0].mxu0
    %v1113 = vadd.f32 0.0, %v1112
    %v1114 = vpop.f32.mrb[0].mxu0
    %1115 = vdwg.mxu0
    %v1116 = vadd.f32 %v920, %v1098
    %v1117 = vadd.f32 %v921, %v1103
    %v1118 = vadd.f32 %v922, %v1108
    %v1119 = vadd.f32 %v923, %v1113
    %s1120 = scalar_lea.vmem %s3, 128
    %v1121 = vld [vmem:[%s1120] sm:$0xff]
    %v1122 = vld [vmem:[%s1120 + $0x8] sm:$0xff]
    %v1123 = vld [vmem:[%s1120 + $0x10] sm:$0xff]
    %v1124 = vld [vmem:[%s1120 + $0x18] sm:$0xff]
    %1125 = vmatprep.subr.mxu0 0.0
    %1126 = vmatpush1.msra.mxu0 %v329
    %1127 = vmatprep.subr.mxu0 0.0
    %1128 = vmatpush1.msra.mxu0 %v330
    %1129 = vmatprep.subr.mxu0 0.0
    %1130 = vmatpush1.msra.mxu0 %v331
    %1131 = vmatprep.subr.mxu0 0.0
    %1132 = vmatpush1.msra.mxu0 %v332
    %1133 = vmatprep.subr.mxu0 0.0
    %1134 = vmatpush1.msra.mxu0 %v333
    %1135 = vmatprep.subr.mxu0 0.0
    %1136 = vmatpush1.msra.mxu0 %v334
    %1137 = vmatprep.subr.mxu0 0.0
    %1138 = vmatpush1.msra.mxu0 %v335
    %1139 = vmatprep.subr.mxu0 0.0
    %1140 = vmatpush1.msra.mxu0 %v336
    %1141 = vmatprep.subr.mxu0 0.0
    %1142 = vmatpush1.msra.mxu0 %v337
    %1143 = vmatprep.subr.mxu0 0.0
    %1144 = vmatpush1.msra.mxu0 %v338
    %1145 = vmatprep.subr.mxu0 0.0
    %1146 = vmatpush1.msra.mxu0 %v339
    %1147 = vmatprep.subr.mxu0 0.0
    %1148 = vmatpush1.msra.mxu0 %v340
    %1149 = vmatprep.subr.mxu0 0.0
    %1150 = vmatpush1.msra.mxu0 %v341
    %1151 = vmatprep.subr.mxu0 0.0
    %1152 = vmatpush1.msra.mxu0 %v342
    %1153 = vmatprep.subr.mxu0 0.0
    %1154 = vmatpush1.msra.mxu0 %v343
    %1155 = vmatprep.subr.mxu0 0.0
    %1156 = vmatpush1.msra.mxu0 %v344
    %1157 = vmatprep.subr.mxu0 0.0
    %1158 = vmatpush1.msra.mxu0 0.0
    %1159 = vmatprep.subr.mxu0 0.0
    %1160 = vmatpush1.msra.mxu0 0.0
    %1161 = vmatprep.subr.mxu0 0.0
    %1162 = vmatpush1.msra.mxu0 0.0
    %1163 = vmatprep.subr.mxu0 0.0
    %1164 = vmatpush1.msra.mxu0 0.0
    %1165 = vmatprep.subr.mxu0 0.0
    %1166 = vmatpush1.msra.mxu0 0.0
    %1167 = vmatprep.subr.mxu0 0.0
    %1168 = vmatpush1.msra.mxu0 0.0
    %1169 = vmatprep.subr.mxu0 0.0
    %1170 = vmatpush1.msra.mxu0 0.0
    %1171 = vmatprep.subr.mxu0 0.0
    %1172 = vmatpush1.msra.mxu0 0.0
    %1173 = vmatprep.subr.mxu0 0.0
    %1174 = vmatpush1.msra.mxu0 0.0
    %1175 = vmatprep.subr.mxu0 0.0
    %1176 = vmatpush1.msra.mxu0 0.0
    %1177 = vmatprep.subr.mxu0 0.0
    %1178 = vmatpush1.msra.mxu0 0.0
    %1179 = vmatprep.subr.mxu0 0.0
    %1180 = vmatpush1.msra.mxu0 0.0
    %1181 = vmatprep.subr.mxu0 0.0
    %1182 = vmatpush1.msra.mxu0 0.0
    %1183 = vmatprep.subr.mxu0 0.0
    %1184 = vmatpush1.msra.mxu0 0.0
    %1185 = vmatprep.subr.mxu0 0.0
    %1186 = vmatpush1.msra.mxu0 0.0
    %1187 = vmatprep.subr.mxu0 0.0
    %1188 = vmatpush1.msra.mxu0 0.0
    %1189 = vmatprep.mubr.f32.mxu0 0.0
    %1190 = vmatmul.mubr.f32.gmra.mrb[0].mxu0 %v1121
    %v1191 = vpop.f32.mrb[0].mxu0
    %v1192 = vadd.f32 0.0, %v1191
    %v1193 = vpop.f32.mrb[0].mxu0
    %1194 = vmatprep.mubr.f32.mxu0 0.0
    %1195 = vmatmul.mubr.f32.gmra.mrb[0].mxu0 %v1122
    %v1196 = vpop.f32.mrb[0].mxu0
    %v1197 = vadd.f32 0.0, %v1196
    %v1198 = vpop.f32.mrb[0].mxu0
    %1199 = vmatprep.mubr.f32.mxu0 0.0
    %1200 = vmatmul.mubr.f32.gmra.mrb[0].mxu0 %v1123
    %v1201 = vpop.f32.mrb[0].mxu0
    %v1202 = vadd.f32 0.0, %v1201
    %v1203 = vpop.f32.mrb[0].mxu0
    %1204 = vmatprep.mubr.f32.mxu0 0.0
    %1205 = vmatmul.mubr.f32.gmra.mrb[0].mxu0 %v1124
    %v1206 = vpop.f32.mrb[0].mxu0
    %v1207 = vadd.f32 0.0, %v1206
    %v1208 = vpop.f32.mrb[0].mxu0
    %1209 = vdwg.mxu0
    %s1210 = scalar_lea.vmem [#allocation2], 128
    %v1211 = vld [vmem:[%s1210] sm:$0xff]
    %v1212 = vld [vmem:[%s1210 + $0x8] sm:$0xff]
    %v1213 = vld [vmem:[%s1210 + $0x10] sm:$0xff]
    %v1214 = vld [vmem:[%s1210 + $0x18] sm:$0xff]
    %v1216 = vsel %vm533, %v1192, 0
    %v1219 = vsel %vm533, %v1197, 0
    %v1222 = vsel %vm533, %v1202, 0
    %v1225 = vsel %vm533, %v1207, 0
    %1227 = vmatprep.subr.mxu0 0.0
    %1228 = vmatpush1.msra.mxu0 %v1211
    %1229 = vmatprep.subr.mxu0 0.0
    %1230 = vmatpush1.msra.mxu0 %v1212
    %1231 = vmatprep.subr.mxu0 0.0
    %1232 = vmatpush1.msra.mxu0 %v1213
    %1233 = vmatprep.subr.mxu0 0.0
    %1234 = vmatpush1.msra.mxu0 %v1214
    %1235 = vmatprep.subr.mxu0 0.0
    %1236 = vmatpush1.msra.mxu0 0.0
    %1237 = vmatprep.subr.mxu0 0.0
    %1238 = vmatpush1.msra.mxu0 0.0
    %1239 = vmatprep.subr.mxu0 0.0
    %1240 = vmatpush1.msra.mxu0 0.0
    %1241 = vmatprep.subr.mxu0 0.0
    %1242 = vmatpush1.msra.mxu0 0.0
    %1243 = vmatprep.subr.mxu0 0.0
    %1244 = vmatpush1.msra.mxu0 0.0
    %1245 = vmatprep.subr.mxu0 0.0
    %1246 = vmatpush1.msra.mxu0 0.0
    %1247 = vmatprep.subr.mxu0 0.0
    %1248 = vmatpush1.msra.mxu0 0.0
    %1249 = vmatprep.subr.mxu0 0.0
    %1250 = vmatpush1.msra.mxu0 0.0
    %1251 = vmatprep.subr.mxu0 0.0
    %1252 = vmatpush1.msra.mxu0 0.0
    %1253 = vmatprep.subr.mxu0 0.0
    %1254 = vmatpush1.msra.mxu0 0.0
    %1255 = vmatprep.subr.mxu0 0.0
    %1256 = vmatpush1.msra.mxu0 0.0
    %1257 = vmatprep.subr.mxu0 0.0
    %1258 = vmatpush1.msra.mxu0 0.0
    %1259 = vmatprep.subr.mxu0 0.0
    %1260 = vmatpush1.msra.mxu0 0.0
    %1261 = vmatprep.subr.mxu0 0.0
    %1262 = vmatpush1.msra.mxu0 0.0
    %1263 = vmatprep.subr.mxu0 0.0
    %1264 = vmatpush1.msra.mxu0 0.0
    %1265 = vmatprep.subr.mxu0 0.0
    %1266 = vmatpush1.msra.mxu0 0.0
    %1267 = vmatprep.subr.mxu0 0.0
    %1268 = vmatpush1.msra.mxu0 0.0
    %1269 = vmatprep.subr.mxu0 0.0
    %1270 = vmatpush1.msra.mxu0 0.0
    %1271 = vmatprep.subr.mxu0 0.0
    %1272 = vmatpush1.msra.mxu0 0.0
    %1273 = vmatprep.subr.mxu0 0.0
    %1274 = vmatpush1.msra.mxu0 0.0
    %1275 = vmatprep.subr.mxu0 0.0
    %1276 = vmatpush1.msra.mxu0 0.0
    %1277 = vmatprep.subr.mxu0 0.0
    %1278 = vmatpush1.msra.mxu0 0.0
    %1279 = vmatprep.subr.mxu0 0.0
    %1280 = vmatpush1.msra.mxu0 0.0
    %1281 = vmatprep.subr.mxu0 0.0
    %1282 = vmatpush1.msra.mxu0 0.0
    %1283 = vmatprep.subr.mxu0 0.0
    %1284 = vmatpush1.msra.mxu0 0.0
    %1285 = vmatprep.subr.mxu0 0.0
    %1286 = vmatpush1.msra.mxu0 0.0
    %1287 = vmatprep.subr.mxu0 0.0
    %1288 = vmatpush1.msra.mxu0 0.0
    %1289 = vmatprep.subr.mxu0 0.0
    %1290 = vmatpush1.msra.mxu0 0.0
    %1291 = vmatprep.mubr.f32.mxu0 0.0
    %1292 = vmatmul.mubr.f32.gmra.mrb[0].mxu0 %v1216
    %v1293 = vpop.f32.mrb[0].mxu0
    %v1294 = vadd.f32 0.0, %v1293
    %v1295 = vpop.f32.mrb[0].mxu0
    %1296 = vmatprep.mubr.f32.mxu0 0.0
    %1297 = vmatmul.mubr.f32.gmra.mrb[0].mxu0 %v1219
    %v1298 = vpop.f32.mrb[0].mxu0
    %v1299 = vadd.f32 0.0, %v1298
    %v1300 = vpop.f32.mrb[0].mxu0
    %1301 = vmatprep.mubr.f32.mxu0 0.0
    %1302 = vmatmul.mubr.f32.gmra.mrb[0].mxu0 %v1222
    %v1303 = vpop.f32.mrb[0].mxu0
    %v1304 = vadd.f32 0.0, %v1303
    %v1305 = vpop.f32.mrb[0].mxu0
    %1306 = vmatprep.mubr.f32.mxu0 0.0
    %1307 = vmatmul.mubr.f32.gmra.mrb[0].mxu0 %v1225
    %v1308 = vpop.f32.mrb[0].mxu0
    %v1309 = vadd.f32 0.0, %v1308
    %v1310 = vpop.f32.mrb[0].mxu0
    %1311 = vdwg.mxu0
    %v1312 = vadd.f32 %v1116, %v1294
    %v1313 = vadd.f32 %v1117, %v1299
    %v1314 = vadd.f32 %v1118, %v1304
    %v1315 = vadd.f32 %v1119, %v1309
    %s1316 = scalar_lea.vmem %s3, 160
    %v1317 = vld [vmem:[%s1316] sm:$0xff]
    %v1318 = vld [vmem:[%s1316 + $0x8] sm:$0xff]
    %v1319 = vld [vmem:[%s1316 + $0x10] sm:$0xff]
    %v1320 = vld [vmem:[%s1316 + $0x18] sm:$0xff]
    %1321 = vmatprep.subr.mxu0 0.0
    %1322 = vmatpush1.msra.mxu0 %v329
    %1323 = vmatprep.subr.mxu0 0.0
    %1324 = vmatpush1.msra.mxu0 %v330
    %1325 = vmatprep.subr.mxu0 0.0
    %1326 = vmatpush1.msra.mxu0 %v331
    %1327 = vmatprep.subr.mxu0 0.0
    %1328 = vmatpush1.msra.mxu0 %v332
    %1329 = vmatprep.subr.mxu0 0.0
    %1330 = vmatpush1.msra.mxu0 %v333
    %1331 = vmatprep.subr.mxu0 0.0
    %1332 = vmatpush1.msra.mxu0 %v334
    %1333 = vmatprep.subr.mxu0 0.0
    %1334 = vmatpush1.msra.mxu0 %v335
    %1335 = vmatprep.subr.mxu0 0.0
    %1336 = vmatpush1.msra.mxu0 %v336
    %1337 = vmatprep.subr.mxu0 0.0
    %1338 = vmatpush1.msra.mxu0 %v337
    %1339 = vmatprep.subr.mxu0 0.0
    %1340 = vmatpush1.msra.mxu0 %v338
    %1341 = vmatprep.subr.mxu0 0.0
    %1342 = vmatpush1.msra.mxu0 %v339
    %1343 = vmatprep.subr.mxu0 0.0
    %1344 = vmatpush1.msra.mxu0 %v340
    %1345 = vmatprep.subr.mxu0 0.0
    %1346 = vmatpush1.msra.mxu0 %v341
    %1347 = vmatprep.subr.mxu0 0.0
    %1348 = vmatpush1.msra.mxu0 %v342
    %1349 = vmatprep.subr.mxu0 0.0
    %1350 = vmatpush1.msra.mxu0 %v343
    %1351 = vmatprep.subr.mxu0 0.0
    %1352 = vmatpush1.msra.mxu0 %v344
    %1353 = vmatprep.subr.mxu0 0.0
    %1354 = vmatpush1.msra.mxu0 0.0
    %1355 = vmatprep.subr.mxu0 0.0
    %1356 = vmatpush1.msra.mxu0 0.0
    %1357 = vmatprep.subr.mxu0 0.0
    %1358 = vmatpush1.msra.mxu0 0.0
    %1359 = vmatprep.subr.mxu0 0.0
    %1360 = vmatpush1.msra.mxu0 0.0
    %1361 = vmatprep.subr.mxu0 0.0
    %1362 = vmatpush1.msra.mxu0 0.0
    %1363 = vmatprep.subr.mxu0 0.0
    %1364 = vmatpush1.msra.mxu0 0.0
    %1365 = vmatprep.subr.mxu0 0.0
    %1366 = vmatpush1.msra.mxu0 0.0
    %1367 = vmatprep.subr.mxu0 0.0
    %1368 = vmatpush1.msra.mxu0 0.0
    %1369 = vmatprep.subr.mxu0 0.0
    %1370 = vmatpush1.msra.mxu0 0.0
    %1371 = vmatprep.subr.mxu0 0.0
    %1372 = vmatpush1.msra.mxu0 0.0
    %1373 = vmatprep.subr.mxu0 0.0
    %1374 = vmatpush1.msra.mxu0 0.0
    %1375 = vmatprep.subr.mxu0 0.0
    %1376 = vmatpush1.msra.mxu0 0.0
    %1377 = vmatprep.subr.mxu0 0.0
    %1378 = vmatpush1.msra.mxu0 0.0
    %1379 = vmatprep.subr.mxu0 0.0
    %1380 = vmatpush1.msra.mxu0 0.0
    %1381 = vmatprep.subr.mxu0 0.0
    %1382 = vmatpush1.msra.mxu0 0.0
    %1383 = vmatprep.subr.mxu0 0.0
    %1384 = vmatpush1.msra.mxu0 0.0
    %1385 = vmatprep.mubr.f32.mxu0 0.0
    %1386 = vmatmul.mubr.f32.gmra.mrb[0].mxu0 %v1317
    %v1387 = vpop.f32.mrb[0].mxu0
    %v1388 = vadd.f32 0.0, %v1387
    %v1389 = vpop.f32.mrb[0].mxu0
    %1390 = vmatprep.mubr.f32.mxu0 0.0
    %1391 = vmatmul.mubr.f32.gmra.mrb[0].mxu0 %v1318
    %v1392 = vpop.f32.mrb[0].mxu0
    %v1393 = vadd.f32 0.0, %v1392
    %v1394 = vpop.f32.mrb[0].mxu0
    %1395 = vmatprep.mubr.f32.mxu0 0.0
    %1396 = vmatmul.mubr.f32.gmra.mrb[0].mxu0 %v1319
    %v1397 = vpop.f32.mrb[0].mxu0
    %v1398 = vadd.f32 0.0, %v1397
    %v1399 = vpop.f32.mrb[0].mxu0
    %1400 = vmatprep.mubr.f32.mxu0 0.0
    %1401 = vmatmul.mubr.f32.gmra.mrb[0].mxu0 %v1320
    %v1402 = vpop.f32.mrb[0].mxu0
    %v1403 = vadd.f32 0.0, %v1402
    %v1404 = vpop.f32.mrb[0].mxu0
    %1405 = vdwg.mxu0
    %s1406 = scalar_lea.vmem [#allocation2], 160
    %v1407 = vld [vmem:[%s1406] sm:$0xff]
    %v1408 = vld [vmem:[%s1406 + $0x8] sm:$0xff]
    %v1409 = vld [vmem:[%s1406 + $0x10] sm:$0xff]
    %v1410 = vld [vmem:[%s1406 + $0x18] sm:$0xff]
    %v1412 = vsel %vm533, %v1388, 0
    %v1415 = vsel %vm533, %v1393, 0
    %v1418 = vsel %vm533, %v1398, 0
    %v1421 = vsel %vm533, %v1403, 0
    %1423 = vmatprep.subr.mxu0 0.0
    %1424 = vmatpush1.msra.mxu0 %v1407
    %1425 = vmatprep.subr.mxu0 0.0
    %1426 = vmatpush1.msra.mxu0 %v1408
    %1427 = vmatprep.subr.mxu0 0.0
    %1428 = vmatpush1.msra.mxu0 %v1409
    %1429 = vmatprep.subr.mxu0 0.0
    %1430 = vmatpush1.msra.mxu0 %v1410
    %1431 = vmatprep.subr.mxu0 0.0
    %1432 = vmatpush1.msra.mxu0 0.0
    %1433 = vmatprep.subr.mxu0 0.0
    %1434 = vmatpush1.msra.mxu0 0.0
    %1435 = vmatprep.subr.mxu0 0.0
    %1436 = vmatpush1.msra.mxu0 0.0
    %1437 = vmatprep.subr.mxu0 0.0
    %1438 = vmatpush1.msra.mxu0 0.0
    %1439 = vmatprep.subr.mxu0 0.0
    %1440 = vmatpush1.msra.mxu0 0.0
    %1441 = vmatprep.subr.mxu0 0.0
    %1442 = vmatpush1.msra.mxu0 0.0
    %1443 = vmatprep.subr.mxu0 0.0
    %1444 = vmatpush1.msra.mxu0 0.0
    %1445 = vmatprep.subr.mxu0 0.0
    %1446 = vmatpush1.msra.mxu0 0.0
    %1447 = vmatprep.subr.mxu0 0.0
    %1448 = vmatpush1.msra.mxu0 0.0
    %1449 = vmatprep.subr.mxu0 0.0
    %1450 = vmatpush1.msra.mxu0 0.0
    %1451 = vmatprep.subr.mxu0 0.0
    %1452 = vmatpush1.msra.mxu0 0.0
    %1453 = vmatprep.subr.mxu0 0.0
    %1454 = vmatpush1.msra.mxu0 0.0
    %1455 = vmatprep.subr.mxu0 0.0
    %1456 = vmatpush1.msra.mxu0 0.0
    %1457 = vmatprep.subr.mxu0 0.0
    %1458 = vmatpush1.msra.mxu0 0.0
    %1459 = vmatprep.subr.mxu0 0.0
    %1460 = vmatpush1.msra.mxu0 0.0
    %1461 = vmatprep.subr.mxu0 0.0
    %1462 = vmatpush1.msra.mxu0 0.0
    %1463 = vmatprep.subr.mxu0 0.0
    %1464 = vmatpush1.msra.mxu0 0.0
    %1465 = vmatprep.subr.mxu0 0.0
    %1466 = vmatpush1.msra.mxu0 0.0
    %1467 = vmatprep.subr.mxu0 0.0
    %1468 = vmatpush1.msra.mxu0 0.0
    %1469 = vmatprep.subr.mxu0 0.0
    %1470 = vmatpush1.msra.mxu0 0.0
    %1471 = vmatprep.subr.mxu0 0.0
    %1472 = vmatpush1.msra.mxu0 0.0
    %1473 = vmatprep.subr.mxu0 0.0
    %1474 = vmatpush1.msra.mxu0 0.0
    %1475 = vmatprep.subr.mxu0 0.0
    %1476 = vmatpush1.msra.mxu0 0.0
    %1477 = vmatprep.subr.mxu0 0.0
    %1478 = vmatpush1.msra.mxu0 0.0
    %1479 = vmatprep.subr.mxu0 0.0
    %1480 = vmatpush1.msra.mxu0 0.0
    %1481 = vmatprep.subr.mxu0 0.0
    %1482 = vmatpush1.msra.mxu0 0.0
    %1483 = vmatprep.subr.mxu0 0.0
    %1484 = vmatpush1.msra.mxu0 0.0
    %1485 = vmatprep.subr.mxu0 0.0
    %1486 = vmatpush1.msra.mxu0 0.0
    %1487 = vmatprep.mubr.f32.mxu0 0.0
    %1488 = vmatmul.mubr.f32.gmra.mrb[0].mxu0 %v1412
    %v1489 = vpop.f32.mrb[0].mxu0
    %v1490 = vadd.f32 0.0, %v1489
    %v1491 = vpop.f32.mrb[0].mxu0
    %1492 = vmatprep.mubr.f32.mxu0 0.0
    %1493 = vmatmul.mubr.f32.gmra.mrb[0].mxu0 %v1415
    %v1494 = vpop.f32.mrb[0].mxu0
    %v1495 = vadd.f32 0.0, %v1494
    %v1496 = vpop.f32.mrb[0].mxu0
    %1497 = vmatprep.mubr.f32.mxu0 0.0
    %1498 = vmatmul.mubr.f32.gmra.mrb[0].mxu0 %v1418
    %v1499 = vpop.f32.mrb[0].mxu0
    %v1500 = vadd.f32 0.0, %v1499
    %v1501 = vpop.f32.mrb[0].mxu0
    %1502 = vmatprep.mubr.f32.mxu0 0.0
    %1503 = vmatmul.mubr.f32.gmra.mrb[0].mxu0 %v1421
    %v1504 = vpop.f32.mrb[0].mxu0
    %v1505 = vadd.f32 0.0, %v1504
    %v1506 = vpop.f32.mrb[0].mxu0
    %1507 = vdwg.mxu0
    %v1508 = vadd.f32 %v1312, %v1490
    %v1509 = vadd.f32 %v1313, %v1495
    %v1510 = vadd.f32 %v1314, %v1500
    %v1511 = vadd.f32 %v1315, %v1505
    %s1512 = scalar_lea.vmem %s3, 192
    %v1513 = vld [vmem:[%s1512] sm:$0xff]
    %v1514 = vld [vmem:[%s1512 + $0x8] sm:$0xff]
    %v1515 = vld [vmem:[%s1512 + $0x10] sm:$0xff]
    %v1516 = vld [vmem:[%s1512 + $0x18] sm:$0xff]
    %1517 = vmatprep.subr.mxu0 0.0
    %1518 = vmatpush1.msra.mxu0 %v329
    %1519 = vmatprep.subr.mxu0 0.0
    %1520 = vmatpush1.msra.mxu0 %v330
    %1521 = vmatprep.subr.mxu0 0.0
    %1522 = vmatpush1.msra.mxu0 %v331
    %1523 = vmatprep.subr.mxu0 0.0
    %1524 = vmatpush1.msra.mxu0 %v332
    %1525 = vmatprep.subr.mxu0 0.0
    %1526 = vmatpush1.msra.mxu0 %v333
    %1527 = vmatprep.subr.mxu0 0.0
    %1528 = vmatpush1.msra.mxu0 %v334
    %1529 = vmatprep.subr.mxu0 0.0
    %1530 = vmatpush1.msra.mxu0 %v335
    %1531 = vmatprep.subr.mxu0 0.0
    %1532 = vmatpush1.msra.mxu0 %v336
    %1533 = vmatprep.subr.mxu0 0.0
    %1534 = vmatpush1.msra.mxu0 %v337
    %1535 = vmatprep.subr.mxu0 0.0
    %1536 = vmatpush1.msra.mxu0 %v338
    %1537 = vmatprep.subr.mxu0 0.0
    %1538 = vmatpush1.msra.mxu0 %v339
    %1539 = vmatprep.subr.mxu0 0.0
    %1540 = vmatpush1.msra.mxu0 %v340
    %1541 = vmatprep.subr.mxu0 0.0
    %1542 = vmatpush1.msra.mxu0 %v341
    %1543 = vmatprep.subr.mxu0 0.0
    %1544 = vmatpush1.msra.mxu0 %v342
    %1545 = vmatprep.subr.mxu0 0.0
    %1546 = vmatpush1.msra.mxu0 %v343
    %1547 = vmatprep.subr.mxu0 0.0
    %1548 = vmatpush1.msra.mxu0 %v344
    %1549 = vmatprep.subr.mxu0 0.0
    %1550 = vmatpush1.msra.mxu0 0.0
    %1551 = vmatprep.subr.mxu0 0.0
    %1552 = vmatpush1.msra.mxu0 0.0
    %1553 = vmatprep.subr.mxu0 0.0
    %1554 = vmatpush1.msra.mxu0 0.0
    %1555 = vmatprep.subr.mxu0 0.0
    %1556 = vmatpush1.msra.mxu0 0.0
    %1557 = vmatprep.subr.mxu0 0.0
    %1558 = vmatpush1.msra.mxu0 0.0
    %1559 = vmatprep.subr.mxu0 0.0
    %1560 = vmatpush1.msra.mxu0 0.0
    %1561 = vmatprep.subr.mxu0 0.0
    %1562 = vmatpush1.msra.mxu0 0.0
    %1563 = vmatprep.subr.mxu0 0.0
    %1564 = vmatpush1.msra.mxu0 0.0
    %1565 = vmatprep.subr.mxu0 0.0
    %1566 = vmatpush1.msra.mxu0 0.0
    %1567 = vmatprep.subr.mxu0 0.0
    %1568 = vmatpush1.msra.mxu0 0.0
    %1569 = vmatprep.subr.mxu0 0.0
    %1570 = vmatpush1.msra.mxu0 0.0
    %1571 = vmatprep.subr.mxu0 0.0
    %1572 = vmatpush1.msra.mxu0 0.0
    %1573 = vmatprep.subr.mxu0 0.0
    %1574 = vmatpush1.msra.mxu0 0.0
    %1575 = vmatprep.subr.mxu0 0.0
    %1576 = vmatpush1.msra.mxu0 0.0
    %1577 = vmatprep.subr.mxu0 0.0
    %1578 = vmatpush1.msra.mxu0 0.0
    %1579 = vmatprep.subr.mxu0 0.0
    %1580 = vmatpush1.msra.mxu0 0.0
    %1581 = vmatprep.mubr.f32.mxu0 0.0
    %1582 = vmatmul.mubr.f32.gmra.mrb[0].mxu0 %v1513
    %v1583 = vpop.f32.mrb[0].mxu0
    %v1584 = vadd.f32 0.0, %v1583
    %v1585 = vpop.f32.mrb[0].mxu0
    %1586 = vmatprep.mubr.f32.mxu0 0.0
    %1587 = vmatmul.mubr.f32.gmra.mrb[0].mxu0 %v1514
    %v1588 = vpop.f32.mrb[0].mxu0
    %v1589 = vadd.f32 0.0, %v1588
    %v1590 = vpop.f32.mrb[0].mxu0
    %1591 = vmatprep.mubr.f32.mxu0 0.0
    %1592 = vmatmul.mubr.f32.gmra.mrb[0].mxu0 %v1515
    %v1593 = vpop.f32.mrb[0].mxu0
    %v1594 = vadd.f32 0.0, %v1593
    %v1595 = vpop.f32.mrb[0].mxu0
    %1596 = vmatprep.mubr.f32.mxu0 0.0
    %1597 = vmatmul.mubr.f32.gmra.mrb[0].mxu0 %v1516
    %v1598 = vpop.f32.mrb[0].mxu0
    %v1599 = vadd.f32 0.0, %v1598
    %v1600 = vpop.f32.mrb[0].mxu0
    %1601 = vdwg.mxu0
    %s1602 = scalar_lea.vmem [#allocation2], 192
    %v1603 = vld [vmem:[%s1602] sm:$0xff]
    %v1604 = vld [vmem:[%s1602 + $0x8] sm:$0xff]
    %v1605 = vld [vmem:[%s1602 + $0x10] sm:$0xff]
    %v1606 = vld [vmem:[%s1602 + $0x18] sm:$0xff]
    %v1608 = vsel %vm533, %v1584, 0
    %v1611 = vsel %vm533, %v1589, 0
    %v1614 = vsel %vm533, %v1594, 0
    %v1617 = vsel %vm533, %v1599, 0
    %1619 = vmatprep.subr.mxu0 0.0
    %1620 = vmatpush1.msra.mxu0 %v1603
    %1621 = vmatprep.subr.mxu0 0.0
    %1622 = vmatpush1.msra.mxu0 %v1604
    %1623 = vmatprep.subr.mxu0 0.0
    %1624 = vmatpush1.msra.mxu0 %v1605
    %1625 = vmatprep.subr.mxu0 0.0
    %1626 = vmatpush1.msra.mxu0 %v1606
    %1627 = vmatprep.subr.mxu0 0.0
    %1628 = vmatpush1.msra.mxu0 0.0
    %1629 = vmatprep.subr.mxu0 0.0
    %1630 = vmatpush1.msra.mxu0 0.0
    %1631 = vmatprep.subr.mxu0 0.0
    %1632 = vmatpush1.msra.mxu0 0.0
    %1633 = vmatprep.subr.mxu0 0.0
    %1634 = vmatpush1.msra.mxu0 0.0
    %1635 = vmatprep.subr.mxu0 0.0
    %1636 = vmatpush1.msra.mxu0 0.0
    %1637 = vmatprep.subr.mxu0 0.0
    %1638 = vmatpush1.msra.mxu0 0.0
    %1639 = vmatprep.subr.mxu0 0.0
    %1640 = vmatpush1.msra.mxu0 0.0
    %1641 = vmatprep.subr.mxu0 0.0
    %1642 = vmatpush1.msra.mxu0 0.0
    %1643 = vmatprep.subr.mxu0 0.0
    %1644 = vmatpush1.msra.mxu0 0.0
    %1645 = vmatprep.subr.mxu0 0.0
    %1646 = vmatpush1.msra.mxu0 0.0
    %1647 = vmatprep.subr.mxu0 0.0
    %1648 = vmatpush1.msra.mxu0 0.0
    %1649 = vmatprep.subr.mxu0 0.0
    %1650 = vmatpush1.msra.mxu0 0.0
    %1651 = vmatprep.subr.mxu0 0.0
    %1652 = vmatpush1.msra.mxu0 0.0
    %1653 = vmatprep.subr.mxu0 0.0
    %1654 = vmatpush1.msra.mxu0 0.0
    %1655 = vmatprep.subr.mxu0 0.0
    %1656 = vmatpush1.msra.mxu0 0.0
    %1657 = vmatprep.subr.mxu0 0.0
    %1658 = vmatpush1.msra.mxu0 0.0
    %1659 = vmatprep.subr.mxu0 0.0
    %1660 = vmatpush1.msra.mxu0 0.0
    %1661 = vmatprep.subr.mxu0 0.0
    %1662 = vmatpush1.msra.mxu0 0.0
    %1663 = vmatprep.subr.mxu0 0.0
    %1664 = vmatpush1.msra.mxu0 0.0
    %1665 = vmatprep.subr.mxu0 0.0
    %1666 = vmatpush1.msra.mxu0 0.0
    %1667 = vmatprep.subr.mxu0 0.0
    %1668 = vmatpush1.msra.mxu0 0.0
    %1669 = vmatprep.subr.mxu0 0.0
    %1670 = vmatpush1.msra.mxu0 0.0
    %1671 = vmatprep.subr.mxu0 0.0
    %1672 = vmatpush1.msra.mxu0 0.0
    %1673 = vmatprep.subr.mxu0 0.0
    %1674 = vmatpush1.msra.mxu0 0.0
    %1675 = vmatprep.subr.mxu0 0.0
    %1676 = vmatpush1.msra.mxu0 0.0
    %1677 = vmatprep.subr.mxu0 0.0
    %1678 = vmatpush1.msra.mxu0 0.0
    %1679 = vmatprep.subr.mxu0 0.0
    %1680 = vmatpush1.msra.mxu0 0.0
    %1681 = vmatprep.subr.mxu0 0.0
    %1682 = vmatpush1.msra.mxu0 0.0
    %1683 = vmatprep.mubr.f32.mxu0 0.0
    %1684 = vmatmul.mubr.f32.gmra.mrb[0].mxu0 %v1608
    %v1685 = vpop.f32.mrb[0].mxu0
    %v1686 = vadd.f32 0.0, %v1685
    %v1687 = vpop.f32.mrb[0].mxu0
    %1688 = vmatprep.mubr.f32.mxu0 0.0
    %1689 = vmatmul.mubr.f32.gmra.mrb[0].mxu0 %v1611
    %v1690 = vpop.f32.mrb[0].mxu0
    %v1691 = vadd.f32 0.0, %v1690
    %v1692 = vpop.f32.mrb[0].mxu0
    %1693 = vmatprep.mubr.f32.mxu0 0.0
    %1694 = vmatmul.mubr.f32.gmra.mrb[0].mxu0 %v1614
    %v1695 = vpop.f32.mrb[0].mxu0
    %v1696 = vadd.f32 0.0, %v1695
    %v1697 = vpop.f32.mrb[0].mxu0
    %1698 = vmatprep.mubr.f32.mxu0 0.0
    %1699 = vmatmul.mubr.f32.gmra.mrb[0].mxu0 %v1617
    %v1700 = vpop.f32.mrb[0].mxu0
    %v1701 = vadd.f32 0.0, %v1700
    %v1702 = vpop.f32.mrb[0].mxu0
    %1703 = vdwg.mxu0
    %v1704 = vadd.f32 %v1508, %v1686
    %v1705 = vadd.f32 %v1509, %v1691
    %v1706 = vadd.f32 %v1510, %v1696
    %v1707 = vadd.f32 %v1511, %v1701
    %s1708 = scalar_lea.vmem %s3, 224
    %v1709 = vld [vmem:[%s1708] sm:$0xff]
    %v1710 = vld [vmem:[%s1708 + $0x8] sm:$0xff]
    %v1711 = vld [vmem:[%s1708 + $0x10] sm:$0xff]
    %v1712 = vld [vmem:[%s1708 + $0x18] sm:$0xff]
    %1713 = vmatprep.subr.mxu0 0.0
    %1714 = vmatpush1.msra.mxu0 %v329
    %1715 = vmatprep.subr.mxu0 0.0
    %1716 = vmatpush1.msra.mxu0 %v330
    %1717 = vmatprep.subr.mxu0 0.0
    %1718 = vmatpush1.msra.mxu0 %v331
    %1719 = vmatprep.subr.mxu0 0.0
    %1720 = vmatpush1.msra.mxu0 %v332
    %1721 = vmatprep.subr.mxu0 0.0
    %1722 = vmatpush1.msra.mxu0 %v333
    %1723 = vmatprep.subr.mxu0 0.0
    %1724 = vmatpush1.msra.mxu0 %v334
    %1725 = vmatprep.subr.mxu0 0.0
    %1726 = vmatpush1.msra.mxu0 %v335
    %1727 = vmatprep.subr.mxu0 0.0
    %1728 = vmatpush1.msra.mxu0 %v336
    %1729 = vmatprep.subr.mxu0 0.0
    %1730 = vmatpush1.msra.mxu0 %v337
    %1731 = vmatprep.subr.mxu0 0.0
    %1732 = vmatpush1.msra.mxu0 %v338
    %1733 = vmatprep.subr.mxu0 0.0
    %1734 = vmatpush1.msra.mxu0 %v339
    %1735 = vmatprep.subr.mxu0 0.0
    %1736 = vmatpush1.msra.mxu0 %v340
    %1737 = vmatprep.subr.mxu0 0.0
    %1738 = vmatpush1.msra.mxu0 %v341
    %1739 = vmatprep.subr.mxu0 0.0
    %1740 = vmatpush1.msra.mxu0 %v342
    %1741 = vmatprep.subr.mxu0 0.0
    %1742 = vmatpush1.msra.mxu0 %v343
    %1743 = vmatprep.subr.mxu0 0.0
    %1744 = vmatpush1.msra.mxu0 %v344
    %1745 = vmatprep.subr.mxu0 0.0
    %1746 = vmatpush1.msra.mxu0 0.0
    %1747 = vmatprep.subr.mxu0 0.0
    %1748 = vmatpush1.msra.mxu0 0.0
    %1749 = vmatprep.subr.mxu0 0.0
    %1750 = vmatpush1.msra.mxu0 0.0
    %1751 = vmatprep.subr.mxu0 0.0
    %1752 = vmatpush1.msra.mxu0 0.0
    %1753 = vmatprep.subr.mxu0 0.0
    %1754 = vmatpush1.msra.mxu0 0.0
    %1755 = vmatprep.subr.mxu0 0.0
    %1756 = vmatpush1.msra.mxu0 0.0
    %1757 = vmatprep.subr.mxu0 0.0
    %1758 = vmatpush1.msra.mxu0 0.0
    %1759 = vmatprep.subr.mxu0 0.0
    %1760 = vmatpush1.msra.mxu0 0.0
    %1761 = vmatprep.subr.mxu0 0.0
    %1762 = vmatpush1.msra.mxu0 0.0
    %1763 = vmatprep.subr.mxu0 0.0
    %1764 = vmatpush1.msra.mxu0 0.0
    %1765 = vmatprep.subr.mxu0 0.0
    %1766 = vmatpush1.msra.mxu0 0.0
    %1767 = vmatprep.subr.mxu0 0.0
    %1768 = vmatpush1.msra.mxu0 0.0
    %1769 = vmatprep.subr.mxu0 0.0
    %1770 = vmatpush1.msra.mxu0 0.0
    %1771 = vmatprep.subr.mxu0 0.0
    %1772 = vmatpush1.msra.mxu0 0.0
    %1773 = vmatprep.subr.mxu0 0.0
    %1774 = vmatpush1.msra.mxu0 0.0
    %1775 = vmatprep.subr.mxu0 0.0
    %1776 = vmatpush1.msra.mxu0 0.0
    %1777 = vmatprep.mubr.f32.mxu0 0.0
    %1778 = vmatmul.mubr.f32.gmra.mrb[0].mxu0 %v1709
    %v1779 = vpop.f32.mrb[0].mxu0
    %v1780 = vadd.f32 0.0, %v1779
    %v1781 = vpop.f32.mrb[0].mxu0
    %1782 = vmatprep.mubr.f32.mxu0 0.0
    %1783 = vmatmul.mubr.f32.gmra.mrb[0].mxu0 %v1710
    %v1784 = vpop.f32.mrb[0].mxu0
    %v1785 = vadd.f32 0.0, %v1784
    %v1786 = vpop.f32.mrb[0].mxu0
    %1787 = vmatprep.mubr.f32.mxu0 0.0
    %1788 = vmatmul.mubr.f32.gmra.mrb[0].mxu0 %v1711
    %v1789 = vpop.f32.mrb[0].mxu0
    %v1790 = vadd.f32 0.0, %v1789
    %v1791 = vpop.f32.mrb[0].mxu0
    %1792 = vmatprep.mubr.f32.mxu0 0.0
    %1793 = vmatmul.mubr.f32.gmra.mrb[0].mxu0 %v1712
    %v1794 = vpop.f32.mrb[0].mxu0
    %v1795 = vadd.f32 0.0, %v1794
    %v1796 = vpop.f32.mrb[0].mxu0
    %1797 = vdwg.mxu0
    %s1798 = scalar_lea.vmem [#allocation2], 224
    %v1799 = vld [vmem:[%s1798] sm:$0xff]
    %v1800 = vld [vmem:[%s1798 + $0x8] sm:$0xff]
    %v1801 = vld [vmem:[%s1798 + $0x10] sm:$0xff]
    %v1802 = vld [vmem:[%s1798 + $0x18] sm:$0xff]
    %v1804 = vsel %vm533, %v1780, 0
    %v1807 = vsel %vm533, %v1785, 0
    %v1810 = vsel %vm533, %v1790, 0
    %v1813 = vsel %vm533, %v1795, 0
    %1815 = vmatprep.subr.mxu0 0.0
    %1816 = vmatpush1.msra.mxu0 %v1799
    %1817 = vmatprep.subr.mxu0 0.0
    %1818 = vmatpush1.msra.mxu0 %v1800
    %1819 = vmatprep.subr.mxu0 0.0
    %1820 = vmatpush1.msra.mxu0 %v1801
    %1821 = vmatprep.subr.mxu0 0.0
    %1822 = vmatpush1.msra.mxu0 %v1802
    %1823 = vmatprep.subr.mxu0 0.0
    %1824 = vmatpush1.msra.mxu0 0.0
    %1825 = vmatprep.subr.mxu0 0.0
    %1826 = vmatpush1.msra.mxu0 0.0
    %1827 = vmatprep.subr.mxu0 0.0
    %1828 = vmatpush1.msra.mxu0 0.0
    %1829 = vmatprep.subr.mxu0 0.0
    %1830 = vmatpush1.msra.mxu0 0.0
    %1831 = vmatprep.subr.mxu0 0.0
    %1832 = vmatpush1.msra.mxu0 0.0
    %1833 = vmatprep.subr.mxu0 0.0
    %1834 = vmatpush1.msra.mxu0 0.0
    %1835 = vmatprep.subr.mxu0 0.0
    %1836 = vmatpush1.msra.mxu0 0.0
    %1837 = vmatprep.subr.mxu0 0.0
    %1838 = vmatpush1.msra.mxu0 0.0
    %1839 = vmatprep.subr.mxu0 0.0
    %1840 = vmatpush1.msra.mxu0 0.0
    %1841 = vmatprep.subr.mxu0 0.0
    %1842 = vmatpush1.msra.mxu0 0.0
    %1843 = vmatprep.subr.mxu0 0.0
    %1844 = vmatpush1.msra.mxu0 0.0
    %1845 = vmatprep.subr.mxu0 0.0
    %1846 = vmatpush1.msra.mxu0 0.0
    %1847 = vmatprep.subr.mxu0 0.0
    %1848 = vmatpush1.msra.mxu0 0.0
    %1849 = vmatprep.subr.mxu0 0.0
    %1850 = vmatpush1.msra.mxu0 0.0
    %1851 = vmatprep.subr.mxu0 0.0
    %1852 = vmatpush1.msra.mxu0 0.0
    %1853 = vmatprep.subr.mxu0 0.0
    %1854 = vmatpush1.msra.mxu0 0.0
    %1855 = vmatprep.subr.mxu0 0.0
    %1856 = vmatpush1.msra.mxu0 0.0
    %1857 = vmatprep.subr.mxu0 0.0
    %1858 = vmatpush1.msra.mxu0 0.0
    %1859 = vmatprep.subr.mxu0 0.0
    %1860 = vmatpush1.msra.mxu0 0.0
    %1861 = vmatprep.subr.mxu0 0.0
    %1862 = vmatpush1.msra.mxu0 0.0
    %1863 = vmatprep.subr.mxu0 0.0
    %1864 = vmatpush1.msra.mxu0 0.0
    %1865 = vmatprep.subr.mxu0 0.0
    %1866 = vmatpush1.msra.mxu0 0.0
    %1867 = vmatprep.subr.mxu0 0.0
    %1868 = vmatpush1.msra.mxu0 0.0
    %1869 = vmatprep.subr.mxu0 0.0
    %1870 = vmatpush1.msra.mxu0 0.0
    %1871 = vmatprep.subr.mxu0 0.0
    %1872 = vmatpush1.msra.mxu0 0.0
    %1873 = vmatprep.subr.mxu0 0.0
    %1874 = vmatpush1.msra.mxu0 0.0
    %1875 = vmatprep.subr.mxu0 0.0
    %1876 = vmatpush1.msra.mxu0 0.0
    %1877 = vmatprep.subr.mxu0 0.0
    %1878 = vmatpush1.msra.mxu0 0.0
    %1879 = vmatprep.mubr.f32.mxu0 0.0
    %1880 = vmatmul.mubr.f32.gmra.mrb[0].mxu0 %v1804
    %v1881 = vpop.f32.mrb[0].mxu0
    %v1882 = vadd.f32 0.0, %v1881
    %v1883 = vpop.f32.mrb[0].mxu0
    %1884 = vmatprep.mubr.f32.mxu0 0.0
    %1885 = vmatmul.mubr.f32.gmra.mrb[0].mxu0 %v1807
    %v1886 = vpop.f32.mrb[0].mxu0
    %v1887 = vadd.f32 0.0, %v1886
    %v1888 = vpop.f32.mrb[0].mxu0
    %1889 = vmatprep.mubr.f32.mxu0 0.0
    %1890 = vmatmul.mubr.f32.gmra.mrb[0].mxu0 %v1810
    %v1891 = vpop.f32.mrb[0].mxu0
    %v1892 = vadd.f32 0.0, %v1891
    %v1893 = vpop.f32.mrb[0].mxu0
    %1894 = vmatprep.mubr.f32.mxu0 0.0
    %1895 = vmatmul.mubr.f32.gmra.mrb[0].mxu0 %v1813
    %v1896 = vpop.f32.mrb[0].mxu0
    %v1897 = vadd.f32 0.0, %v1896
    %v1898 = vpop.f32.mrb[0].mxu0
    %1899 = vdwg.mxu0
    %v1900 = vadd.f32 %v1704, %v1882
    %v1901 = vadd.f32 %v1705, %v1887
    %v1902 = vadd.f32 %v1706, %v1892
    %v1903 = vadd.f32 %v1707, %v1897
    %s1904 = scalar_lea.vmem %s3, 256
    %v1905 = vld [vmem:[%s1904] sm:$0xff]
    %v1906 = vld [vmem:[%s1904 + $0x8] sm:$0xff]
    %v1907 = vld [vmem:[%s1904 + $0x10] sm:$0xff]
    %v1908 = vld [vmem:[%s1904 + $0x18] sm:$0xff]
    %1909 = vmatprep.subr.mxu0 0.0
    %1910 = vmatpush1.msra.mxu0 %v329
    %1911 = vmatprep.subr.mxu0 0.0
    %1912 = vmatpush1.msra.mxu0 %v330
    %1913 = vmatprep.subr.mxu0 0.0
    %1914 = vmatpush1.msra.mxu0 %v331
    %1915 = vmatprep.subr.mxu0 0.0
    %1916 = vmatpush1.msra.mxu0 %v332
    %1917 = vmatprep.subr.mxu0 0.0
    %1918 = vmatpush1.msra.mxu0 %v333
    %1919 = vmatprep.subr.mxu0 0.0
    %1920 = vmatpush1.msra.mxu0 %v334
    %1921 = vmatprep.subr.mxu0 0.0
    %1922 = vmatpush1.msra.mxu0 %v335
    %1923 = vmatprep.subr.mxu0 0.0
    %1924 = vmatpush1.msra.mxu0 %v336
    %1925 = vmatprep.subr.mxu0 0.0
    %1926 = vmatpush1.msra.mxu0 %v337
    %1927 = vmatprep.subr.mxu0 0.0
    %1928 = vmatpush1.msra.mxu0 %v338
    %1929 = vmatprep.subr.mxu0 0.0
    %1930 = vmatpush1.msra.mxu0 %v339
    %1931 = vmatprep.subr.mxu0 0.0
    %1932 = vmatpush1.msra.mxu0 %v340
    %1933 = vmatprep.subr.mxu0 0.0
    %1934 = vmatpush1.msra.mxu0 %v341
    %1935 = vmatprep.subr.mxu0 0.0
    %1936 = vmatpush1.msra.mxu0 %v342
    %1937 = vmatprep.subr.mxu0 0.0
    %1938 = vmatpush1.msra.mxu0 %v343
    %1939 = vmatprep.subr.mxu0 0.0
    %1940 = vmatpush1.msra.mxu0 %v344
    %1941 = vmatprep.subr.mxu0 0.0
    %1942 = vmatpush1.msra.mxu0 0.0
    %1943 = vmatprep.subr.mxu0 0.0
    %1944 = vmatpush1.msra.mxu0 0.0
    %1945 = vmatprep.subr.mxu0 0.0
    %1946 = vmatpush1.msra.mxu0 0.0
    %1947 = vmatprep.subr.mxu0 0.0
    %1948 = vmatpush1.msra.mxu0 0.0
    %1949 = vmatprep.subr.mxu0 0.0
    %1950 = vmatpush1.msra.mxu0 0.0
    %1951 = vmatprep.subr.mxu0 0.0
    %1952 = vmatpush1.msra.mxu0 0.0
    %1953 = vmatprep.subr.mxu0 0.0
    %1954 = vmatpush1.msra.mxu0 0.0
    %1955 = vmatprep.subr.mxu0 0.0
    %1956 = vmatpush1.msra.mxu0 0.0
    %1957 = vmatprep.subr.mxu0 0.0
    %1958 = vmatpush1.msra.mxu0 0.0
    %1959 = vmatprep.subr.mxu0 0.0
    %1960 = vmatpush1.msra.mxu0 0.0
    %1961 = vmatprep.subr.mxu0 0.0
    %1962 = vmatpush1.msra.mxu0 0.0
    %1963 = vmatprep.subr.mxu0 0.0
    %1964 = vmatpush1.msra.mxu0 0.0
    %1965 = vmatprep.subr.mxu0 0.0
    %1966 = vmatpush1.msra.mxu0 0.0
    %1967 = vmatprep.subr.mxu0 0.0
    %1968 = vmatpush1.msra.mxu0 0.0
    %1969 = vmatprep.subr.mxu0 0.0
    %1970 = vmatpush1.msra.mxu0 0.0
    %1971 = vmatprep.subr.mxu0 0.0
    %1972 = vmatpush1.msra.mxu0 0.0
    %1973 = vmatprep.mubr.f32.mxu0 0.0
    %1974 = vmatmul.mubr.f32.gmra.mrb[0].mxu0 %v1905
    %v1975 = vpop.f32.mrb[0].mxu0
    %v1976 = vadd.f32 0.0, %v1975
    %v1977 = vpop.f32.mrb[0].mxu0
    %1978 = vmatprep.mubr.f32.mxu0 0.0
    %1979 = vmatmul.mubr.f32.gmra.mrb[0].mxu0 %v1906
    %v1980 = vpop.f32.mrb[0].mxu0
    %v1981 = vadd.f32 0.0, %v1980
    %v1982 = vpop.f32.mrb[0].mxu0
    %1983 = vmatprep.mubr.f32.mxu0 0.0
    %1984 = vmatmul.mubr.f32.gmra.mrb[0].mxu0 %v1907
    %v1985 = vpop.f32.mrb[0].mxu0
    %v1986 = vadd.f32 0.0, %v1985
    %v1987 = vpop.f32.mrb[0].mxu0
    %1988 = vmatprep.mubr.f32.mxu0 0.0
    %1989 = vmatmul.mubr.f32.gmra.mrb[0].mxu0 %v1908
    %v1990 = vpop.f32.mrb[0].mxu0
    %v1991 = vadd.f32 0.0, %v1990
    %v1992 = vpop.f32.mrb[0].mxu0
    %1993 = vdwg.mxu0
    %s1994 = scalar_lea.vmem [#allocation2], 256
    %v1995 = vld [vmem:[%s1994] sm:$0xff]
    %v1996 = vld [vmem:[%s1994 + $0x8] sm:$0xff]
    %v1997 = vld [vmem:[%s1994 + $0x10] sm:$0xff]
    %v1998 = vld [vmem:[%s1994 + $0x18] sm:$0xff]
    %v2000 = vsel %vm533, %v1976, 0
    %v2003 = vsel %vm533, %v1981, 0
    %v2006 = vsel %vm533, %v1986, 0
    %v2009 = vsel %vm533, %v1991, 0
    %2011 = vmatprep.subr.mxu0 0.0
    %2012 = vmatpush1.msra.mxu0 %v1995
    %2013 = vmatprep.subr.mxu0 0.0
    %2014 = vmatpush1.msra.mxu0 %v1996
    %2015 = vmatprep.subr.mxu0 0.0
    %2016 = vmatpush1.msra.mxu0 %v1997
    %2017 = vmatprep.subr.mxu0 0.0
    %2018 = vmatpush1.msra.mxu0 %v1998
    %2019 = vmatprep.subr.mxu0 0.0
    %2020 = vmatpush1.msra.mxu0 0.0
    %2021 = vmatprep.subr.mxu0 0.0
    %2022 = vmatpush1.msra.mxu0 0.0
    %2023 = vmatprep.subr.mxu0 0.0
    %2024 = vmatpush1.msra.mxu0 0.0
    %2025 = vmatprep.subr.mxu0 0.0
    %2026 = vmatpush1.msra.mxu0 0.0
    %2027 = vmatprep.subr.mxu0 0.0
    %2028 = vmatpush1.msra.mxu0 0.0
    %2029 = vmatprep.subr.mxu0 0.0
    %2030 = vmatpush1.msra.mxu0 0.0
    %2031 = vmatprep.subr.mxu0 0.0
    %2032 = vmatpush1.msra.mxu0 0.0
    %2033 = vmatprep.subr.mxu0 0.0
    %2034 = vmatpush1.msra.mxu0 0.0
    %2035 = vmatprep.subr.mxu0 0.0
    %2036 = vmatpush1.msra.mxu0 0.0
    %2037 = vmatprep.subr.mxu0 0.0
    %2038 = vmatpush1.msra.mxu0 0.0
    %2039 = vmatprep.subr.mxu0 0.0
    %2040 = vmatpush1.msra.mxu0 0.0
    %2041 = vmatprep.subr.mxu0 0.0
    %2042 = vmatpush1.msra.mxu0 0.0
    %2043 = vmatprep.subr.mxu0 0.0
    %2044 = vmatpush1.msra.mxu0 0.0
    %2045 = vmatprep.subr.mxu0 0.0
    %2046 = vmatpush1.msra.mxu0 0.0
    %2047 = vmatprep.subr.mxu0 0.0
    %2048 = vmatpush1.msra.mxu0 0.0
    %2049 = vmatprep.subr.mxu0 0.0
    %2050 = vmatpush1.msra.mxu0 0.0
    %2051 = vmatprep.subr.mxu0 0.0
    %2052 = vmatpush1.msra.mxu0 0.0
    %2053 = vmatprep.subr.mxu0 0.0
    %2054 = vmatpush1.msra.mxu0 0.0
    %2055 = vmatprep.subr.mxu0 0.0
    %2056 = vmatpush1.msra.mxu0 0.0
    %2057 = vmatprep.subr.mxu0 0.0
    %2058 = vmatpush1.msra.mxu0 0.0
    %2059 = vmatprep.subr.mxu0 0.0
    %2060 = vmatpush1.msra.mxu0 0.0
    %2061 = vmatprep.subr.mxu0 0.0
    %2062 = vmatpush1.msra.mxu0 0.0
    %2063 = vmatprep.subr.mxu0 0.0
    %2064 = vmatpush1.msra.mxu0 0.0
    %2065 = vmatprep.subr.mxu0 0.0
    %2066 = vmatpush1.msra.mxu0 0.0
    %2067 = vmatprep.subr.mxu0 0.0
    %2068 = vmatpush1.msra.mxu0 0.0
    %2069 = vmatprep.subr.mxu0 0.0
    %2070 = vmatpush1.msra.mxu0 0.0
    %2071 = vmatprep.subr.mxu0 0.0
    %2072 = vmatpush1.msra.mxu0 0.0
    %2073 = vmatprep.subr.mxu0 0.0
    %2074 = vmatpush1.msra.mxu0 0.0
    %2075 = vmatprep.mubr.f32.mxu0 0.0
    %2076 = vmatmul.mubr.f32.gmra.mrb[0].mxu0 %v2000
    %v2077 = vpop.f32.mrb[0].mxu0
    %v2078 = vadd.f32 0.0, %v2077
    %v2079 = vpop.f32.mrb[0].mxu0
    %2080 = vmatprep.mubr.f32.mxu0 0.0
    %2081 = vmatmul.mubr.f32.gmra.mrb[0].mxu0 %v2003
    %v2082 = vpop.f32.mrb[0].mxu0
    %v2083 = vadd.f32 0.0, %v2082
    %v2084 = vpop.f32.mrb[0].mxu0
    %2085 = vmatprep.mubr.f32.mxu0 0.0
    %2086 = vmatmul.mubr.f32.gmra.mrb[0].mxu0 %v2006
    %v2087 = vpop.f32.mrb[0].mxu0
    %v2088 = vadd.f32 0.0, %v2087
    %v2089 = vpop.f32.mrb[0].mxu0
    %2090 = vmatprep.mubr.f32.mxu0 0.0
    %2091 = vmatmul.mubr.f32.gmra.mrb[0].mxu0 %v2009
    %v2092 = vpop.f32.mrb[0].mxu0
    %v2093 = vadd.f32 0.0, %v2092
    %v2094 = vpop.f32.mrb[0].mxu0
    %2095 = vdwg.mxu0
    %v2096 = vadd.f32 %v1900, %v2078
    %v2097 = vadd.f32 %v1901, %v2083
    %v2098 = vadd.f32 %v1902, %v2088
    %v2099 = vadd.f32 %v1903, %v2093
    %v2100 = vld [vmem:[%s5] sm:$0x1]
    %v2102 = vlaneseq
    %v2103 = vshrl.u32 %v2102, 7
    %v2104 = vsub.s32 0, %v2103
    %v2105 = vrot.slane %v2100, %v2104
    %v2107 = vadd.f32 %v2096, %v2105
    %v2108 = vadd.f32 %v2097, %v2105
    %v2109 = vadd.f32 %v2098, %v2105
    %v2110 = vadd.f32 %v2099, %v2105
    %v2111 = vmax.f32 %v2107, 0.0
    %v2112 = vmax.f32 %v2108, 0.0
    %v2113 = vmax.f32 %v2109, 0.0
    %v2114 = vmax.f32 %v2110, 0.0
    %v2115 = vld [vmem:[%s6] sm:$0xff]
    %v2117 = vsel %vm533, %v2115, 0
    %2119 = vmatprep.subr.mxu0 0.0
    %2120 = vmatpush1.msra.mxu0 %v2111
    %2121 = vmatprep.subr.mxu0 0.0
    %2122 = vmatpush1.msra.mxu0 %v2112
    %2123 = vmatprep.subr.mxu0 0.0
    %2124 = vmatpush1.msra.mxu0 %v2113
    %2125 = vmatprep.subr.mxu0 0.0
    %2126 = vmatpush1.msra.mxu0 %v2114
    %2127 = vmatprep.subr.mxu0 0.0
    %2128 = vmatpush1.msra.mxu0 0.0
    %2129 = vmatprep.subr.mxu0 0.0
    %2130 = vmatpush1.msra.mxu0 0.0
    %2131 = vmatprep.subr.mxu0 0.0
    %2132 = vmatpush1.msra.mxu0 0.0
    %2133 = vmatprep.subr.mxu0 0.0
    %2134 = vmatpush1.msra.mxu0 0.0
    %2135 = vmatprep.subr.mxu0 0.0
    %2136 = vmatpush1.msra.mxu0 0.0
    %2137 = vmatprep.subr.mxu0 0.0
    %2138 = vmatpush1.msra.mxu0 0.0
    %2139 = vmatprep.subr.mxu0 0.0
    %2140 = vmatpush1.msra.mxu0 0.0
    %2141 = vmatprep.subr.mxu0 0.0
    %2142 = vmatpush1.msra.mxu0 0.0
    %2143 = vmatprep.subr.mxu0 0.0
    %2144 = vmatpush1.msra.mxu0 0.0
    %2145 = vmatprep.subr.mxu0 0.0
    %2146 = vmatpush1.msra.mxu0 0.0
    %2147 = vmatprep.subr.mxu0 0.0
    %2148 = vmatpush1.msra.mxu0 0.0
    %2149 = vmatprep.subr.mxu0 0.0
    %2150 = vmatpush1.msra.mxu0 0.0
    %2151 = vmatprep.subr.mxu0 0.0
    %2152 = vmatpush1.msra.mxu0 0.0
    %2153 = vmatprep.subr.mxu0 0.0
    %2154 = vmatpush1.msra.mxu0 0.0
    %2155 = vmatprep.subr.mxu0 0.0
    %2156 = vmatpush1.msra.mxu0 0.0
    %2157 = vmatprep.subr.mxu0 0.0
    %2158 = vmatpush1.msra.mxu0 0.0
    %2159 = vmatprep.subr.mxu0 0.0
    %2160 = vmatpush1.msra.mxu0 0.0
    %2161 = vmatprep.subr.mxu0 0.0
    %2162 = vmatpush1.msra.mxu0 0.0
    %2163 = vmatprep.subr.mxu0 0.0
    %2164 = vmatpush1.msra.mxu0 0.0
    %2165 = vmatprep.subr.mxu0 0.0
    %2166 = vmatpush1.msra.mxu0 0.0
    %2167 = vmatprep.subr.mxu0 0.0
    %2168 = vmatpush1.msra.mxu0 0.0
    %2169 = vmatprep.subr.mxu0 0.0
    %2170 = vmatpush1.msra.mxu0 0.0
    %2171 = vmatprep.subr.mxu0 0.0
    %2172 = vmatpush1.msra.mxu0 0.0
    %2173 = vmatprep.subr.mxu0 0.0
    %2174 = vmatpush1.msra.mxu0 0.0
    %2175 = vmatprep.subr.mxu0 0.0
    %2176 = vmatpush1.msra.mxu0 0.0
    %2177 = vmatprep.subr.mxu0 0.0
    %2178 = vmatpush1.msra.mxu0 0.0
    %2179 = vmatprep.subr.mxu0 0.0
    %2180 = vmatpush1.msra.mxu0 0.0
    %2181 = vmatprep.subr.mxu0 0.0
    %2182 = vmatpush1.msra.mxu0 0.0
    %2183 = vmatprep.mubr.f32.mxu0 0.0
    %2184 = vmatmul.mubr.f32.gmra.mrb[0].mxu0 %v2117
    %v2185 = vpop.f32.mrb[0].mxu0
    %v2186 = vadd.f32 0.0, %v2185
    %v2187 = vpop.f32.mrb[0].mxu0
    %2188 = vdwg.mxu0
    %v2189 = vld [vmem:[#allocation5] sm:$0xff]
    %v2190 = vld [vmem:[#allocation5 + $0x8] sm:$0xff]
    %v2191 = vld [vmem:[#allocation5 + $0x10] sm:$0xff]
    %v2192 = vld [vmem:[#allocation5 + $0x18] sm:$0xff]
    %s2193 = scalar_lea.vmem %s6, 8
    %v2194 = vld [vmem:[%s2193] sm:$0xff]
    %v2196 = vsel %vm533, %v2194, 0
    %2198 = vmatprep.subr.mxu0 0.0
    %2199 = vmatpush1.msra.mxu0 %v2111
    %2200 = vmatprep.subr.mxu0 0.0
    %2201 = vmatpush1.msra.mxu0 %v2112
    %2202 = vmatprep.subr.mxu0 0.0
    %2203 = vmatpush1.msra.mxu0 %v2113
    %2204 = vmatprep.subr.mxu0 0.0
    %2205 = vmatpush1.msra.mxu0 %v2114
    %2206 = vmatprep.subr.mxu0 0.0
    %2207 = vmatpush1.msra.mxu0 0.0
    %2208 = vmatprep.subr.mxu0 0.0
    %2209 = vmatpush1.msra.mxu0 0.0
    %2210 = vmatprep.subr.mxu0 0.0
    %2211 = vmatpush1.msra.mxu0 0.0
    %2212 = vmatprep.subr.mxu0 0.0
    %2213 = vmatpush1.msra.mxu0 0.0
    %2214 = vmatprep.subr.mxu0 0.0
    %2215 = vmatpush1.msra.mxu0 0.0
    %2216 = vmatprep.subr.mxu0 0.0
    %2217 = vmatpush1.msra.mxu0 0.0
    %2218 = vmatprep.subr.mxu0 0.0
    %2219 = vmatpush1.msra.mxu0 0.0
    %2220 = vmatprep.subr.mxu0 0.0
    %2221 = vmatpush1.msra.mxu0 0.0
    %2222 = vmatprep.subr.mxu0 0.0
    %2223 = vmatpush1.msra.mxu0 0.0
    %2224 = vmatprep.subr.mxu0 0.0
    %2225 = vmatpush1.msra.mxu0 0.0
    %2226 = vmatprep.subr.mxu0 0.0
    %2227 = vmatpush1.msra.mxu0 0.0
    %2228 = vmatprep.subr.mxu0 0.0
    %2229 = vmatpush1.msra.mxu0 0.0
    %2230 = vmatprep.subr.mxu0 0.0
    %2231 = vmatpush1.msra.mxu0 0.0
    %2232 = vmatprep.subr.mxu0 0.0
    %2233 = vmatpush1.msra.mxu0 0.0
    %2234 = vmatprep.subr.mxu0 0.0
    %2235 = vmatpush1.msra.mxu0 0.0
    %2236 = vmatprep.subr.mxu0 0.0
    %2237 = vmatpush1.msra.mxu0 0.0
    %2238 = vmatprep.subr.mxu0 0.0
    %2239 = vmatpush1.msra.mxu0 0.0
    %2240 = vmatprep.subr.mxu0 0.0
    %2241 = vmatpush1.msra.mxu0 0.0
    %2242 = vmatprep.subr.mxu0 0.0
    %2243 = vmatpush1.msra.mxu0 0.0
    %2244 = vmatprep.subr.mxu0 0.0
    %2245 = vmatpush1.msra.mxu0 0.0
    %2246 = vmatprep.subr.mxu0 0.0
    %2247 = vmatpush1.msra.mxu0 0.0
    %2248 = vmatprep.subr.mxu0 0.0
    %2249 = vmatpush1.msra.mxu0 0.0
    %2250 = vmatprep.subr.mxu0 0.0
    %2251 = vmatpush1.msra.mxu0 0.0
    %2252 = vmatprep.subr.mxu0 0.0
    %2253 = vmatpush1.msra.mxu0 0.0
    %2254 = vmatprep.subr.mxu0 0.0
    %2255 = vmatpush1.msra.mxu0 0.0
    %2256 = vmatprep.subr.mxu0 0.0
    %2257 = vmatpush1.msra.mxu0 0.0
    %2258 = vmatprep.subr.mxu0 0.0
    %2259 = vmatpush1.msra.mxu0 0.0
    %2260 = vmatprep.subr.mxu0 0.0
    %2261 = vmatpush1.msra.mxu0 0.0
    %2262 = vmatprep.mubr.f32.mxu0 0.0
    %2263 = vmatmul.mubr.f32.gmra.mrb[0].mxu0 %v2196
    %v2264 = vpop.f32.mrb[0].mxu0
    %v2265 = vadd.f32 0.0, %v2264
    %v2266 = vpop.f32.mrb[0].mxu0
    %2267 = vdwg.mxu0
    %s2268 = scalar_lea.vmem [#allocation5], 32
    %v2269 = vld [vmem:[%s2268] sm:$0xff]
    %v2270 = vld [vmem:[%s2268 + $0x8] sm:$0xff]
    %v2271 = vld [vmem:[%s2268 + $0x10] sm:$0xff]
    %v2272 = vld [vmem:[%s2268 + $0x18] sm:$0xff]
    %v2274 = vsel %vm533, %v2265, 0
    %2276 = vmatprep.subr.mxu0 0.0
    %2277 = vmatpush1.msra.mxu0 %v2269
    %2278 = vmatprep.subr.mxu0 0.0
    %2279 = vmatpush1.msra.mxu0 %v2270
    %2280 = vmatprep.subr.mxu0 0.0
    %2281 = vmatpush1.msra.mxu0 %v2271
    %2282 = vmatprep.subr.mxu0 0.0
    %2283 = vmatpush1.msra.mxu0 %v2272
    %2284 = vmatprep.subr.mxu0 0.0
    %2285 = vmatpush1.msra.mxu0 0.0
    %2286 = vmatprep.subr.mxu0 0.0
    %2287 = vmatpush1.msra.mxu0 0.0
    %2288 = vmatprep.subr.mxu0 0.0
    %2289 = vmatpush1.msra.mxu0 0.0
    %2290 = vmatprep.subr.mxu0 0.0
    %2291 = vmatpush1.msra.mxu0 0.0
    %2292 = vmatprep.subr.mxu0 0.0
    %2293 = vmatpush1.msra.mxu0 0.0
    %2294 = vmatprep.subr.mxu0 0.0
    %2295 = vmatpush1.msra.mxu0 0.0
    %2296 = vmatprep.subr.mxu0 0.0
    %2297 = vmatpush1.msra.mxu0 0.0
    %2298 = vmatprep.subr.mxu0 0.0
    %2299 = vmatpush1.msra.mxu0 0.0
    %2300 = vmatprep.subr.mxu0 0.0
    %2301 = vmatpush1.msra.mxu0 0.0
    %2302 = vmatprep.subr.mxu0 0.0
    %2303 = vmatpush1.msra.mxu0 0.0
    %2304 = vmatprep.subr.mxu0 0.0
    %2305 = vmatpush1.msra.mxu0 0.0
    %2306 = vmatprep.subr.mxu0 0.0
    %2307 = vmatpush1.msra.mxu0 0.0
    %2308 = vmatprep.subr.mxu0 0.0
    %2309 = vmatpush1.msra.mxu0 0.0
    %2310 = vmatprep.subr.mxu0 0.0
    %2311 = vmatpush1.msra.mxu0 0.0
    %2312 = vmatprep.subr.mxu0 0.0
    %2313 = vmatpush1.msra.mxu0 0.0
    %2314 = vmatprep.subr.mxu0 0.0
    %2315 = vmatpush1.msra.mxu0 0.0
    %2316 = vmatprep.subr.mxu0 0.0
    %2317 = vmatpush1.msra.mxu0 0.0
    %2318 = vmatprep.subr.mxu0 0.0
    %2319 = vmatpush1.msra.mxu0 0.0
    %2320 = vmatprep.subr.mxu0 0.0
    %2321 = vmatpush1.msra.mxu0 0.0
    %2322 = vmatprep.subr.mxu0 0.0
    %2323 = vmatpush1.msra.mxu0 0.0
    %2324 = vmatprep.subr.mxu0 0.0
    %2325 = vmatpush1.msra.mxu0 0.0
    %2326 = vmatprep.subr.mxu0 0.0
    %2327 = vmatpush1.msra.mxu0 0.0
    %2328 = vmatprep.subr.mxu0 0.0
    %2329 = vmatpush1.msra.mxu0 0.0
    %2330 = vmatprep.subr.mxu0 0.0
    %2331 = vmatpush1.msra.mxu0 0.0
    %2332 = vmatprep.subr.mxu0 0.0
    %2333 = vmatpush1.msra.mxu0 0.0
    %2334 = vmatprep.subr.mxu0 0.0
    %2335 = vmatpush1.msra.mxu0 0.0
    %2336 = vmatprep.subr.mxu0 0.0
    %2337 = vmatpush1.msra.mxu0 0.0
    %2338 = vmatprep.subr.mxu0 0.0
    %2339 = vmatpush1.msra.mxu0 0.0
    %2340 = vmatprep.mubr.f32.mxu0 0.0
    %2341 = vmatmul.mubr.f32.gmra.mrb[0].mxu0 %v2274
    %v2342 = vpop.f32.mrb[0].mxu0
    %v2343 = vadd.f32 0.0, %v2342
    %v2344 = vpop.f32.mrb[0].mxu0
    %2345 = vdwg.mxu0
    %v2347 = vsel %vm533, %v2186, 0
    %2349 = vmatprep.subr.mxu0 0.0
    %2350 = vmatpush1.msra.mxu0 %v2189
    %2351 = vmatprep.subr.mxu0 0.0
    %2352 = vmatpush1.msra.mxu0 %v2190
    %2353 = vmatprep.subr.mxu0 0.0
    %2354 = vmatpush1.msra.mxu0 %v2191
    %2355 = vmatprep.subr.mxu0 0.0
    %2356 = vmatpush1.msra.mxu0 %v2192
    %2357 = vmatprep.subr.mxu0 0.0
    %2358 = vmatpush1.msra.mxu0 0.0
    %2359 = vmatprep.subr.mxu0 0.0
    %2360 = vmatpush1.msra.mxu0 0.0
    %2361 = vmatprep.subr.mxu0 0.0
    %2362 = vmatpush1.msra.mxu0 0.0
    %2363 = vmatprep.subr.mxu0 0.0
    %2364 = vmatpush1.msra.mxu0 0.0
    %2365 = vmatprep.subr.mxu0 0.0
    %2366 = vmatpush1.msra.mxu0 0.0
    %2367 = vmatprep.subr.mxu0 0.0
    %2368 = vmatpush1.msra.mxu0 0.0
    %2369 = vmatprep.subr.mxu0 0.0
    %2370 = vmatpush1.msra.mxu0 0.0
    %2371 = vmatprep.subr.mxu0 0.0
    %2372 = vmatpush1.msra.mxu0 0.0
    %2373 = vmatprep.subr.mxu0 0.0
    %2374 = vmatpush1.msra.mxu0 0.0
    %2375 = vmatprep.subr.mxu0 0.0
    %2376 = vmatpush1.msra.mxu0 0.0
    %2377 = vmatprep.subr.mxu0 0.0
    %2378 = vmatpush1.msra.mxu0 0.0
    %2379 = vmatprep.subr.mxu0 0.0
    %2380 = vmatpush1.msra.mxu0 0.0
    %2381 = vmatprep.subr.mxu0 0.0
    %2382 = vmatpush1.msra.mxu0 0.0
    %2383 = vmatprep.subr.mxu0 0.0
    %2384 = vmatpush1.msra.mxu0 0.0
    %2385 = vmatprep.subr.mxu0 0.0
    %2386 = vmatpush1.msra.mxu0 0.0
    %2387 = vmatprep.subr.mxu0 0.0
    %2388 = vmatpush1.msra.mxu0 0.0
    %2389 = vmatprep.subr.mxu0 0.0
    %2390 = vmatpush1.msra.mxu0 0.0
    %2391 = vmatprep.subr.mxu0 0.0
    %2392 = vmatpush1.msra.mxu0 0.0
    %2393 = vmatprep.subr.mxu0 0.0
    %2394 = vmatpush1.msra.mxu0 0.0
    %2395 = vmatprep.subr.mxu0 0.0
    %2396 = vmatpush1.msra.mxu0 0.0
    %2397 = vmatprep.subr.mxu0 0.0
    %2398 = vmatpush1.msra.mxu0 0.0
    %2399 = vmatprep.subr.mxu0 0.0
    %2400 = vmatpush1.msra.mxu0 0.0
    %2401 = vmatprep.subr.mxu0 0.0
    %2402 = vmatpush1.msra.mxu0 0.0
    %2403 = vmatprep.subr.mxu0 0.0
    %2404 = vmatpush1.msra.mxu0 0.0
    %2405 = vmatprep.subr.mxu0 0.0
    %2406 = vmatpush1.msra.mxu0 0.0
    %2407 = vmatprep.subr.mxu0 0.0
    %2408 = vmatpush1.msra.mxu0 0.0
    %2409 = vmatprep.subr.mxu0 0.0
    %2410 = vmatpush1.msra.mxu0 0.0
    %2411 = vmatprep.subr.mxu0 0.0
    %2412 = vmatpush1.msra.mxu0 0.0
    %2413 = vmatprep.mubr.f32.mxu0 0.0
    %2414 = vmatmul.mubr.f32.gmra.mrb[0].mxu0 %v2347
    %v2415 = vpop.f32.mrb[0].mxu0
    %v2416 = vadd.f32 %v2343, %v2415
    %v2417 = vpop.f32.mrb[0].mxu0
    %2418 = vdwg.mxu0
    %s2419 = scalar_lea.vmem %s6, 16
    %v2420 = vld [vmem:[%s2419] sm:$0xff]
    %v2422 = vsel %vm533, %v2420, 0
    %2424 = vmatprep.subr.mxu0 0.0
    %2425 = vmatpush1.msra.mxu0 %v2111
    %2426 = vmatprep.subr.mxu0 0.0
    %2427 = vmatpush1.msra.mxu0 %v2112
    %2428 = vmatprep.subr.mxu0 0.0
    %2429 = vmatpush1.msra.mxu0 %v2113
    %2430 = vmatprep.subr.mxu0 0.0
    %2431 = vmatpush1.msra.mxu0 %v2114
    %2432 = vmatprep.subr.mxu0 0.0
    %2433 = vmatpush1.msra.mxu0 0.0
    %2434 = vmatprep.subr.mxu0 0.0
    %2435 = vmatpush1.msra.mxu0 0.0
    %2436 = vmatprep.subr.mxu0 0.0
    %2437 = vmatpush1.msra.mxu0 0.0
    %2438 = vmatprep.subr.mxu0 0.0
    %2439 = vmatpush1.msra.mxu0 0.0
    %2440 = vmatprep.subr.mxu0 0.0
    %2441 = vmatpush1.msra.mxu0 0.0
    %2442 = vmatprep.subr.mxu0 0.0
    %2443 = vmatpush1.msra.mxu0 0.0
    %2444 = vmatprep.subr.mxu0 0.0
    %2445 = vmatpush1.msra.mxu0 0.0
    %2446 = vmatprep.subr.mxu0 0.0
    %2447 = vmatpush1.msra.mxu0 0.0
    %2448 = vmatprep.subr.mxu0 0.0
    %2449 = vmatpush1.msra.mxu0 0.0
    %2450 = vmatprep.subr.mxu0 0.0
    %2451 = vmatpush1.msra.mxu0 0.0
    %2452 = vmatprep.subr.mxu0 0.0
    %2453 = vmatpush1.msra.mxu0 0.0
    %2454 = vmatprep.subr.mxu0 0.0
    %2455 = vmatpush1.msra.mxu0 0.0
    %2456 = vmatprep.subr.mxu0 0.0
    %2457 = vmatpush1.msra.mxu0 0.0
    %2458 = vmatprep.subr.mxu0 0.0
    %2459 = vmatpush1.msra.mxu0 0.0
    %2460 = vmatprep.subr.mxu0 0.0
    %2461 = vmatpush1.msra.mxu0 0.0
    %2462 = vmatprep.subr.mxu0 0.0
    %2463 = vmatpush1.msra.mxu0 0.0
    %2464 = vmatprep.subr.mxu0 0.0
    %2465 = vmatpush1.msra.mxu0 0.0
    %2466 = vmatprep.subr.mxu0 0.0
    %2467 = vmatpush1.msra.mxu0 0.0
    %2468 = vmatprep.subr.mxu0 0.0
    %2469 = vmatpush1.msra.mxu0 0.0
    %2470 = vmatprep.subr.mxu0 0.0
    %2471 = vmatpush1.msra.mxu0 0.0
    %2472 = vmatprep.subr.mxu0 0.0
    %2473 = vmatpush1.msra.mxu0 0.0
    %2474 = vmatprep.subr.mxu0 0.0
    %2475 = vmatpush1.msra.mxu0 0.0
    %2476 = vmatprep.subr.mxu0 0.0
    %2477 = vmatpush1.msra.mxu0 0.0
    %2478 = vmatprep.subr.mxu0 0.0
    %2479 = vmatpush1.msra.mxu0 0.0
    %2480 = vmatprep.subr.mxu0 0.0
    %2481 = vmatpush1.msra.mxu0 0.0
    %2482 = vmatprep.subr.mxu0 0.0
    %2483 = vmatpush1.msra.mxu0 0.0
    %2484 = vmatprep.subr.mxu0 0.0
    %2485 = vmatpush1.msra.mxu0 0.0
    %2486 = vmatprep.subr.mxu0 0.0
    %2487 = vmatpush1.msra.mxu0 0.0
    %2488 = vmatprep.mubr.f32.mxu0 0.0
    %2489 = vmatmul.mubr.f32.gmra.mrb[0].mxu0 %v2422
    %v2490 = vpop.f32.mrb[0].mxu0
    %v2491 = vadd.f32 0.0, %v2490
    %v2492 = vpop.f32.mrb[0].mxu0
    %2493 = vdwg.mxu0
    %s2494 = scalar_lea.vmem [#allocation5], 64
    %v2495 = vld [vmem:[%s2494] sm:$0xff]
    %v2496 = vld [vmem:[%s2494 + $0x8] sm:$0xff]
    %v2497 = vld [vmem:[%s2494 + $0x10] sm:$0xff]
    %v2498 = vld [vmem:[%s2494 + $0x18] sm:$0xff]
    %v2500 = vsel %vm533, %v2491, 0
    %2502 = vmatprep.subr.mxu0 0.0
    %2503 = vmatpush1.msra.mxu0 %v2495
    %2504 = vmatprep.subr.mxu0 0.0
    %2505 = vmatpush1.msra.mxu0 %v2496
    %2506 = vmatprep.subr.mxu0 0.0
    %2507 = vmatpush1.msra.mxu0 %v2497
    %2508 = vmatprep.subr.mxu0 0.0
    %2509 = vmatpush1.msra.mxu0 %v2498
    %2510 = vmatprep.subr.mxu0 0.0
    %2511 = vmatpush1.msra.mxu0 0.0
    %2512 = vmatprep.subr.mxu0 0.0
    %2513 = vmatpush1.msra.mxu0 0.0
    %2514 = vmatprep.subr.mxu0 0.0
    %2515 = vmatpush1.msra.mxu0 0.0
    %2516 = vmatprep.subr.mxu0 0.0
    %2517 = vmatpush1.msra.mxu0 0.0
    %2518 = vmatprep.subr.mxu0 0.0
    %2519 = vmatpush1.msra.mxu0 0.0
    %2520 = vmatprep.subr.mxu0 0.0
    %2521 = vmatpush1.msra.mxu0 0.0
    %2522 = vmatprep.subr.mxu0 0.0
    %2523 = vmatpush1.msra.mxu0 0.0
    %2524 = vmatprep.subr.mxu0 0.0
    %2525 = vmatpush1.msra.mxu0 0.0
    %2526 = vmatprep.subr.mxu0 0.0
    %2527 = vmatpush1.msra.mxu0 0.0
    %2528 = vmatprep.subr.mxu0 0.0
    %2529 = vmatpush1.msra.mxu0 0.0
    %2530 = vmatprep.subr.mxu0 0.0
    %2531 = vmatpush1.msra.mxu0 0.0
    %2532 = vmatprep.subr.mxu0 0.0
    %2533 = vmatpush1.msra.mxu0 0.0
    %2534 = vmatprep.subr.mxu0 0.0
    %2535 = vmatpush1.msra.mxu0 0.0
    %2536 = vmatprep.subr.mxu0 0.0
    %2537 = vmatpush1.msra.mxu0 0.0
    %2538 = vmatprep.subr.mxu0 0.0
    %2539 = vmatpush1.msra.mxu0 0.0
    %2540 = vmatprep.subr.mxu0 0.0
    %2541 = vmatpush1.msra.mxu0 0.0
    %2542 = vmatprep.subr.mxu0 0.0
    %2543 = vmatpush1.msra.mxu0 0.0
    %2544 = vmatprep.subr.mxu0 0.0
    %2545 = vmatpush1.msra.mxu0 0.0
    %2546 = vmatprep.subr.mxu0 0.0
    %2547 = vmatpush1.msra.mxu0 0.0
    %2548 = vmatprep.subr.mxu0 0.0
    %2549 = vmatpush1.msra.mxu0 0.0
    %2550 = vmatprep.subr.mxu0 0.0
    %2551 = vmatpush1.msra.mxu0 0.0
    %2552 = vmatprep.subr.mxu0 0.0
    %2553 = vmatpush1.msra.mxu0 0.0
    %2554 = vmatprep.subr.mxu0 0.0
    %2555 = vmatpush1.msra.mxu0 0.0
    %2556 = vmatprep.subr.mxu0 0.0
    %2557 = vmatpush1.msra.mxu0 0.0
    %2558 = vmatprep.subr.mxu0 0.0
    %2559 = vmatpush1.msra.mxu0 0.0
    %2560 = vmatprep.subr.mxu0 0.0
    %2561 = vmatpush1.msra.mxu0 0.0
    %2562 = vmatprep.subr.mxu0 0.0
    %2563 = vmatpush1.msra.mxu0 0.0
    %2564 = vmatprep.subr.mxu0 0.0
    %2565 = vmatpush1.msra.mxu0 0.0
    %2566 = vmatprep.mubr.f32.mxu0 0.0
    %2567 = vmatmul.mubr.f32.gmra.mrb[0].mxu0 %v2500
    %v2568 = vpop.f32.mrb[0].mxu0
    %v2569 = vadd.f32 0.0, %v2568
    %v2570 = vpop.f32.mrb[0].mxu0
    %2571 = vdwg.mxu0
    %v2572 = vadd.f32 %v2416, %v2569
    %s2573 = scalar_lea.vmem %s6, 24
    %v2574 = vld [vmem:[%s2573] sm:$0xff]
    %v2576 = vsel %vm533, %v2574, 0
    %2578 = vmatprep.subr.mxu0 0.0
    %2579 = vmatpush1.msra.mxu0 %v2111
    %2580 = vmatprep.subr.mxu0 0.0
    %2581 = vmatpush1.msra.mxu0 %v2112
    %2582 = vmatprep.subr.mxu0 0.0
    %2583 = vmatpush1.msra.mxu0 %v2113
    %2584 = vmatprep.subr.mxu0 0.0
    %2585 = vmatpush1.msra.mxu0 %v2114
    %2586 = vmatprep.subr.mxu0 0.0
    %2587 = vmatpush1.msra.mxu0 0.0
    %2588 = vmatprep.subr.mxu0 0.0
    %2589 = vmatpush1.msra.mxu0 0.0
    %2590 = vmatprep.subr.mxu0 0.0
    %2591 = vmatpush1.msra.mxu0 0.0
    %2592 = vmatprep.subr.mxu0 0.0
    %2593 = vmatpush1.msra.mxu0 0.0
    %2594 = vmatprep.subr.mxu0 0.0
    %2595 = vmatpush1.msra.mxu0 0.0
    %2596 = vmatprep.subr.mxu0 0.0
    %2597 = vmatpush1.msra.mxu0 0.0
    %2598 = vmatprep.subr.mxu0 0.0
    %2599 = vmatpush1.msra.mxu0 0.0
    %2600 = vmatprep.subr.mxu0 0.0
    %2601 = vmatpush1.msra.mxu0 0.0
    %2602 = vmatprep.subr.mxu0 0.0
    %2603 = vmatpush1.msra.mxu0 0.0
    %2604 = vmatprep.subr.mxu0 0.0
    %2605 = vmatpush1.msra.mxu0 0.0
    %2606 = vmatprep.subr.mxu0 0.0
    %2607 = vmatpush1.msra.mxu0 0.0
    %2608 = vmatprep.subr.mxu0 0.0
    %2609 = vmatpush1.msra.mxu0 0.0
    %2610 = vmatprep.subr.mxu0 0.0
    %2611 = vmatpush1.msra.mxu0 0.0
    %2612 = vmatprep.subr.mxu0 0.0
    %2613 = vmatpush1.msra.mxu0 0.0
    %2614 = vmatprep.subr.mxu0 0.0
    %2615 = vmatpush1.msra.mxu0 0.0
    %2616 = vmatprep.subr.mxu0 0.0
    %2617 = vmatpush1.msra.mxu0 0.0
    %2618 = vmatprep.subr.mxu0 0.0
    %2619 = vmatpush1.msra.mxu0 0.0
    %2620 = vmatprep.subr.mxu0 0.0
    %2621 = vmatpush1.msra.mxu0 0.0
    %2622 = vmatprep.subr.mxu0 0.0
    %2623 = vmatpush1.msra.mxu0 0.0
    %2624 = vmatprep.subr.mxu0 0.0
    %2625 = vmatpush1.msra.mxu0 0.0
    %2626 = vmatprep.subr.mxu0 0.0
    %2627 = vmatpush1.msra.mxu0 0.0
    %2628 = vmatprep.subr.mxu0 0.0
    %2629 = vmatpush1.msra.mxu0 0.0
    %2630 = vmatprep.subr.mxu0 0.0
    %2631 = vmatpush1.msra.mxu0 0.0
    %2632 = vmatprep.subr.mxu0 0.0
    %2633 = vmatpush1.msra.mxu0 0.0
    %2634 = vmatprep.subr.mxu0 0.0
    %2635 = vmatpush1.msra.mxu0 0.0
    %2636 = vmatprep.subr.mxu0 0.0
    %2637 = vmatpush1.msra.mxu0 0.0
    %2638 = vmatprep.subr.mxu0 0.0
    %2639 = vmatpush1.msra.mxu0 0.0
    %2640 = vmatprep.subr.mxu0 0.0
    %2641 = vmatpush1.msra.mxu0 0.0
    %2642 = vmatprep.mubr.f32.mxu0 0.0
    %2643 = vmatmul.mubr.f32.gmra.mrb[0].mxu0 %v2576
    %v2644 = vpop.f32.mrb[0].mxu0
    %v2645 = vadd.f32 0.0, %v2644
    %v2646 = vpop.f32.mrb[0].mxu0
    %2647 = vdwg.mxu0
    %s2648 = scalar_lea.vmem [#allocation5], 96
    %v2649 = vld [vmem:[%s2648] sm:$0xff]
    %v2650 = vld [vmem:[%s2648 + $0x8] sm:$0xff]
    %v2651 = vld [vmem:[%s2648 + $0x10] sm:$0xff]
    %v2652 = vld [vmem:[%s2648 + $0x18] sm:$0xff]
    %v2654 = vsel %vm533, %v2645, 0
    %2656 = vmatprep.subr.mxu0 0.0
    %2657 = vmatpush1.msra.mxu0 %v2649
    %2658 = vmatprep.subr.mxu0 0.0
    %2659 = vmatpush1.msra.mxu0 %v2650
    %2660 = vmatprep.subr.mxu0 0.0
    %2661 = vmatpush1.msra.mxu0 %v2651
    %2662 = vmatprep.subr.mxu0 0.0
    %2663 = vmatpush1.msra.mxu0 %v2652
    %2664 = vmatprep.subr.mxu0 0.0
    %2665 = vmatpush1.msra.mxu0 0.0
    %2666 = vmatprep.subr.mxu0 0.0
    %2667 = vmatpush1.msra.mxu0 0.0
    %2668 = vmatprep.subr.mxu0 0.0
    %2669 = vmatpush1.msra.mxu0 0.0
    %2670 = vmatprep.subr.mxu0 0.0
    %2671 = vmatpush1.msra.mxu0 0.0
    %2672 = vmatprep.subr.mxu0 0.0
    %2673 = vmatpush1.msra.mxu0 0.0
    %2674 = vmatprep.subr.mxu0 0.0
    %2675 = vmatpush1.msra.mxu0 0.0
    %2676 = vmatprep.subr.mxu0 0.0
    %2677 = vmatpush1.msra.mxu0 0.0
    %2678 = vmatprep.subr.mxu0 0.0
    %2679 = vmatpush1.msra.mxu0 0.0
    %2680 = vmatprep.subr.mxu0 0.0
    %2681 = vmatpush1.msra.mxu0 0.0
    %2682 = vmatprep.subr.mxu0 0.0
    %2683 = vmatpush1.msra.mxu0 0.0
    %2684 = vmatprep.subr.mxu0 0.0
    %2685 = vmatpush1.msra.mxu0 0.0
    %2686 = vmatprep.subr.mxu0 0.0
    %2687 = vmatpush1.msra.mxu0 0.0
    %2688 = vmatprep.subr.mxu0 0.0
    %2689 = vmatpush1.msra.mxu0 0.0
    %2690 = vmatprep.subr.mxu0 0.0
    %2691 = vmatpush1.msra.mxu0 0.0
    %2692 = vmatprep.subr.mxu0 0.0
    %2693 = vmatpush1.msra.mxu0 0.0
    %2694 = vmatprep.subr.mxu0 0.0
    %2695 = vmatpush1.msra.mxu0 0.0
    %2696 = vmatprep.subr.mxu0 0.0
    %2697 = vmatpush1.msra.mxu0 0.0
    %2698 = vmatprep.subr.mxu0 0.0
    %2699 = vmatpush1.msra.mxu0 0.0
    %2700 = vmatprep.subr.mxu0 0.0
    %2701 = vmatpush1.msra.mxu0 0.0
    %2702 = vmatprep.subr.mxu0 0.0
    %2703 = vmatpush1.msra.mxu0 0.0
    %2704 = vmatprep.subr.mxu0 0.0
    %2705 = vmatpush1.msra.mxu0 0.0
    %2706 = vmatprep.subr.mxu0 0.0
    %2707 = vmatpush1.msra.mxu0 0.0
    %2708 = vmatprep.subr.mxu0 0.0
    %2709 = vmatpush1.msra.mxu0 0.0
    %2710 = vmatprep.subr.mxu0 0.0
    %2711 = vmatpush1.msra.mxu0 0.0
    %2712 = vmatprep.subr.mxu0 0.0
    %2713 = vmatpush1.msra.mxu0 0.0
    %2714 = vmatprep.subr.mxu0 0.0
    %2715 = vmatpush1.msra.mxu0 0.0
    %2716 = vmatprep.subr.mxu0 0.0
    %2717 = vmatpush1.msra.mxu0 0.0
    %2718 = vmatprep.subr.mxu0 0.0
    %2719 = vmatpush1.msra.mxu0 0.0
    %2720 = vmatprep.mubr.f32.mxu0 0.0
    %2721 = vmatmul.mubr.f32.gmra.mrb[0].mxu0 %v2654
    %v2722 = vpop.f32.mrb[0].mxu0
    %v2723 = vadd.f32 0.0, %v2722
    %v2724 = vpop.f32.mrb[0].mxu0
    %2725 = vdwg.mxu0
    %v2726 = vadd.f32 %v2572, %v2723
    %s2727 = scalar_lea.vmem %s6, 32
    %v2728 = vld [vmem:[%s2727] sm:$0xff]
    %v2730 = vsel %vm533, %v2728, 0
    %2732 = vmatprep.subr.mxu0 0.0
    %2733 = vmatpush1.msra.mxu0 %v2111
    %2734 = vmatprep.subr.mxu0 0.0
    %2735 = vmatpush1.msra.mxu0 %v2112
    %2736 = vmatprep.subr.mxu0 0.0
    %2737 = vmatpush1.msra.mxu0 %v2113
    %2738 = vmatprep.subr.mxu0 0.0
    %2739 = vmatpush1.msra.mxu0 %v2114
    %2740 = vmatprep.subr.mxu0 0.0
    %2741 = vmatpush1.msra.mxu0 0.0
    %2742 = vmatprep.subr.mxu0 0.0
    %2743 = vmatpush1.msra.mxu0 0.0
    %2744 = vmatprep.subr.mxu0 0.0
    %2745 = vmatpush1.msra.mxu0 0.0
    %2746 = vmatprep.subr.mxu0 0.0
    %2747 = vmatpush1.msra.mxu0 0.0
    %2748 = vmatprep.subr.mxu0 0.0
    %2749 = vmatpush1.msra.mxu0 0.0
    %2750 = vmatprep.subr.mxu0 0.0
    %2751 = vmatpush1.msra.mxu0 0.0
    %2752 = vmatprep.subr.mxu0 0.0
    %2753 = vmatpush1.msra.mxu0 0.0
    %2754 = vmatprep.subr.mxu0 0.0
    %2755 = vmatpush1.msra.mxu0 0.0
    %2756 = vmatprep.subr.mxu0 0.0
    %2757 = vmatpush1.msra.mxu0 0.0
    %2758 = vmatprep.subr.mxu0 0.0
    %2759 = vmatpush1.msra.mxu0 0.0
    %2760 = vmatprep.subr.mxu0 0.0
    %2761 = vmatpush1.msra.mxu0 0.0
    %2762 = vmatprep.subr.mxu0 0.0
    %2763 = vmatpush1.msra.mxu0 0.0
    %2764 = vmatprep.subr.mxu0 0.0
    %2765 = vmatpush1.msra.mxu0 0.0
    %2766 = vmatprep.subr.mxu0 0.0
    %2767 = vmatpush1.msra.mxu0 0.0
    %2768 = vmatprep.subr.mxu0 0.0
    %2769 = vmatpush1.msra.mxu0 0.0
    %2770 = vmatprep.subr.mxu0 0.0
    %2771 = vmatpush1.msra.mxu0 0.0
    %2772 = vmatprep.subr.mxu0 0.0
    %2773 = vmatpush1.msra.mxu0 0.0
    %2774 = vmatprep.subr.mxu0 0.0
    %2775 = vmatpush1.msra.mxu0 0.0
    %2776 = vmatprep.subr.mxu0 0.0
    %2777 = vmatpush1.msra.mxu0 0.0
    %2778 = vmatprep.subr.mxu0 0.0
    %2779 = vmatpush1.msra.mxu0 0.0
    %2780 = vmatprep.subr.mxu0 0.0
    %2781 = vmatpush1.msra.mxu0 0.0
    %2782 = vmatprep.subr.mxu0 0.0
    %2783 = vmatpush1.msra.mxu0 0.0
    %2784 = vmatprep.subr.mxu0 0.0
    %2785 = vmatpush1.msra.mxu0 0.0
    %2786 = vmatprep.subr.mxu0 0.0
    %2787 = vmatpush1.msra.mxu0 0.0
    %2788 = vmatprep.subr.mxu0 0.0
    %2789 = vmatpush1.msra.mxu0 0.0
    %2790 = vmatprep.subr.mxu0 0.0
    %2791 = vmatpush1.msra.mxu0 0.0
    %2792 = vmatprep.subr.mxu0 0.0
    %2793 = vmatpush1.msra.mxu0 0.0
    %2794 = vmatprep.subr.mxu0 0.0
    %2795 = vmatpush1.msra.mxu0 0.0
    %2796 = vmatprep.mubr.f32.mxu0 0.0
    %2797 = vmatmul.mubr.f32.gmra.mrb[0].mxu0 %v2730
    %v2798 = vpop.f32.mrb[0].mxu0
    %v2799 = vadd.f32 0.0, %v2798
    %v2800 = vpop.f32.mrb[0].mxu0
    %2801 = vdwg.mxu0
    %s2802 = scalar_lea.vmem [#allocation5], 128
    %v2803 = vld [vmem:[%s2802] sm:$0xff]
    %v2804 = vld [vmem:[%s2802 + $0x8] sm:$0xff]
    %v2805 = vld [vmem:[%s2802 + $0x10] sm:$0xff]
    %v2806 = vld [vmem:[%s2802 + $0x18] sm:$0xff]
    %v2808 = vsel %vm533, %v2799, 0
    %2810 = vmatprep.subr.mxu0 0.0
    %2811 = vmatpush1.msra.mxu0 %v2803
    %2812 = vmatprep.subr.mxu0 0.0
    %2813 = vmatpush1.msra.mxu0 %v2804
    %2814 = vmatprep.subr.mxu0 0.0
    %2815 = vmatpush1.msra.mxu0 %v2805
    %2816 = vmatprep.subr.mxu0 0.0
    %2817 = vmatpush1.msra.mxu0 %v2806
    %2818 = vmatprep.subr.mxu0 0.0
    %2819 = vmatpush1.msra.mxu0 0.0
    %2820 = vmatprep.subr.mxu0 0.0
    %2821 = vmatpush1.msra.mxu0 0.0
    %2822 = vmatprep.subr.mxu0 0.0
    %2823 = vmatpush1.msra.mxu0 0.0
    %2824 = vmatprep.subr.mxu0 0.0
    %2825 = vmatpush1.msra.mxu0 0.0
    %2826 = vmatprep.subr.mxu0 0.0
    %2827 = vmatpush1.msra.mxu0 0.0
    %2828 = vmatprep.subr.mxu0 0.0
    %2829 = vmatpush1.msra.mxu0 0.0
    %2830 = vmatprep.subr.mxu0 0.0
    %2831 = vmatpush1.msra.mxu0 0.0
    %2832 = vmatprep.subr.mxu0 0.0
    %2833 = vmatpush1.msra.mxu0 0.0
    %2834 = vmatprep.subr.mxu0 0.0
    %2835 = vmatpush1.msra.mxu0 0.0
    %2836 = vmatprep.subr.mxu0 0.0
    %2837 = vmatpush1.msra.mxu0 0.0
    %2838 = vmatprep.subr.mxu0 0.0
    %2839 = vmatpush1.msra.mxu0 0.0
    %2840 = vmatprep.subr.mxu0 0.0
    %2841 = vmatpush1.msra.mxu0 0.0
    %2842 = vmatprep.subr.mxu0 0.0
    %2843 = vmatpush1.msra.mxu0 0.0
    %2844 = vmatprep.subr.mxu0 0.0
    %2845 = vmatpush1.msra.mxu0 0.0
    %2846 = vmatprep.subr.mxu0 0.0
    %2847 = vmatpush1.msra.mxu0 0.0
    %2848 = vmatprep.subr.mxu0 0.0
    %2849 = vmatpush1.msra.mxu0 0.0
    %2850 = vmatprep.subr.mxu0 0.0
    %2851 = vmatpush1.msra.mxu0 0.0
    %2852 = vmatprep.subr.mxu0 0.0
    %2853 = vmatpush1.msra.mxu0 0.0
    %2854 = vmatprep.subr.mxu0 0.0
    %2855 = vmatpush1.msra.mxu0 0.0
    %2856 = vmatprep.subr.mxu0 0.0
    %2857 = vmatpush1.msra.mxu0 0.0
    %2858 = vmatprep.subr.mxu0 0.0
    %2859 = vmatpush1.msra.mxu0 0.0
    %2860 = vmatprep.subr.mxu0 0.0
    %2861 = vmatpush1.msra.mxu0 0.0
    %2862 = vmatprep.subr.mxu0 0.0
    %2863 = vmatpush1.msra.mxu0 0.0
    %2864 = vmatprep.subr.mxu0 0.0
    %2865 = vmatpush1.msra.mxu0 0.0
    %2866 = vmatprep.subr.mxu0 0.0
    %2867 = vmatpush1.msra.mxu0 0.0
    %2868 = vmatprep.subr.mxu0 0.0
    %2869 = vmatpush1.msra.mxu0 0.0
    %2870 = vmatprep.subr.mxu0 0.0
    %2871 = vmatpush1.msra.mxu0 0.0
    %2872 = vmatprep.subr.mxu0 0.0
    %2873 = vmatpush1.msra.mxu0 0.0
    %2874 = vmatprep.mubr.f32.mxu0 0.0
    %2875 = vmatmul.mubr.f32.gmra.mrb[0].mxu0 %v2808
    %v2876 = vpop.f32.mrb[0].mxu0
    %v2877 = vadd.f32 0.0, %v2876
    %v2878 = vpop.f32.mrb[0].mxu0
    %2879 = vdwg.mxu0
    %v2880 = vadd.f32 %v2726, %v2877
    %s2881 = scalar_lea.vmem %s6, 40
    %v2882 = vld [vmem:[%s2881] sm:$0xff]
    %v2884 = vsel %vm533, %v2882, 0
    %2886 = vmatprep.subr.mxu0 0.0
    %2887 = vmatpush1.msra.mxu0 %v2111
    %2888 = vmatprep.subr.mxu0 0.0
    %2889 = vmatpush1.msra.mxu0 %v2112
    %2890 = vmatprep.subr.mxu0 0.0
    %2891 = vmatpush1.msra.mxu0 %v2113
    %2892 = vmatprep.subr.mxu0 0.0
    %2893 = vmatpush1.msra.mxu0 %v2114
    %2894 = vmatprep.subr.mxu0 0.0
    %2895 = vmatpush1.msra.mxu0 0.0
    %2896 = vmatprep.subr.mxu0 0.0
    %2897 = vmatpush1.msra.mxu0 0.0
    %2898 = vmatprep.subr.mxu0 0.0
    %2899 = vmatpush1.msra.mxu0 0.0
    %2900 = vmatprep.subr.mxu0 0.0
    %2901 = vmatpush1.msra.mxu0 0.0
    %2902 = vmatprep.subr.mxu0 0.0
    %2903 = vmatpush1.msra.mxu0 0.0
    %2904 = vmatprep.subr.mxu0 0.0
    %2905 = vmatpush1.msra.mxu0 0.0
    %2906 = vmatprep.subr.mxu0 0.0
    %2907 = vmatpush1.msra.mxu0 0.0
    %2908 = vmatprep.subr.mxu0 0.0
    %2909 = vmatpush1.msra.mxu0 0.0
    %2910 = vmatprep.subr.mxu0 0.0
    %2911 = vmatpush1.msra.mxu0 0.0
    %2912 = vmatprep.subr.mxu0 0.0
    %2913 = vmatpush1.msra.mxu0 0.0
    %2914 = vmatprep.subr.mxu0 0.0
    %2915 = vmatpush1.msra.mxu0 0.0
    %2916 = vmatprep.subr.mxu0 0.0
    %2917 = vmatpush1.msra.mxu0 0.0
    %2918 = vmatprep.subr.mxu0 0.0
    %2919 = vmatpush1.msra.mxu0 0.0
    %2920 = vmatprep.subr.mxu0 0.0
    %2921 = vmatpush1.msra.mxu0 0.0
    %2922 = vmatprep.subr.mxu0 0.0
    %2923 = vmatpush1.msra.mxu0 0.0
    %2924 = vmatprep.subr.mxu0 0.0
    %2925 = vmatpush1.msra.mxu0 0.0
    %2926 = vmatprep.subr.mxu0 0.0
    %2927 = vmatpush1.msra.mxu0 0.0
    %2928 = vmatprep.subr.mxu0 0.0
    %2929 = vmatpush1.msra.mxu0 0.0
    %2930 = vmatprep.subr.mxu0 0.0
    %2931 = vmatpush1.msra.mxu0 0.0
    %2932 = vmatprep.subr.mxu0 0.0
    %2933 = vmatpush1.msra.mxu0 0.0
    %2934 = vmatprep.subr.mxu0 0.0
    %2935 = vmatpush1.msra.mxu0 0.0
    %2936 = vmatprep.subr.mxu0 0.0
    %2937 = vmatpush1.msra.mxu0 0.0
    %2938 = vmatprep.subr.mxu0 0.0
    %2939 = vmatpush1.msra.mxu0 0.0
    %2940 = vmatprep.subr.mxu0 0.0
    %2941 = vmatpush1.msra.mxu0 0.0
    %2942 = vmatprep.subr.mxu0 0.0
    %2943 = vmatpush1.msra.mxu0 0.0
    %2944 = vmatprep.subr.mxu0 0.0
    %2945 = vmatpush1.msra.mxu0 0.0
    %2946 = vmatprep.subr.mxu0 0.0
    %2947 = vmatpush1.msra.mxu0 0.0
    %2948 = vmatprep.subr.mxu0 0.0
    %2949 = vmatpush1.msra.mxu0 0.0
    %2950 = vmatprep.mubr.f32.mxu0 0.0
    %2951 = vmatmul.mubr.f32.gmra.mrb[0].mxu0 %v2884
    %v2952 = vpop.f32.mrb[0].mxu0
    %v2953 = vadd.f32 0.0, %v2952
    %v2954 = vpop.f32.mrb[0].mxu0
    %2955 = vdwg.mxu0
    %s2956 = scalar_lea.vmem [#allocation5], 160
    %v2957 = vld [vmem:[%s2956] sm:$0xff]
    %v2958 = vld [vmem:[%s2956 + $0x8] sm:$0xff]
    %v2959 = vld [vmem:[%s2956 + $0x10] sm:$0xff]
    %v2960 = vld [vmem:[%s2956 + $0x18] sm:$0xff]
    %v2962 = vsel %vm533, %v2953, 0
    %2964 = vmatprep.subr.mxu0 0.0
    %2965 = vmatpush1.msra.mxu0 %v2957
    %2966 = vmatprep.subr.mxu0 0.0
    %2967 = vmatpush1.msra.mxu0 %v2958
    %2968 = vmatprep.subr.mxu0 0.0
    %2969 = vmatpush1.msra.mxu0 %v2959
    %2970 = vmatprep.subr.mxu0 0.0
    %2971 = vmatpush1.msra.mxu0 %v2960
    %2972 = vmatprep.subr.mxu0 0.0
    %2973 = vmatpush1.msra.mxu0 0.0
    %2974 = vmatprep.subr.mxu0 0.0
    %2975 = vmatpush1.msra.mxu0 0.0
    %2976 = vmatprep.subr.mxu0 0.0
    %2977 = vmatpush1.msra.mxu0 0.0
    %2978 = vmatprep.subr.mxu0 0.0
    %2979 = vmatpush1.msra.mxu0 0.0
    %2980 = vmatprep.subr.mxu0 0.0
    %2981 = vmatpush1.msra.mxu0 0.0
    %2982 = vmatprep.subr.mxu0 0.0
    %2983 = vmatpush1.msra.mxu0 0.0
    %2984 = vmatprep.subr.mxu0 0.0
    %2985 = vmatpush1.msra.mxu0 0.0
    %2986 = vmatprep.subr.mxu0 0.0
    %2987 = vmatpush1.msra.mxu0 0.0
    %2988 = vmatprep.subr.mxu0 0.0
    %2989 = vmatpush1.msra.mxu0 0.0
    %2990 = vmatprep.subr.mxu0 0.0
    %2991 = vmatpush1.msra.mxu0 0.0
    %2992 = vmatprep.subr.mxu0 0.0
    %2993 = vmatpush1.msra.mxu0 0.0
    %2994 = vmatprep.subr.mxu0 0.0
    %2995 = vmatpush1.msra.mxu0 0.0
    %2996 = vmatprep.subr.mxu0 0.0
    %2997 = vmatpush1.msra.mxu0 0.0
    %2998 = vmatprep.subr.mxu0 0.0
    %2999 = vmatpush1.msra.mxu0 0.0
    %3000 = vmatprep.subr.mxu0 0.0
    %3001 = vmatpush1.msra.mxu0 0.0
    %3002 = vmatprep.subr.mxu0 0.0
    %3003 = vmatpush1.msra.mxu0 0.0
    %3004 = vmatprep.subr.mxu0 0.0
    %3005 = vmatpush1.msra.mxu0 0.0
    %3006 = vmatprep.subr.mxu0 0.0
    %3007 = vmatpush1.msra.mxu0 0.0
    %3008 = vmatprep.subr.mxu0 0.0
    %3009 = vmatpush1.msra.mxu0 0.0
    %3010 = vmatprep.subr.mxu0 0.0
    %3011 = vmatpush1.msra.mxu0 0.0
    %3012 = vmatprep.subr.mxu0 0.0
    %3013 = vmatpush1.msra.mxu0 0.0
    %3014 = vmatprep.subr.mxu0 0.0
    %3015 = vmatpush1.msra.mxu0 0.0
    %3016 = vmatprep.subr.mxu0 0.0
    %3017 = vmatpush1.msra.mxu0 0.0
    %3018 = vmatprep.subr.mxu0 0.0
    %3019 = vmatpush1.msra.mxu0 0.0
    %3020 = vmatprep.subr.mxu0 0.0
    %3021 = vmatpush1.msra.mxu0 0.0
    %3022 = vmatprep.subr.mxu0 0.0
    %3023 = vmatpush1.msra.mxu0 0.0
    %3024 = vmatprep.subr.mxu0 0.0
    %3025 = vmatpush1.msra.mxu0 0.0
    %3026 = vmatprep.subr.mxu0 0.0
    %3027 = vmatpush1.msra.mxu0 0.0
    %3028 = vmatprep.mubr.f32.mxu0 0.0
    %3029 = vmatmul.mubr.f32.gmra.mrb[0].mxu0 %v2962
    %v3030 = vpop.f32.mrb[0].mxu0
    %v3031 = vadd.f32 0.0, %v3030
    %v3032 = vpop.f32.mrb[0].mxu0
    %3033 = vdwg.mxu0
    %v3034 = vadd.f32 %v2880, %v3031
    %s3035 = scalar_lea.vmem %s6, 48
    %v3036 = vld [vmem:[%s3035] sm:$0xff]
    %v3038 = vsel %vm533, %v3036, 0
    %3040 = vmatprep.subr.mxu0 0.0
    %3041 = vmatpush1.msra.mxu0 %v2111
    %3042 = vmatprep.subr.mxu0 0.0
    %3043 = vmatpush1.msra.mxu0 %v2112
    %3044 = vmatprep.subr.mxu0 0.0
    %3045 = vmatpush1.msra.mxu0 %v2113
    %3046 = vmatprep.subr.mxu0 0.0
    %3047 = vmatpush1.msra.mxu0 %v2114
    %3048 = vmatprep.subr.mxu0 0.0
    %3049 = vmatpush1.msra.mxu0 0.0
    %3050 = vmatprep.subr.mxu0 0.0
    %3051 = vmatpush1.msra.mxu0 0.0
    %3052 = vmatprep.subr.mxu0 0.0
    %3053 = vmatpush1.msra.mxu0 0.0
    %3054 = vmatprep.subr.mxu0 0.0
    %3055 = vmatpush1.msra.mxu0 0.0
    %3056 = vmatprep.subr.mxu0 0.0
    %3057 = vmatpush1.msra.mxu0 0.0
    %3058 = vmatprep.subr.mxu0 0.0
    %3059 = vmatpush1.msra.mxu0 0.0
    %3060 = vmatprep.subr.mxu0 0.0
    %3061 = vmatpush1.msra.mxu0 0.0
    %3062 = vmatprep.subr.mxu0 0.0
    %3063 = vmatpush1.msra.mxu0 0.0
    %3064 = vmatprep.subr.mxu0 0.0
    %3065 = vmatpush1.msra.mxu0 0.0
    %3066 = vmatprep.subr.mxu0 0.0
    %3067 = vmatpush1.msra.mxu0 0.0
    %3068 = vmatprep.subr.mxu0 0.0
    %3069 = vmatpush1.msra.mxu0 0.0
    %3070 = vmatprep.subr.mxu0 0.0
    %3071 = vmatpush1.msra.mxu0 0.0
    %3072 = vmatprep.subr.mxu0 0.0
    %3073 = vmatpush1.msra.mxu0 0.0
    %3074 = vmatprep.subr.mxu0 0.0
    %3075 = vmatpush1.msra.mxu0 0.0
    %3076 = vmatprep.subr.mxu0 0.0
    %3077 = vmatpush1.msra.mxu0 0.0
    %3078 = vmatprep.subr.mxu0 0.0
    %3079 = vmatpush1.msra.mxu0 0.0
    %3080 = vmatprep.subr.mxu0 0.0
    %3081 = vmatpush1.msra.mxu0 0.0
    %3082 = vmatprep.subr.mxu0 0.0
    %3083 = vmatpush1.msra.mxu0 0.0
    %3084 = vmatprep.subr.mxu0 0.0
    %3085 = vmatpush1.msra.mxu0 0.0
    %3086 = vmatprep.subr.mxu0 0.0
    %3087 = vmatpush1.msra.mxu0 0.0
    %3088 = vmatprep.subr.mxu0 0.0
    %3089 = vmatpush1.msra.mxu0 0.0
    %3090 = vmatprep.subr.mxu0 0.0
    %3091 = vmatpush1.msra.mxu0 0.0
    %3092 = vmatprep.subr.mxu0 0.0
    %3093 = vmatpush1.msra.mxu0 0.0
    %3094 = vmatprep.subr.mxu0 0.0
    %3095 = vmatpush1.msra.mxu0 0.0
    %3096 = vmatprep.subr.mxu0 0.0
    %3097 = vmatpush1.msra.mxu0 0.0
    %3098 = vmatprep.subr.mxu0 0.0
    %3099 = vmatpush1.msra.mxu0 0.0
    %3100 = vmatprep.subr.mxu0 0.0
    %3101 = vmatpush1.msra.mxu0 0.0
    %3102 = vmatprep.subr.mxu0 0.0
    %3103 = vmatpush1.msra.mxu0 0.0
    %3104 = vmatprep.mubr.f32.mxu0 0.0
    %3105 = vmatmul.mubr.f32.gmra.mrb[0].mxu0 %v3038
    %v3106 = vpop.f32.mrb[0].mxu0
    %v3107 = vadd.f32 0.0, %v3106
    %v3108 = vpop.f32.mrb[0].mxu0
    %3109 = vdwg.mxu0
    %s3110 = scalar_lea.vmem [#allocation5], 192
    %v3111 = vld [vmem:[%s3110] sm:$0xff]
    %v3112 = vld [vmem:[%s3110 + $0x8] sm:$0xff]
    %v3113 = vld [vmem:[%s3110 + $0x10] sm:$0xff]
    %v3114 = vld [vmem:[%s3110 + $0x18] sm:$0xff]
    %v3116 = vsel %vm533, %v3107, 0
    %3118 = vmatprep.subr.mxu0 0.0
    %3119 = vmatpush1.msra.mxu0 %v3111
    %3120 = vmatprep.subr.mxu0 0.0
    %3121 = vmatpush1.msra.mxu0 %v3112
    %3122 = vmatprep.subr.mxu0 0.0
    %3123 = vmatpush1.msra.mxu0 %v3113
    %3124 = vmatprep.subr.mxu0 0.0
    %3125 = vmatpush1.msra.mxu0 %v3114
    %3126 = vmatprep.subr.mxu0 0.0
    %3127 = vmatpush1.msra.mxu0 0.0
    %3128 = vmatprep.subr.mxu0 0.0
    %3129 = vmatpush1.msra.mxu0 0.0
    %3130 = vmatprep.subr.mxu0 0.0
    %3131 = vmatpush1.msra.mxu0 0.0
    %3132 = vmatprep.subr.mxu0 0.0
    %3133 = vmatpush1.msra.mxu0 0.0
    %3134 = vmatprep.subr.mxu0 0.0
    %3135 = vmatpush1.msra.mxu0 0.0
    %3136 = vmatprep.subr.mxu0 0.0
    %3137 = vmatpush1.msra.mxu0 0.0
    %3138 = vmatprep.subr.mxu0 0.0
    %3139 = vmatpush1.msra.mxu0 0.0
    %3140 = vmatprep.subr.mxu0 0.0
    %3141 = vmatpush1.msra.mxu0 0.0
    %3142 = vmatprep.subr.mxu0 0.0
    %3143 = vmatpush1.msra.mxu0 0.0
    %3144 = vmatprep.subr.mxu0 0.0
    %3145 = vmatpush1.msra.mxu0 0.0
    %3146 = vmatprep.subr.mxu0 0.0
    %3147 = vmatpush1.msra.mxu0 0.0
    %3148 = vmatprep.subr.mxu0 0.0
    %3149 = vmatpush1.msra.mxu0 0.0
    %3150 = vmatprep.subr.mxu0 0.0
    %3151 = vmatpush1.msra.mxu0 0.0
    %3152 = vmatprep.subr.mxu0 0.0
    %3153 = vmatpush1.msra.mxu0 0.0
    %3154 = vmatprep.subr.mxu0 0.0
    %3155 = vmatpush1.msra.mxu0 0.0
    %3156 = vmatprep.subr.mxu0 0.0
    %3157 = vmatpush1.msra.mxu0 0.0
    %3158 = vmatprep.subr.mxu0 0.0
    %3159 = vmatpush1.msra.mxu0 0.0
    %3160 = vmatprep.subr.mxu0 0.0
    %3161 = vmatpush1.msra.mxu0 0.0
    %3162 = vmatprep.subr.mxu0 0.0
    %3163 = vmatpush1.msra.mxu0 0.0
    %3164 = vmatprep.subr.mxu0 0.0
    %3165 = vmatpush1.msra.mxu0 0.0
    %3166 = vmatprep.subr.mxu0 0.0
    %3167 = vmatpush1.msra.mxu0 0.0
    %3168 = vmatprep.subr.mxu0 0.0
    %3169 = vmatpush1.msra.mxu0 0.0
    %3170 = vmatprep.subr.mxu0 0.0
    %3171 = vmatpush1.msra.mxu0 0.0
    %3172 = vmatprep.subr.mxu0 0.0
    %3173 = vmatpush1.msra.mxu0 0.0
    %3174 = vmatprep.subr.mxu0 0.0
    %3175 = vmatpush1.msra.mxu0 0.0
    %3176 = vmatprep.subr.mxu0 0.0
    %3177 = vmatpush1.msra.mxu0 0.0
    %3178 = vmatprep.subr.mxu0 0.0
    %3179 = vmatpush1.msra.mxu0 0.0
    %3180 = vmatprep.subr.mxu0 0.0
    %3181 = vmatpush1.msra.mxu0 0.0
    %3182 = vmatprep.mubr.f32.mxu0 0.0
    %3183 = vmatmul.mubr.f32.gmra.mrb[0].mxu0 %v3116
    %v3184 = vpop.f32.mrb[0].mxu0
    %v3185 = vadd.f32 0.0, %v3184
    %v3186 = vpop.f32.mrb[0].mxu0
    %3187 = vdwg.mxu0
    %v3188 = vadd.f32 %v3034, %v3185
    %s3189 = scalar_lea.vmem %s6, 56
    %v3190 = vld [vmem:[%s3189] sm:$0xff]
    %v3192 = vsel %vm533, %v3190, 0
    %3194 = vmatprep.subr.mxu0 0.0
    %3195 = vmatpush1.msra.mxu0 %v2111
    %3196 = vmatprep.subr.mxu0 0.0
    %3197 = vmatpush1.msra.mxu0 %v2112
    %3198 = vmatprep.subr.mxu0 0.0
    %3199 = vmatpush1.msra.mxu0 %v2113
    %3200 = vmatprep.subr.mxu0 0.0
    %3201 = vmatpush1.msra.mxu0 %v2114
    %3202 = vmatprep.subr.mxu0 0.0
    %3203 = vmatpush1.msra.mxu0 0.0
    %3204 = vmatprep.subr.mxu0 0.0
    %3205 = vmatpush1.msra.mxu0 0.0
    %3206 = vmatprep.subr.mxu0 0.0
    %3207 = vmatpush1.msra.mxu0 0.0
    %3208 = vmatprep.subr.mxu0 0.0
    %3209 = vmatpush1.msra.mxu0 0.0
    %3210 = vmatprep.subr.mxu0 0.0
    %3211 = vmatpush1.msra.mxu0 0.0
    %3212 = vmatprep.subr.mxu0 0.0
    %3213 = vmatpush1.msra.mxu0 0.0
    %3214 = vmatprep.subr.mxu0 0.0
    %3215 = vmatpush1.msra.mxu0 0.0
    %3216 = vmatprep.subr.mxu0 0.0
    %3217 = vmatpush1.msra.mxu0 0.0
    %3218 = vmatprep.subr.mxu0 0.0
    %3219 = vmatpush1.msra.mxu0 0.0
    %3220 = vmatprep.subr.mxu0 0.0
    %3221 = vmatpush1.msra.mxu0 0.0
    %3222 = vmatprep.subr.mxu0 0.0
    %3223 = vmatpush1.msra.mxu0 0.0
    %3224 = vmatprep.subr.mxu0 0.0
    %3225 = vmatpush1.msra.mxu0 0.0
    %3226 = vmatprep.subr.mxu0 0.0
    %3227 = vmatpush1.msra.mxu0 0.0
    %3228 = vmatprep.subr.mxu0 0.0
    %3229 = vmatpush1.msra.mxu0 0.0
    %3230 = vmatprep.subr.mxu0 0.0
    %3231 = vmatpush1.msra.mxu0 0.0
    %3232 = vmatprep.subr.mxu0 0.0
    %3233 = vmatpush1.msra.mxu0 0.0
    %3234 = vmatprep.subr.mxu0 0.0
    %3235 = vmatpush1.msra.mxu0 0.0
    %3236 = vmatprep.subr.mxu0 0.0
    %3237 = vmatpush1.msra.mxu0 0.0
    %3238 = vmatprep.subr.mxu0 0.0
    %3239 = vmatpush1.msra.mxu0 0.0
    %3240 = vmatprep.subr.mxu0 0.0
    %3241 = vmatpush1.msra.mxu0 0.0
    %3242 = vmatprep.subr.mxu0 0.0
    %3243 = vmatpush1.msra.mxu0 0.0
    %3244 = vmatprep.subr.mxu0 0.0
    %3245 = vmatpush1.msra.mxu0 0.0
    %3246 = vmatprep.subr.mxu0 0.0
    %3247 = vmatpush1.msra.mxu0 0.0
    %3248 = vmatprep.subr.mxu0 0.0
    %3249 = vmatpush1.msra.mxu0 0.0
    %3250 = vmatprep.subr.mxu0 0.0
    %3251 = vmatpush1.msra.mxu0 0.0
    %3252 = vmatprep.subr.mxu0 0.0
    %3253 = vmatpush1.msra.mxu0 0.0
    %3254 = vmatprep.subr.mxu0 0.0
    %3255 = vmatpush1.msra.mxu0 0.0
    %3256 = vmatprep.subr.mxu0 0.0
    %3257 = vmatpush1.msra.mxu0 0.0
    %3258 = vmatprep.mubr.f32.mxu0 0.0
    %3259 = vmatmul.mubr.f32.gmra.mrb[0].mxu0 %v3192
    %v3260 = vpop.f32.mrb[0].mxu0
    %v3261 = vadd.f32 0.0, %v3260
    %v3262 = vpop.f32.mrb[0].mxu0
    %3263 = vdwg.mxu0
    %s3264 = scalar_lea.vmem [#allocation5], 224
    %v3265 = vld [vmem:[%s3264] sm:$0xff]
    %v3266 = vld [vmem:[%s3264 + $0x8] sm:$0xff]
    %v3267 = vld [vmem:[%s3264 + $0x10] sm:$0xff]
    %v3268 = vld [vmem:[%s3264 + $0x18] sm:$0xff]
    %v3270 = vsel %vm533, %v3261, 0
    %3272 = vmatprep.subr.mxu0 0.0
    %3273 = vmatpush1.msra.mxu0 %v3265
    %3274 = vmatprep.subr.mxu0 0.0
    %3275 = vmatpush1.msra.mxu0 %v3266
    %3276 = vmatprep.subr.mxu0 0.0
    %3277 = vmatpush1.msra.mxu0 %v3267
    %3278 = vmatprep.subr.mxu0 0.0
    %3279 = vmatpush1.msra.mxu0 %v3268
    %3280 = vmatprep.subr.mxu0 0.0
    %3281 = vmatpush1.msra.mxu0 0.0
    %3282 = vmatprep.subr.mxu0 0.0
    %3283 = vmatpush1.msra.mxu0 0.0
    %3284 = vmatprep.subr.mxu0 0.0
    %3285 = vmatpush1.msra.mxu0 0.0
    %3286 = vmatprep.subr.mxu0 0.0
    %3287 = vmatpush1.msra.mxu0 0.0
    %3288 = vmatprep.subr.mxu0 0.0
    %3289 = vmatpush1.msra.mxu0 0.0
    %3290 = vmatprep.subr.mxu0 0.0
    %3291 = vmatpush1.msra.mxu0 0.0
    %3292 = vmatprep.subr.mxu0 0.0
    %3293 = vmatpush1.msra.mxu0 0.0
    %3294 = vmatprep.subr.mxu0 0.0
    %3295 = vmatpush1.msra.mxu0 0.0
    %3296 = vmatprep.subr.mxu0 0.0
    %3297 = vmatpush1.msra.mxu0 0.0
    %3298 = vmatprep.subr.mxu0 0.0
    %3299 = vmatpush1.msra.mxu0 0.0
    %3300 = vmatprep.subr.mxu0 0.0
    %3301 = vmatpush1.msra.mxu0 0.0
    %3302 = vmatprep.subr.mxu0 0.0
    %3303 = vmatpush1.msra.mxu0 0.0
    %3304 = vmatprep.subr.mxu0 0.0
    %3305 = vmatpush1.msra.mxu0 0.0
    %3306 = vmatprep.subr.mxu0 0.0
    %3307 = vmatpush1.msra.mxu0 0.0
    %3308 = vmatprep.subr.mxu0 0.0
    %3309 = vmatpush1.msra.mxu0 0.0
    %3310 = vmatprep.subr.mxu0 0.0
    %3311 = vmatpush1.msra.mxu0 0.0
    %3312 = vmatprep.subr.mxu0 0.0
    %3313 = vmatpush1.msra.mxu0 0.0
    %3314 = vmatprep.subr.mxu0 0.0
    %3315 = vmatpush1.msra.mxu0 0.0
    %3316 = vmatprep.subr.mxu0 0.0
    %3317 = vmatpush1.msra.mxu0 0.0
    %3318 = vmatprep.subr.mxu0 0.0
    %3319 = vmatpush1.msra.mxu0 0.0
    %3320 = vmatprep.subr.mxu0 0.0
    %3321 = vmatpush1.msra.mxu0 0.0
    %3322 = vmatprep.subr.mxu0 0.0
    %3323 = vmatpush1.msra.mxu0 0.0
    %3324 = vmatprep.subr.mxu0 0.0
    %3325 = vmatpush1.msra.mxu0 0.0
    %3326 = vmatprep.subr.mxu0 0.0
    %3327 = vmatpush1.msra.mxu0 0.0
    %3328 = vmatprep.subr.mxu0 0.0
    %3329 = vmatpush1.msra.mxu0 0.0
    %3330 = vmatprep.subr.mxu0 0.0
    %3331 = vmatpush1.msra.mxu0 0.0
    %3332 = vmatprep.subr.mxu0 0.0
    %3333 = vmatpush1.msra.mxu0 0.0
    %3334 = vmatprep.subr.mxu0 0.0
    %3335 = vmatpush1.msra.mxu0 0.0
    %3336 = vmatprep.mubr.f32.mxu0 0.0
    %3337 = vmatmul.mubr.f32.gmra.mrb[0].mxu0 %v3270
    %v3338 = vpop.f32.mrb[0].mxu0
    %v3339 = vadd.f32 0.0, %v3338
    %v3340 = vpop.f32.mrb[0].mxu0
    %3341 = vdwg.mxu0
    %v3342 = vadd.f32 %v3188, %v3339
    %s3343 = scalar_lea.vmem %s6, 64
    %v3344 = vld [vmem:[%s3343] sm:$0xff]
    %v3346 = vsel %vm533, %v3344, 0
    %3348 = vmatprep.subr.mxu0 0.0
    %3349 = vmatpush1.msra.mxu0 %v2111
    %3350 = vmatprep.subr.mxu0 0.0
    %3351 = vmatpush1.msra.mxu0 %v2112
    %3352 = vmatprep.subr.mxu0 0.0
    %3353 = vmatpush1.msra.mxu0 %v2113
    %3354 = vmatprep.subr.mxu0 0.0
    %3355 = vmatpush1.msra.mxu0 %v2114
    %3356 = vmatprep.subr.mxu0 0.0
    %3357 = vmatpush1.msra.mxu0 0.0
    %3358 = vmatprep.subr.mxu0 0.0
    %3359 = vmatpush1.msra.mxu0 0.0
    %3360 = vmatprep.subr.mxu0 0.0
    %3361 = vmatpush1.msra.mxu0 0.0
    %3362 = vmatprep.subr.mxu0 0.0
    %3363 = vmatpush1.msra.mxu0 0.0
    %3364 = vmatprep.subr.mxu0 0.0
    %3365 = vmatpush1.msra.mxu0 0.0
    %3366 = vmatprep.subr.mxu0 0.0
    %3367 = vmatpush1.msra.mxu0 0.0
    %3368 = vmatprep.subr.mxu0 0.0
    %3369 = vmatpush1.msra.mxu0 0.0
    %3370 = vmatprep.subr.mxu0 0.0
    %3371 = vmatpush1.msra.mxu0 0.0
    %3372 = vmatprep.subr.mxu0 0.0
    %3373 = vmatpush1.msra.mxu0 0.0
    %3374 = vmatprep.subr.mxu0 0.0
    %3375 = vmatpush1.msra.mxu0 0.0
    %3376 = vmatprep.subr.mxu0 0.0
    %3377 = vmatpush1.msra.mxu0 0.0
    %3378 = vmatprep.subr.mxu0 0.0
    %3379 = vmatpush1.msra.mxu0 0.0
    %3380 = vmatprep.subr.mxu0 0.0
    %3381 = vmatpush1.msra.mxu0 0.0
    %3382 = vmatprep.subr.mxu0 0.0
    %3383 = vmatpush1.msra.mxu0 0.0
    %3384 = vmatprep.subr.mxu0 0.0
    %3385 = vmatpush1.msra.mxu0 0.0
    %3386 = vmatprep.subr.mxu0 0.0
    %3387 = vmatpush1.msra.mxu0 0.0
    %3388 = vmatprep.subr.mxu0 0.0
    %3389 = vmatpush1.msra.mxu0 0.0
    %3390 = vmatprep.subr.mxu0 0.0
    %3391 = vmatpush1.msra.mxu0 0.0
    %3392 = vmatprep.subr.mxu0 0.0
    %3393 = vmatpush1.msra.mxu0 0.0
    %3394 = vmatprep.subr.mxu0 0.0
    %3395 = vmatpush1.msra.mxu0 0.0
    %3396 = vmatprep.subr.mxu0 0.0
    %3397 = vmatpush1.msra.mxu0 0.0
    %3398 = vmatprep.subr.mxu0 0.0
    %3399 = vmatpush1.msra.mxu0 0.0
    %3400 = vmatprep.subr.mxu0 0.0
    %3401 = vmatpush1.msra.mxu0 0.0
    %3402 = vmatprep.subr.mxu0 0.0
    %3403 = vmatpush1.msra.mxu0 0.0
    %3404 = vmatprep.subr.mxu0 0.0
    %3405 = vmatpush1.msra.mxu0 0.0
    %3406 = vmatprep.subr.mxu0 0.0
    %3407 = vmatpush1.msra.mxu0 0.0
    %3408 = vmatprep.subr.mxu0 0.0
    %3409 = vmatpush1.msra.mxu0 0.0
    %3410 = vmatprep.subr.mxu0 0.0
    %3411 = vmatpush1.msra.mxu0 0.0
    %3412 = vmatprep.mubr.f32.mxu0 0.0
    %3413 = vmatmul.mubr.f32.gmra.mrb[0].mxu0 %v3346
    %v3414 = vpop.f32.mrb[0].mxu0
    %v3415 = vadd.f32 0.0, %v3414
    %v3416 = vpop.f32.mrb[0].mxu0
    %3417 = vdwg.mxu0
    %s3418 = scalar_lea.vmem [#allocation5], 256
    %v3419 = vld [vmem:[%s3418] sm:$0xff]
    %v3420 = vld [vmem:[%s3418 + $0x8] sm:$0xff]
    %v3421 = vld [vmem:[%s3418 + $0x10] sm:$0xff]
    %v3422 = vld [vmem:[%s3418 + $0x18] sm:$0xff]
    %v3424 = vsel %vm533, %v3415, 0
    %3426 = vmatprep.subr.mxu0 0.0
    %3427 = vmatpush1.msra.mxu0 %v3419
    %3428 = vmatprep.subr.mxu0 0.0
    %3429 = vmatpush1.msra.mxu0 %v3420
    %3430 = vmatprep.subr.mxu0 0.0
    %3431 = vmatpush1.msra.mxu0 %v3421
    %3432 = vmatprep.subr.mxu0 0.0
    %3433 = vmatpush1.msra.mxu0 %v3422
    %3434 = vmatprep.subr.mxu0 0.0
    %3435 = vmatpush1.msra.mxu0 0.0
    %3436 = vmatprep.subr.mxu0 0.0
    %3437 = vmatpush1.msra.mxu0 0.0
    %3438 = vmatprep.subr.mxu0 0.0
    %3439 = vmatpush1.msra.mxu0 0.0
    %3440 = vmatprep.subr.mxu0 0.0
    %3441 = vmatpush1.msra.mxu0 0.0
    %3442 = vmatprep.subr.mxu0 0.0
    %3443 = vmatpush1.msra.mxu0 0.0
    %3444 = vmatprep.subr.mxu0 0.0
    %3445 = vmatpush1.msra.mxu0 0.0
    %3446 = vmatprep.subr.mxu0 0.0
    %3447 = vmatpush1.msra.mxu0 0.0
    %3448 = vmatprep.subr.mxu0 0.0
    %3449 = vmatpush1.msra.mxu0 0.0
    %3450 = vmatprep.subr.mxu0 0.0
    %3451 = vmatpush1.msra.mxu0 0.0
    %3452 = vmatprep.subr.mxu0 0.0
    %3453 = vmatpush1.msra.mxu0 0.0
    %3454 = vmatprep.subr.mxu0 0.0
    %3455 = vmatpush1.msra.mxu0 0.0
    %3456 = vmatprep.subr.mxu0 0.0
    %3457 = vmatpush1.msra.mxu0 0.0
    %3458 = vmatprep.subr.mxu0 0.0
    %3459 = vmatpush1.msra.mxu0 0.0
    %3460 = vmatprep.subr.mxu0 0.0
    %3461 = vmatpush1.msra.mxu0 0.0
    %3462 = vmatprep.subr.mxu0 0.0
    %3463 = vmatpush1.msra.mxu0 0.0
    %3464 = vmatprep.subr.mxu0 0.0
    %3465 = vmatpush1.msra.mxu0 0.0
    %3466 = vmatprep.subr.mxu0 0.0
    %3467 = vmatpush1.msra.mxu0 0.0
    %3468 = vmatprep.subr.mxu0 0.0
    %3469 = vmatpush1.msra.mxu0 0.0
    %3470 = vmatprep.subr.mxu0 0.0
    %3471 = vmatpush1.msra.mxu0 0.0
    %3472 = vmatprep.subr.mxu0 0.0
    %3473 = vmatpush1.msra.mxu0 0.0
    %3474 = vmatprep.subr.mxu0 0.0
    %3475 = vmatpush1.msra.mxu0 0.0
    %3476 = vmatprep.subr.mxu0 0.0
    %3477 = vmatpush1.msra.mxu0 0.0
    %3478 = vmatprep.subr.mxu0 0.0
    %3479 = vmatpush1.msra.mxu0 0.0
    %3480 = vmatprep.subr.mxu0 0.0
    %3481 = vmatpush1.msra.mxu0 0.0
    %3482 = vmatprep.subr.mxu0 0.0
    %3483 = vmatpush1.msra.mxu0 0.0
    %3484 = vmatprep.subr.mxu0 0.0
    %3485 = vmatpush1.msra.mxu0 0.0
    %3486 = vmatprep.subr.mxu0 0.0
    %3487 = vmatpush1.msra.mxu0 0.0
    %3488 = vmatprep.subr.mxu0 0.0
    %3489 = vmatpush1.msra.mxu0 0.0
    %3490 = vmatprep.mubr.f32.mxu0 0.0
    %3491 = vmatmul.mubr.f32.gmra.mrb[0].mxu0 %v3424
    %v3492 = vpop.f32.mrb[0].mxu0
    %v3493 = vadd.f32 0.0, %v3492
    %v3494 = vpop.f32.mrb[0].mxu0
    %3495 = vdwg.mxu0
    %v3496 = vadd.f32 %v3342, %v3493
    %v3497 = vld [vmem:[%s8] sm:$0x1]
    %v3499 = vlaneseq
    %v3500 = vshrl.u32 %v3499, 7
    %v3501 = vsub.s32 0, %v3500
    %v3502 = vrot.slane %v3497, %v3501
    %v3504 = vadd.f32 %v3496, %v3502
    %v3505 = vmax.f32 %v3504, 0.0
    %v3506 = vld [vmem:[%s9] sm:$0xff]
    %v3507 = vld [vmem:[%s9 + $0x8] sm:$0xff]
    %v3508 = vld [vmem:[%s9 + $0x10] sm:$0xff]
    %v3509 = vld [vmem:[%s9 + $0x18] sm:$0xff]
    %v3510 = vld [vmem:[%s9 + $0x20] sm:$0xff]
    %v3511 = vld [vmem:[%s9 + $0x28] sm:$0xff]
    %v3512 = vld [vmem:[%s9 + $0x30] sm:$0xff]
    %v3513 = vld [vmem:[%s9 + $0x38] sm:$0xff]
    %v3514 = vld [vmem:[%s9 + $0x40] sm:$0xff]
    %v3515 = vld [vmem:[%s9 + $0x48] sm:$0xff]
    %v3516 = vld [vmem:[%s9 + $0x50] sm:$0xff]
    %v3517 = vld [vmem:[%s9 + $0x58] sm:$0xff]
    %v3518 = vld [vmem:[%s9 + $0x60] sm:$0xff]
    %v3519 = vld [vmem:[%s9 + $0x68] sm:$0xff]
    %v3520 = vld [vmem:[%s9 + $0x70] sm:$0xff]
    %v3521 = vld [vmem:[%s9 + $0x78] sm:$0xff]
    %s3522 = scalar_lea.vmem %s9, 128
    %v3523 = vld [vmem:[%s3522] sm:$0xff]
    %v3524 = vld [vmem:[%s3522 + $0x8] sm:$0xff]
    %v3525 = vld [vmem:[%s3522 + $0x10] sm:$0xff]
    %v3526 = vld [vmem:[%s3522 + $0x18] sm:$0xff]
    %v3527 = vld [vmem:[%s3522 + $0x20] sm:$0xff]
    %v3528 = vld [vmem:[%s3522 + $0x28] sm:$0xff]
    %v3529 = vld [vmem:[%s3522 + $0x30] sm:$0xff]
    %v3530 = vld [vmem:[%s3522 + $0x38] sm:$0xff]
    %v3531 = vld [vmem:[%s3522 + $0x40] sm:$0xff]
    %v3532 = vld [vmem:[%s3522 + $0x48] sm:$0xff]
    %v3533 = vld [vmem:[%s3522 + $0x50] sm:$0xff]
    %v3534 = vld [vmem:[%s3522 + $0x58] sm:$0xff]
    %v3535 = vld [vmem:[%s3522 + $0x60] sm:$0xff]
    %v3536 = vld [vmem:[%s3522 + $0x68] sm:$0xff]
    %v3537 = vld [vmem:[%s3522 + $0x70] sm:$0xff]
    %v3538 = vld [vmem:[%s3522 + $0x78] sm:$0xff]
    %v3540 = vrot.slane %v3505, 2
    %v3541 = vsel %vm533, %v3540, 0
    %3543 = vmatprep.subr.mxu0 %v3524
    %3544 = vmatpush1.msra.mxu0 %v3523
    %3545 = vmatprep.subr.mxu0 %v3528
    %3546 = vmatpush1.msra.mxu0 %v3527
    %3547 = vmatprep.subr.mxu0 %v3532
    %3548 = vmatpush1.msra.mxu0 %v3531
    %3549 = vmatprep.subr.mxu0 %v3536
    %3550 = vmatpush1.msra.mxu0 %v3535
    %3551 = vmatprep.subr.mxu0 0.0
    %3552 = vmatpush1.msra.mxu0 0.0
    %3553 = vmatprep.subr.mxu0 0.0
    %3554 = vmatpush1.msra.mxu0 0.0
    %3555 = vmatprep.subr.mxu0 0.0
    %3556 = vmatpush1.msra.mxu0 0.0
    %3557 = vmatprep.subr.mxu0 0.0
    %3558 = vmatpush1.msra.mxu0 0.0
    %3559 = vmatprep.subr.mxu0 0.0
    %3560 = vmatpush1.msra.mxu0 0.0
    %3561 = vmatprep.subr.mxu0 0.0
    %3562 = vmatpush1.msra.mxu0 0.0
    %3563 = vmatprep.subr.mxu0 0.0
    %3564 = vmatpush1.msra.mxu0 0.0
    %3565 = vmatprep.subr.mxu0 0.0
    %3566 = vmatpush1.msra.mxu0 0.0
    %3567 = vmatprep.subr.mxu0 0.0
    %3568 = vmatpush1.msra.mxu0 0.0
    %3569 = vmatprep.subr.mxu0 0.0
    %3570 = vmatpush1.msra.mxu0 0.0
    %3571 = vmatprep.subr.mxu0 0.0
    %3572 = vmatpush1.msra.mxu0 0.0
    %3573 = vmatprep.subr.mxu0 0.0
    %3574 = vmatpush1.msra.mxu0 0.0
    %3575 = vmatprep.subr.mxu0 0.0
    %3576 = vmatpush1.msra.mxu0 0.0
    %3577 = vmatprep.subr.mxu0 0.0
    %3578 = vmatpush1.msra.mxu0 0.0
    %3579 = vmatprep.subr.mxu0 0.0
    %3580 = vmatpush1.msra.mxu0 0.0
    %3581 = vmatprep.subr.mxu0 0.0
    %3582 = vmatpush1.msra.mxu0 0.0
    %3583 = vmatprep.subr.mxu0 0.0
    %3584 = vmatpush1.msra.mxu0 0.0
    %3585 = vmatprep.subr.mxu0 0.0
    %3586 = vmatpush1.msra.mxu0 0.0
    %3587 = vmatprep.subr.mxu0 0.0
    %3588 = vmatpush1.msra.mxu0 0.0
    %3589 = vmatprep.subr.mxu0 0.0
    %3590 = vmatpush1.msra.mxu0 0.0
    %3591 = vmatprep.subr.mxu0 0.0
    %3592 = vmatpush1.msra.mxu0 0.0
    %3593 = vmatprep.subr.mxu0 0.0
    %3594 = vmatpush1.msra.mxu0 0.0
    %3595 = vmatprep.subr.mxu0 0.0
    %3596 = vmatpush1.msra.mxu0 0.0
    %3597 = vmatprep.subr.mxu0 0.0
    %3598 = vmatpush1.msra.mxu0 0.0
    %3599 = vmatprep.subr.mxu0 0.0
    %3600 = vmatpush1.msra.mxu0 0.0
    %3601 = vmatprep.subr.mxu0 0.0
    %3602 = vmatpush1.msra.mxu0 0.0
    %3603 = vmatprep.subr.mxu0 0.0
    %3604 = vmatpush1.msra.mxu0 0.0
    %3605 = vmatprep.subr.mxu0 0.0
    %3606 = vmatpush1.msra.mxu0 0.0
    %3607 = vmatprep.mubr.f32.mxu0 0.0
    %3608 = vmatmul.mubr.f32.gmra.mrb[0].mxu0 %v3541
    %v3609 = vpop.f32.mrb[0].mxu0
    %v3610 = vadd.f32 0.0, %v3609
    %v3611 = vpop.f32.mrb[0].mxu0
    %v3612 = vadd.f32 0.0, %v3611
    %3613 = vdwg.mxu0
    %3614 = vmatprep.subr.mxu0 %v3526
    %3615 = vmatpush1.msra.mxu0 %v3525
    %3616 = vmatprep.subr.mxu0 %v3530
    %3617 = vmatpush1.msra.mxu0 %v3529
    %3618 = vmatprep.subr.mxu0 %v3534
    %3619 = vmatpush1.msra.mxu0 %v3533
    %3620 = vmatprep.subr.mxu0 %v3538
    %3621 = vmatpush1.msra.mxu0 %v3537
    %3622 = vmatprep.subr.mxu0 0.0
    %3623 = vmatpush1.msra.mxu0 0.0
    %3624 = vmatprep.subr.mxu0 0.0
    %3625 = vmatpush1.msra.mxu0 0.0
    %3626 = vmatprep.subr.mxu0 0.0
    %3627 = vmatpush1.msra.mxu0 0.0
    %3628 = vmatprep.subr.mxu0 0.0
    %3629 = vmatpush1.msra.mxu0 0.0
    %3630 = vmatprep.subr.mxu0 0.0
    %3631 = vmatpush1.msra.mxu0 0.0
    %3632 = vmatprep.subr.mxu0 0.0
    %3633 = vmatpush1.msra.mxu0 0.0
    %3634 = vmatprep.subr.mxu0 0.0
    %3635 = vmatpush1.msra.mxu0 0.0
    %3636 = vmatprep.subr.mxu0 0.0
    %3637 = vmatpush1.msra.mxu0 0.0
    %3638 = vmatprep.subr.mxu0 0.0
    %3639 = vmatpush1.msra.mxu0 0.0
    %3640 = vmatprep.subr.mxu0 0.0
    %3641 = vmatpush1.msra.mxu0 0.0
    %3642 = vmatprep.subr.mxu0 0.0
    %3643 = vmatpush1.msra.mxu0 0.0
    %3644 = vmatprep.subr.mxu0 0.0
    %3645 = vmatpush1.msra.mxu0 0.0
    %3646 = vmatprep.subr.mxu0 0.0
    %3647 = vmatpush1.msra.mxu0 0.0
    %3648 = vmatprep.subr.mxu0 0.0
    %3649 = vmatpush1.msra.mxu0 0.0
    %3650 = vmatprep.subr.mxu0 0.0
    %3651 = vmatpush1.msra.mxu0 0.0
    %3652 = vmatprep.subr.mxu0 0.0
    %3653 = vmatpush1.msra.mxu0 0.0
    %3654 = vmatprep.subr.mxu0 0.0
    %3655 = vmatpush1.msra.mxu0 0.0
    %3656 = vmatprep.subr.mxu0 0.0
    %3657 = vmatpush1.msra.mxu0 0.0
    %3658 = vmatprep.subr.mxu0 0.0
    %3659 = vmatpush1.msra.mxu0 0.0
    %3660 = vmatprep.subr.mxu0 0.0
    %3661 = vmatpush1.msra.mxu0 0.0
    %3662 = vmatprep.subr.mxu0 0.0
    %3663 = vmatpush1.msra.mxu0 0.0
    %3664 = vmatprep.subr.mxu0 0.0
    %3665 = vmatpush1.msra.mxu0 0.0
    %3666 = vmatprep.subr.mxu0 0.0
    %3667 = vmatpush1.msra.mxu0 0.0
    %3668 = vmatprep.subr.mxu0 0.0
    %3669 = vmatpush1.msra.mxu0 0.0
    %3670 = vmatprep.subr.mxu0 0.0
    %3671 = vmatpush1.msra.mxu0 0.0
    %3672 = vmatprep.subr.mxu0 0.0
    %3673 = vmatpush1.msra.mxu0 0.0
    %3674 = vmatprep.subr.mxu0 0.0
    %3675 = vmatpush1.msra.mxu0 0.0
    %3676 = vmatprep.subr.mxu0 0.0
    %3677 = vmatpush1.msra.mxu0 0.0
    %3678 = vmatprep.mubr.f32.mxu0 0.0
    %3679 = vmatmul.mubr.f32.gmra.mrb[0].mxu0 %v3541
    %v3680 = vpop.f32.mrb[0].mxu0
    %v3681 = vadd.f32 0.0, %v3680
    %v3682 = vpop.f32.mrb[0].mxu0
    %v3683 = vadd.f32 0.0, %v3682
    %3684 = vdwg.mxu0
    %v3685 = vsel %vm533, %v3505, 0
    %3687 = vmatprep.subr.mxu0 %v3507
    %3688 = vmatpush1.msra.mxu0 %v3506
    %3689 = vmatprep.subr.mxu0 %v3511
    %3690 = vmatpush1.msra.mxu0 %v3510
    %3691 = vmatprep.subr.mxu0 %v3515
    %3692 = vmatpush1.msra.mxu0 %v3514
    %3693 = vmatprep.subr.mxu0 %v3519
    %3694 = vmatpush1.msra.mxu0 %v3518
    %3695 = vmatprep.subr.mxu0 0.0
    %3696 = vmatpush1.msra.mxu0 0.0
    %3697 = vmatprep.subr.mxu0 0.0
    %3698 = vmatpush1.msra.mxu0 0.0
    %3699 = vmatprep.subr.mxu0 0.0
    %3700 = vmatpush1.msra.mxu0 0.0
    %3701 = vmatprep.subr.mxu0 0.0
    %3702 = vmatpush1.msra.mxu0 0.0
    %3703 = vmatprep.subr.mxu0 0.0
    %3704 = vmatpush1.msra.mxu0 0.0
    %3705 = vmatprep.subr.mxu0 0.0
    %3706 = vmatpush1.msra.mxu0 0.0
    %3707 = vmatprep.subr.mxu0 0.0
    %3708 = vmatpush1.msra.mxu0 0.0
    %3709 = vmatprep.subr.mxu0 0.0
    %3710 = vmatpush1.msra.mxu0 0.0
    %3711 = vmatprep.subr.mxu0 0.0
    %3712 = vmatpush1.msra.mxu0 0.0
    %3713 = vmatprep.subr.mxu0 0.0
    %3714 = vmatpush1.msra.mxu0 0.0
    %3715 = vmatprep.subr.mxu0 0.0
    %3716 = vmatpush1.msra.mxu0 0.0
    %3717 = vmatprep.subr.mxu0 0.0
    %3718 = vmatpush1.msra.mxu0 0.0
    %3719 = vmatprep.subr.mxu0 0.0
    %3720 = vmatpush1.msra.mxu0 0.0
    %3721 = vmatprep.subr.mxu0 0.0
    %3722 = vmatpush1.msra.mxu0 0.0
    %3723 = vmatprep.subr.mxu0 0.0
    %3724 = vmatpush1.msra.mxu0 0.0
    %3725 = vmatprep.subr.mxu0 0.0
    %3726 = vmatpush1.msra.mxu0 0.0
    %3727 = vmatprep.subr.mxu0 0.0
    %3728 = vmatpush1.msra.mxu0 0.0
    %3729 = vmatprep.subr.mxu0 0.0
    %3730 = vmatpush1.msra.mxu0 0.0
    %3731 = vmatprep.subr.mxu0 0.0
    %3732 = vmatpush1.msra.mxu0 0.0
    %3733 = vmatprep.subr.mxu0 0.0
    %3734 = vmatpush1.msra.mxu0 0.0
    %3735 = vmatprep.subr.mxu0 0.0
    %3736 = vmatpush1.msra.mxu0 0.0
    %3737 = vmatprep.subr.mxu0 0.0
    %3738 = vmatpush1.msra.mxu0 0.0
    %3739 = vmatprep.subr.mxu0 0.0
    %3740 = vmatpush1.msra.mxu0 0.0
    %3741 = vmatprep.subr.mxu0 0.0
    %3742 = vmatpush1.msra.mxu0 0.0
    %3743 = vmatprep.subr.mxu0 0.0
    %3744 = vmatpush1.msra.mxu0 0.0
    %3745 = vmatprep.subr.mxu0 0.0
    %3746 = vmatpush1.msra.mxu0 0.0
    %3747 = vmatprep.subr.mxu0 0.0
    %3748 = vmatpush1.msra.mxu0 0.0
    %3749 = vmatprep.subr.mxu0 0.0
    %3750 = vmatpush1.msra.mxu0 0.0
    %3751 = vmatprep.mubr.f32.mxu0 0.0
    %3752 = vmatmul.mubr.f32.gmra.mrb[0].mxu0 %v3685
    %v3753 = vpop.f32.mrb[0].mxu0
    %v3754 = vadd.f32 %v3610, %v3753
    %v3755 = vpop.f32.mrb[0].mxu0
    %v3756 = vadd.f32 %v3612, %v3755
    %3757 = vdwg.mxu0
    %3758 = vmatprep.subr.mxu0 %v3509
    %3759 = vmatpush1.msra.mxu0 %v3508
    %3760 = vmatprep.subr.mxu0 %v3513
    %3761 = vmatpush1.msra.mxu0 %v3512
    %3762 = vmatprep.subr.mxu0 %v3517
    %3763 = vmatpush1.msra.mxu0 %v3516
    %3764 = vmatprep.subr.mxu0 %v3521
    %3765 = vmatpush1.msra.mxu0 %v3520
    %3766 = vmatprep.subr.mxu0 0.0
    %3767 = vmatpush1.msra.mxu0 0.0
    %3768 = vmatprep.subr.mxu0 0.0
    %3769 = vmatpush1.msra.mxu0 0.0
    %3770 = vmatprep.subr.mxu0 0.0
    %3771 = vmatpush1.msra.mxu0 0.0
    %3772 = vmatprep.subr.mxu0 0.0
    %3773 = vmatpush1.msra.mxu0 0.0
    %3774 = vmatprep.subr.mxu0 0.0
    %3775 = vmatpush1.msra.mxu0 0.0
    %3776 = vmatprep.subr.mxu0 0.0
    %3777 = vmatpush1.msra.mxu0 0.0
    %3778 = vmatprep.subr.mxu0 0.0
    %3779 = vmatpush1.msra.mxu0 0.0
    %3780 = vmatprep.subr.mxu0 0.0
    %3781 = vmatpush1.msra.mxu0 0.0
    %3782 = vmatprep.subr.mxu0 0.0
    %3783 = vmatpush1.msra.mxu0 0.0
    %3784 = vmatprep.subr.mxu0 0.0
    %3785 = vmatpush1.msra.mxu0 0.0
    %3786 = vmatprep.subr.mxu0 0.0
    %3787 = vmatpush1.msra.mxu0 0.0
    %3788 = vmatprep.subr.mxu0 0.0
    %3789 = vmatpush1.msra.mxu0 0.0
    %3790 = vmatprep.subr.mxu0 0.0
    %3791 = vmatpush1.msra.mxu0 0.0
    %3792 = vmatprep.subr.mxu0 0.0
    %3793 = vmatpush1.msra.mxu0 0.0
    %3794 = vmatprep.subr.mxu0 0.0
    %3795 = vmatpush1.msra.mxu0 0.0
    %3796 = vmatprep.subr.mxu0 0.0
    %3797 = vmatpush1.msra.mxu0 0.0
    %3798 = vmatprep.subr.mxu0 0.0
    %3799 = vmatpush1.msra.mxu0 0.0
    %3800 = vmatprep.subr.mxu0 0.0
    %3801 = vmatpush1.msra.mxu0 0.0
    %3802 = vmatprep.subr.mxu0 0.0
    %3803 = vmatpush1.msra.mxu0 0.0
    %3804 = vmatprep.subr.mxu0 0.0
    %3805 = vmatpush1.msra.mxu0 0.0
    %3806 = vmatprep.subr.mxu0 0.0
    %3807 = vmatpush1.msra.mxu0 0.0
    %3808 = vmatprep.subr.mxu0 0.0
    %3809 = vmatpush1.msra.mxu0 0.0
    %3810 = vmatprep.subr.mxu0 0.0
    %3811 = vmatpush1.msra.mxu0 0.0
    %3812 = vmatprep.subr.mxu0 0.0
    %3813 = vmatpush1.msra.mxu0 0.0
    %3814 = vmatprep.subr.mxu0 0.0
    %3815 = vmatpush1.msra.mxu0 0.0
    %3816 = vmatprep.subr.mxu0 0.0
    %3817 = vmatpush1.msra.mxu0 0.0
    %3818 = vmatprep.subr.mxu0 0.0
    %3819 = vmatpush1.msra.mxu0 0.0
    %3820 = vmatprep.subr.mxu0 0.0
    %3821 = vmatpush1.msra.mxu0 0.0
    %3822 = vmatprep.mubr.f32.mxu0 0.0
    %3823 = vmatmul.mubr.f32.gmra.mrb[0].mxu0 %v3685
    %v3824 = vpop.f32.mrb[0].mxu0
    %v3825 = vadd.f32 %v3681, %v3824
    %v3826 = vpop.f32.mrb[0].mxu0
    %v3827 = vadd.f32 %v3683, %v3826
    %3828 = vdwg.mxu0
    %s3829 = scalar_lea.vmem %s9, 256
    %v3830 = vld [vmem:[%s3829] sm:$0xff]
    %v3831 = vld [vmem:[%s3829 + $0x8] sm:$0xff]
    %v3832 = vld [vmem:[%s3829 + $0x10] sm:$0xff]
    %v3833 = vld [vmem:[%s3829 + $0x18] sm:$0xff]
    %v3834 = vld [vmem:[%s3829 + $0x20] sm:$0xff]
    %v3835 = vld [vmem:[%s3829 + $0x28] sm:$0xff]
    %v3836 = vld [vmem:[%s3829 + $0x30] sm:$0xff]
    %v3837 = vld [vmem:[%s3829 + $0x38] sm:$0xff]
    %v3838 = vld [vmem:[%s3829 + $0x40] sm:$0xff]
    %v3839 = vld [vmem:[%s3829 + $0x48] sm:$0xff]
    %v3840 = vld [vmem:[%s3829 + $0x50] sm:$0xff]
    %v3841 = vld [vmem:[%s3829 + $0x58] sm:$0xff]
    %v3842 = vld [vmem:[%s3829 + $0x60] sm:$0xff]
    %v3843 = vld [vmem:[%s3829 + $0x68] sm:$0xff]
    %v3844 = vld [vmem:[%s3829 + $0x70] sm:$0xff]
    %v3845 = vld [vmem:[%s3829 + $0x78] sm:$0xff]
    %v3846 = vrot.slane %v3505, 4
    %v3847 = vsel %vm533, %v3846, 0
    %3849 = vmatprep.subr.mxu0 %v3831
    %3850 = vmatpush1.msra.mxu0 %v3830
    %3851 = vmatprep.subr.mxu0 %v3835
    %3852 = vmatpush1.msra.mxu0 %v3834
    %3853 = vmatprep.subr.mxu0 %v3839
    %3854 = vmatpush1.msra.mxu0 %v3838
    %3855 = vmatprep.subr.mxu0 %v3843
    %3856 = vmatpush1.msra.mxu0 %v3842
    %3857 = vmatprep.subr.mxu0 0.0
    %3858 = vmatpush1.msra.mxu0 0.0
    %3859 = vmatprep.subr.mxu0 0.0
    %3860 = vmatpush1.msra.mxu0 0.0
    %3861 = vmatprep.subr.mxu0 0.0
    %3862 = vmatpush1.msra.mxu0 0.0
    %3863 = vmatprep.subr.mxu0 0.0
    %3864 = vmatpush1.msra.mxu0 0.0
    %3865 = vmatprep.subr.mxu0 0.0
    %3866 = vmatpush1.msra.mxu0 0.0
    %3867 = vmatprep.subr.mxu0 0.0
    %3868 = vmatpush1.msra.mxu0 0.0
    %3869 = vmatprep.subr.mxu0 0.0
    %3870 = vmatpush1.msra.mxu0 0.0
    %3871 = vmatprep.subr.mxu0 0.0
    %3872 = vmatpush1.msra.mxu0 0.0
    %3873 = vmatprep.subr.mxu0 0.0
    %3874 = vmatpush1.msra.mxu0 0.0
    %3875 = vmatprep.subr.mxu0 0.0
    %3876 = vmatpush1.msra.mxu0 0.0
    %3877 = vmatprep.subr.mxu0 0.0
    %3878 = vmatpush1.msra.mxu0 0.0
    %3879 = vmatprep.subr.mxu0 0.0
    %3880 = vmatpush1.msra.mxu0 0.0
    %3881 = vmatprep.subr.mxu0 0.0
    %3882 = vmatpush1.msra.mxu0 0.0
    %3883 = vmatprep.subr.mxu0 0.0
    %3884 = vmatpush1.msra.mxu0 0.0
    %3885 = vmatprep.subr.mxu0 0.0
    %3886 = vmatpush1.msra.mxu0 0.0
    %3887 = vmatprep.subr.mxu0 0.0
    %3888 = vmatpush1.msra.mxu0 0.0
    %3889 = vmatprep.subr.mxu0 0.0
    %3890 = vmatpush1.msra.mxu0 0.0
    %3891 = vmatprep.subr.mxu0 0.0
    %3892 = vmatpush1.msra.mxu0 0.0
    %3893 = vmatprep.subr.mxu0 0.0
    %3894 = vmatpush1.msra.mxu0 0.0
    %3895 = vmatprep.subr.mxu0 0.0
    %3896 = vmatpush1.msra.mxu0 0.0
    %3897 = vmatprep.subr.mxu0 0.0
    %3898 = vmatpush1.msra.mxu0 0.0
    %3899 = vmatprep.subr.mxu0 0.0
    %3900 = vmatpush1.msra.mxu0 0.0
    %3901 = vmatprep.subr.mxu0 0.0
    %3902 = vmatpush1.msra.mxu0 0.0
    %3903 = vmatprep.subr.mxu0 0.0
    %3904 = vmatpush1.msra.mxu0 0.0
    %3905 = vmatprep.subr.mxu0 0.0
    %3906 = vmatpush1.msra.mxu0 0.0
    %3907 = vmatprep.subr.mxu0 0.0
    %3908 = vmatpush1.msra.mxu0 0.0
    %3909 = vmatprep.subr.mxu0 0.0
    %3910 = vmatpush1.msra.mxu0 0.0
    %3911 = vmatprep.subr.mxu0 0.0
    %3912 = vmatpush1.msra.mxu0 0.0
    %3913 = vmatprep.mubr.f32.mxu0 0.0
    %3914 = vmatmul.mubr.f32.gmra.mrb[0].mxu0 %v3847
    %v3915 = vpop.f32.mrb[0].mxu0
    %v3916 = vadd.f32 0.0, %v3915
    %v3917 = vpop.f32.mrb[0].mxu0
    %v3918 = vadd.f32 0.0, %v3917
    %3919 = vdwg.mxu0
    %3920 = vmatprep.subr.mxu0 %v3833
    %3921 = vmatpush1.msra.mxu0 %v3832
    %3922 = vmatprep.subr.mxu0 %v3837
    %3923 = vmatpush1.msra.mxu0 %v3836
    %3924 = vmatprep.subr.mxu0 %v3841
    %3925 = vmatpush1.msra.mxu0 %v3840
    %3926 = vmatprep.subr.mxu0 %v3845
    %3927 = vmatpush1.msra.mxu0 %v3844
    %3928 = vmatprep.subr.mxu0 0.0
    %3929 = vmatpush1.msra.mxu0 0.0
    %3930 = vmatprep.subr.mxu0 0.0
    %3931 = vmatpush1.msra.mxu0 0.0
    %3932 = vmatprep.subr.mxu0 0.0
    %3933 = vmatpush1.msra.mxu0 0.0
    %3934 = vmatprep.subr.mxu0 0.0
    %3935 = vmatpush1.msra.mxu0 0.0
    %3936 = vmatprep.subr.mxu0 0.0
    %3937 = vmatpush1.msra.mxu0 0.0
    %3938 = vmatprep.subr.mxu0 0.0
    %3939 = vmatpush1.msra.mxu0 0.0
    %3940 = vmatprep.subr.mxu0 0.0
    %3941 = vmatpush1.msra.mxu0 0.0
    %3942 = vmatprep.subr.mxu0 0.0
    %3943 = vmatpush1.msra.mxu0 0.0
    %3944 = vmatprep.subr.mxu0 0.0
    %3945 = vmatpush1.msra.mxu0 0.0
    %3946 = vmatprep.subr.mxu0 0.0
    %3947 = vmatpush1.msra.mxu0 0.0
    %3948 = vmatprep.subr.mxu0 0.0
    %3949 = vmatpush1.msra.mxu0 0.0
    %3950 = vmatprep.subr.mxu0 0.0
    %3951 = vmatpush1.msra.mxu0 0.0
    %3952 = vmatprep.subr.mxu0 0.0
    %3953 = vmatpush1.msra.mxu0 0.0
    %3954 = vmatprep.subr.mxu0 0.0
    %3955 = vmatpush1.msra.mxu0 0.0
    %3956 = vmatprep.subr.mxu0 0.0
    %3957 = vmatpush1.msra.mxu0 0.0
    %3958 = vmatprep.subr.mxu0 0.0
    %3959 = vmatpush1.msra.mxu0 0.0
    %3960 = vmatprep.subr.mxu0 0.0
    %3961 = vmatpush1.msra.mxu0 0.0
    %3962 = vmatprep.subr.mxu0 0.0
    %3963 = vmatpush1.msra.mxu0 0.0
    %3964 = vmatprep.subr.mxu0 0.0
    %3965 = vmatpush1.msra.mxu0 0.0
    %3966 = vmatprep.subr.mxu0 0.0
    %3967 = vmatpush1.msra.mxu0 0.0
    %3968 = vmatprep.subr.mxu0 0.0
    %3969 = vmatpush1.msra.mxu0 0.0
    %3970 = vmatprep.subr.mxu0 0.0
    %3971 = vmatpush1.msra.mxu0 0.0
    %3972 = vmatprep.subr.mxu0 0.0
    %3973 = vmatpush1.msra.mxu0 0.0
    %3974 = vmatprep.subr.mxu0 0.0
    %3975 = vmatpush1.msra.mxu0 0.0
    %3976 = vmatprep.subr.mxu0 0.0
    %3977 = vmatpush1.msra.mxu0 0.0
    %3978 = vmatprep.subr.mxu0 0.0
    %3979 = vmatpush1.msra.mxu0 0.0
    %3980 = vmatprep.subr.mxu0 0.0
    %3981 = vmatpush1.msra.mxu0 0.0
    %3982 = vmatprep.subr.mxu0 0.0
    %3983 = vmatpush1.msra.mxu0 0.0
    %3984 = vmatprep.mubr.f32.mxu0 0.0
    %3985 = vmatmul.mubr.f32.gmra.mrb[0].mxu0 %v3847
    %v3986 = vpop.f32.mrb[0].mxu0
    %v3987 = vadd.f32 0.0, %v3986
    %v3988 = vpop.f32.mrb[0].mxu0
    %v3989 = vadd.f32 0.0, %v3988
    %3990 = vdwg.mxu0
    %v3991 = vadd.f32 %v3754, %v3916
    %v3992 = vadd.f32 %v3756, %v3918
    %v3993 = vadd.f32 %v3825, %v3987
    %v3994 = vadd.f32 %v3827, %v3989
    %s3995 = scalar_lea.vmem %s9, 384
    %v3996 = vld [vmem:[%s3995] sm:$0xff]
    %v3997 = vld [vmem:[%s3995 + $0x8] sm:$0xff]
    %v3998 = vld [vmem:[%s3995 + $0x10] sm:$0xff]
    %v3999 = vld [vmem:[%s3995 + $0x18] sm:$0xff]
    %v4000 = vld [vmem:[%s3995 + $0x20] sm:$0xff]
    %v4001 = vld [vmem:[%s3995 + $0x28] sm:$0xff]
    %v4002 = vld [vmem:[%s3995 + $0x30] sm:$0xff]
    %v4003 = vld [vmem:[%s3995 + $0x38] sm:$0xff]
    %v4004 = vld [vmem:[%s3995 + $0x40] sm:$0xff]
    %v4005 = vld [vmem:[%s3995 + $0x48] sm:$0xff]
    %v4006 = vld [vmem:[%s3995 + $0x50] sm:$0xff]
    %v4007 = vld [vmem:[%s3995 + $0x58] sm:$0xff]
    %v4008 = vld [vmem:[%s3995 + $0x60] sm:$0xff]
    %v4009 = vld [vmem:[%s3995 + $0x68] sm:$0xff]
    %v4010 = vld [vmem:[%s3995 + $0x70] sm:$0xff]
    %v4011 = vld [vmem:[%s3995 + $0x78] sm:$0xff]
    %v4012 = vrot.slane %v3505, 6
    %v4013 = vsel %vm533, %v4012, 0
    %4015 = vmatprep.subr.mxu0 %v3997
    %4016 = vmatpush1.msra.mxu0 %v3996
    %4017 = vmatprep.subr.mxu0 %v4001
    %4018 = vmatpush1.msra.mxu0 %v4000
    %4019 = vmatprep.subr.mxu0 %v4005
    %4020 = vmatpush1.msra.mxu0 %v4004
    %4021 = vmatprep.subr.mxu0 %v4009
    %4022 = vmatpush1.msra.mxu0 %v4008
    %4023 = vmatprep.subr.mxu0 0.0
    %4024 = vmatpush1.msra.mxu0 0.0
    %4025 = vmatprep.subr.mxu0 0.0
    %4026 = vmatpush1.msra.mxu0 0.0
    %4027 = vmatprep.subr.mxu0 0.0
    %4028 = vmatpush1.msra.mxu0 0.0
    %4029 = vmatprep.subr.mxu0 0.0
    %4030 = vmatpush1.msra.mxu0 0.0
    %4031 = vmatprep.subr.mxu0 0.0
    %4032 = vmatpush1.msra.mxu0 0.0
    %4033 = vmatprep.subr.mxu0 0.0
    %4034 = vmatpush1.msra.mxu0 0.0
    %4035 = vmatprep.subr.mxu0 0.0
    %4036 = vmatpush1.msra.mxu0 0.0
    %4037 = vmatprep.subr.mxu0 0.0
    %4038 = vmatpush1.msra.mxu0 0.0
    %4039 = vmatprep.subr.mxu0 0.0
    %4040 = vmatpush1.msra.mxu0 0.0
    %4041 = vmatprep.subr.mxu0 0.0
    %4042 = vmatpush1.msra.mxu0 0.0
    %4043 = vmatprep.subr.mxu0 0.0
    %4044 = vmatpush1.msra.mxu0 0.0
    %4045 = vmatprep.subr.mxu0 0.0
    %4046 = vmatpush1.msra.mxu0 0.0
    %4047 = vmatprep.subr.mxu0 0.0
    %4048 = vmatpush1.msra.mxu0 0.0
    %4049 = vmatprep.subr.mxu0 0.0
    %4050 = vmatpush1.msra.mxu0 0.0
    %4051 = vmatprep.subr.mxu0 0.0
    %4052 = vmatpush1.msra.mxu0 0.0
    %4053 = vmatprep.subr.mxu0 0.0
    %4054 = vmatpush1.msra.mxu0 0.0
    %4055 = vmatprep.subr.mxu0 0.0
    %4056 = vmatpush1.msra.mxu0 0.0
    %4057 = vmatprep.subr.mxu0 0.0
    %4058 = vmatpush1.msra.mxu0 0.0
    %4059 = vmatprep.subr.mxu0 0.0
    %4060 = vmatpush1.msra.mxu0 0.0
    %4061 = vmatprep.subr.mxu0 0.0
    %4062 = vmatpush1.msra.mxu0 0.0
    %4063 = vmatprep.subr.mxu0 0.0
    %4064 = vmatpush1.msra.mxu0 0.0
    %4065 = vmatprep.subr.mxu0 0.0
    %4066 = vmatpush1.msra.mxu0 0.0
    %4067 = vmatprep.subr.mxu0 0.0
    %4068 = vmatpush1.msra.mxu0 0.0
    %4069 = vmatprep.subr.mxu0 0.0
    %4070 = vmatpush1.msra.mxu0 0.0
    %4071 = vmatprep.subr.mxu0 0.0
    %4072 = vmatpush1.msra.mxu0 0.0
    %4073 = vmatprep.subr.mxu0 0.0
    %4074 = vmatpush1.msra.mxu0 0.0
    %4075 = vmatprep.subr.mxu0 0.0
    %4076 = vmatpush1.msra.mxu0 0.0
    %4077 = vmatprep.subr.mxu0 0.0
    %4078 = vmatpush1.msra.mxu0 0.0
    %4079 = vmatprep.mubr.f32.mxu0 0.0
    %4080 = vmatmul.mubr.f32.gmra.mrb[0].mxu0 %v4013
    %v4081 = vpop.f32.mrb[0].mxu0
    %v4082 = vadd.f32 0.0, %v4081
    %v4083 = vpop.f32.mrb[0].mxu0
    %v4084 = vadd.f32 0.0, %v4083
    %4085 = vdwg.mxu0
    %4086 = vmatprep.subr.mxu0 %v3999
    %4087 = vmatpush1.msra.mxu0 %v3998
    %4088 = vmatprep.subr.mxu0 %v4003
    %4089 = vmatpush1.msra.mxu0 %v4002
    %4090 = vmatprep.subr.mxu0 %v4007
    %4091 = vmatpush1.msra.mxu0 %v4006
    %4092 = vmatprep.subr.mxu0 %v4011
    %4093 = vmatpush1.msra.mxu0 %v4010
    %4094 = vmatprep.subr.mxu0 0.0
    %4095 = vmatpush1.msra.mxu0 0.0
    %4096 = vmatprep.subr.mxu0 0.0
    %4097 = vmatpush1.msra.mxu0 0.0
    %4098 = vmatprep.subr.mxu0 0.0
    %4099 = vmatpush1.msra.mxu0 0.0
    %4100 = vmatprep.subr.mxu0 0.0
    %4101 = vmatpush1.msra.mxu0 0.0
    %4102 = vmatprep.subr.mxu0 0.0
    %4103 = vmatpush1.msra.mxu0 0.0
    %4104 = vmatprep.subr.mxu0 0.0
    %4105 = vmatpush1.msra.mxu0 0.0
    %4106 = vmatprep.subr.mxu0 0.0
    %4107 = vmatpush1.msra.mxu0 0.0
    %4108 = vmatprep.subr.mxu0 0.0
    %4109 = vmatpush1.msra.mxu0 0.0
    %4110 = vmatprep.subr.mxu0 0.0
    %4111 = vmatpush1.msra.mxu0 0.0
    %4112 = vmatprep.subr.mxu0 0.0
    %4113 = vmatpush1.msra.mxu0 0.0
    %4114 = vmatprep.subr.mxu0 0.0
    %4115 = vmatpush1.msra.mxu0 0.0
    %4116 = vmatprep.subr.mxu0 0.0
    %4117 = vmatpush1.msra.mxu0 0.0
    %4118 = vmatprep.subr.mxu0 0.0
    %4119 = vmatpush1.msra.mxu0 0.0
    %4120 = vmatprep.subr.mxu0 0.0
    %4121 = vmatpush1.msra.mxu0 0.0
    %4122 = vmatprep.subr.mxu0 0.0
    %4123 = vmatpush1.msra.mxu0 0.0
    %4124 = vmatprep.subr.mxu0 0.0
    %4125 = vmatpush1.msra.mxu0 0.0
    %4126 = vmatprep.subr.mxu0 0.0
    %4127 = vmatpush1.msra.mxu0 0.0
    %4128 = vmatprep.subr.mxu0 0.0
    %4129 = vmatpush1.msra.mxu0 0.0
    %4130 = vmatprep.subr.mxu0 0.0
    %4131 = vmatpush1.msra.mxu0 0.0
    %4132 = vmatprep.subr.mxu0 0.0
    %4133 = vmatpush1.msra.mxu0 0.0
    %4134 = vmatprep.subr.mxu0 0.0
    %4135 = vmatpush1.msra.mxu0 0.0
    %4136 = vmatprep.subr.mxu0 0.0
    %4137 = vmatpush1.msra.mxu0 0.0
    %4138 = vmatprep.subr.mxu0 0.0
    %4139 = vmatpush1.msra.mxu0 0.0
    %4140 = vmatprep.subr.mxu0 0.0
    %4141 = vmatpush1.msra.mxu0 0.0
    %4142 = vmatprep.subr.mxu0 0.0
    %4143 = vmatpush1.msra.mxu0 0.0
    %4144 = vmatprep.subr.mxu0 0.0
    %4145 = vmatpush1.msra.mxu0 0.0
    %4146 = vmatprep.subr.mxu0 0.0
    %4147 = vmatpush1.msra.mxu0 0.0
    %4148 = vmatprep.subr.mxu0 0.0
    %4149 = vmatpush1.msra.mxu0 0.0
    %4150 = vmatprep.mubr.f32.mxu0 0.0
    %4151 = vmatmul.mubr.f32.gmra.mrb[0].mxu0 %v4013
    %v4152 = vpop.f32.mrb[0].mxu0
    %v4153 = vadd.f32 0.0, %v4152
    %v4154 = vpop.f32.mrb[0].mxu0
    %v4155 = vadd.f32 0.0, %v4154
    %4156 = vdwg.mxu0
    %v4157 = vadd.f32 %v3991, %v4082
    %v4158 = vadd.f32 %v3992, %v4084
    %v4159 = vadd.f32 %v3993, %v4153
    %v4160 = vadd.f32 %v3994, %v4155
    %v4161 = vld [vmem:[%s10] sm:$0xf]
    %v4163 = vlaneseq
    %v4164 = vshrl.u32 %v4163, 7
    %v4165 = vsub.s32 0, %v4164
    %v4166 = vrot.slane %v4161, %v4165
    %v4167 = vlaneseq
    %v4168 = vshrl.u32 %v4167, 7
    %v4169 = vsub.s32 1, %v4168
    %v4170 = vrot.slane %v4161, %v4169
    %v4171 = vlaneseq
    %v4172 = vshrl.u32 %v4171, 7
    %v4173 = vsub.s32 2, %v4172
    %v4174 = vrot.slane %v4161, %v4173
    %v4175 = vlaneseq
    %v4176 = vshrl.u32 %v4175, 7
    %v4177 = vsub.s32 3, %v4176
    %v4178 = vrot.slane %v4161, %v4177
    %v4183 = vadd.f32 %v4157, %v4166
    %v4184 = vadd.f32 %v4158, %v4170
    %v4185 = vadd.f32 %v4159, %v4174
    %v4186 = vadd.f32 %v4160, %v4178
    %v4187 = vmax.f32 %v4183, 0.0
    %v4188 = vmax.f32 %v4184, 0.0
    %v4189 = vmax.f32 %v4185, 0.0
    %v4190 = vmax.f32 %v4186, 0.0
    %v4191 = vld [vmem:[#allocation7] sm:$0xff]
    %v4192 = vld [vmem:[#allocation7 + $0x8] sm:$0xff]
    %v4193 = vld [vmem:[#allocation7 + $0x10] sm:$0xff]
    %v4194 = vld [vmem:[#allocation7 + $0x18] sm:$0xff]
    %v4195 = vld [vmem:[#allocation7 + $0x20] sm:$0xff]
    %v4196 = vld [vmem:[#allocation7 + $0x28] sm:$0xff]
    %v4197 = vld [vmem:[#allocation7 + $0x30] sm:$0xff]
    %v4198 = vld [vmem:[#allocation7 + $0x38] sm:$0xff]
    %v4199 = vld [vmem:[#allocation7 + $0x40] sm:$0xff]
    %v4200 = vld [vmem:[#allocation7 + $0x48] sm:$0xff]
    %v4201 = vld [vmem:[#allocation7 + $0x50] sm:$0xff]
    %v4202 = vld [vmem:[#allocation7 + $0x58] sm:$0xff]
    %v4203 = vld [vmem:[#allocation7 + $0x60] sm:$0xff]
    %v4204 = vld [vmem:[#allocation7 + $0x68] sm:$0xff]
    %v4205 = vld [vmem:[#allocation7 + $0x70] sm:$0xff]
    %v4206 = vld [vmem:[#allocation7 + $0x78] sm:$0xff]
    %v4207 = vld [vmem:[#allocation7 + $0x80] sm:$0xff]
    %v4208 = vld [vmem:[#allocation7 + $0x88] sm:$0xff]
    %v4209 = vld [vmem:[#allocation7 + $0x90] sm:$0xff]
    %v4210 = vld [vmem:[#allocation7 + $0x98] sm:$0xff]
    %v4211 = vld [vmem:[#allocation7 + $0xa0] sm:$0xff]
    %v4212 = vld [vmem:[#allocation7 + $0xa8] sm:$0xff]
    %v4213 = vld [vmem:[#allocation7 + $0xb0] sm:$0xff]
    %v4214 = vld [vmem:[#allocation7 + $0xb8] sm:$0xff]
    %v4215 = vld [vmem:[#allocation7 + $0xc0] sm:$0xff]
    %v4216 = vld [vmem:[#allocation7 + $0xc8] sm:$0xff]
    %v4217 = vld [vmem:[#allocation7 + $0xd0] sm:$0xff]
    %v4218 = vld [vmem:[#allocation7 + $0xd8] sm:$0xff]
    %v4219 = vld [vmem:[#allocation7 + $0xe0] sm:$0xff]
    %v4220 = vld [vmem:[#allocation7 + $0xe8] sm:$0xff]
    %v4221 = vld [vmem:[#allocation7 + $0xf0] sm:$0xff]
    %v4222 = vld [vmem:[#allocation7 + $0xf8] sm:$0xff]
    %v4223 = vld [vmem:[#allocation7 + $0x100] sm:$0xff]
    %v4224 = vld [vmem:[#allocation7 + $0x108] sm:$0xff]
    %v4225 = vld [vmem:[#allocation7 + $0x110] sm:$0xff]
    %v4226 = vld [vmem:[#allocation7 + $0x118] sm:$0xff]
    %v4227 = vld [vmem:[#allocation7 + $0x120] sm:$0xff]
    %v4228 = vld [vmem:[#allocation7 + $0x128] sm:$0xff]
    %v4229 = vld [vmem:[#allocation7 + $0x130] sm:$0xff]
    %v4230 = vld [vmem:[#allocation7 + $0x138] sm:$0xff]
    %v4231 = vld [vmem:[#allocation7 + $0x140] sm:$0xff]
    %v4232 = vld [vmem:[#allocation7 + $0x148] sm:$0xff]
    %v4233 = vld [vmem:[#allocation7 + $0x150] sm:$0xff]
    %v4234 = vld [vmem:[#allocation7 + $0x158] sm:$0xff]
    %v4235 = vld [vmem:[#allocation7 + $0x160] sm:$0xff]
    %v4236 = vld [vmem:[#allocation7 + $0x168] sm:$0xff]
    %v4237 = vld [vmem:[#allocation7 + $0x170] sm:$0xff]
    %v4238 = vld [vmem:[#allocation7 + $0x178] sm:$0xff]
    %v4239 = vld [vmem:[#allocation7 + $0x180] sm:$0xff]
    %v4240 = vld [vmem:[#allocation7 + $0x188] sm:$0xff]
    %v4241 = vld [vmem:[#allocation7 + $0x190] sm:$0xff]
    %v4242 = vld [vmem:[#allocation7 + $0x198] sm:$0xff]
    %v4243 = vld [vmem:[#allocation7 + $0x1a0] sm:$0xff]
    %v4244 = vld [vmem:[#allocation7 + $0x1a8] sm:$0xff]
    %v4245 = vld [vmem:[#allocation7 + $0x1b0] sm:$0xff]
    %v4246 = vld [vmem:[#allocation7 + $0x1b8] sm:$0xff]
    %v4247 = vld [vmem:[#allocation7 + $0x1c0] sm:$0xff]
    %v4248 = vld [vmem:[#allocation7 + $0x1c8] sm:$0xff]
    %v4249 = vld [vmem:[#allocation7 + $0x1d0] sm:$0xff]
    %v4250 = vld [vmem:[#allocation7 + $0x1d8] sm:$0xff]
    %v4251 = vld [vmem:[#allocation7 + $0x1e0] sm:$0xff]
    %v4252 = vld [vmem:[#allocation7 + $0x1e8] sm:$0xff]
    %v4253 = vld [vmem:[#allocation7 + $0x1f0] sm:$0xff]
    %v4254 = vld [vmem:[#allocation7 + $0x1f8] sm:$0xff]
    %v4255 = vld [vmem:[#allocation7 + $0x200] sm:$0xff]
    %v4256 = vld [vmem:[#allocation7 + $0x208] sm:$0xff]
    %v4257 = vld [vmem:[#allocation7 + $0x210] sm:$0xff]
    %v4258 = vld [vmem:[#allocation7 + $0x218] sm:$0xff]
    %v4259 = vld [vmem:[#allocation7 + $0x220] sm:$0xff]
    %v4260 = vld [vmem:[#allocation7 + $0x228] sm:$0xff]
    %v4261 = vld [vmem:[#allocation7 + $0x230] sm:$0xff]
    %v4262 = vld [vmem:[#allocation7 + $0x238] sm:$0xff]
    %v4263 = vld [vmem:[#allocation7 + $0x240] sm:$0xff]
    %v4264 = vld [vmem:[#allocation7 + $0x248] sm:$0xff]
    %v4265 = vld [vmem:[#allocation7 + $0x250] sm:$0xff]
    %v4266 = vld [vmem:[#allocation7 + $0x258] sm:$0xff]
    %v4267 = vld [vmem:[#allocation7 + $0x260] sm:$0xff]
    %v4268 = vld [vmem:[#allocation7 + $0x268] sm:$0xff]
    %v4269 = vld [vmem:[#allocation7 + $0x270] sm:$0xff]
    %v4270 = vld [vmem:[#allocation7 + $0x278] sm:$0xff]
    %v4271 = vld [vmem:[#allocation7 + $0x280] sm:$0xff]
    %v4272 = vld [vmem:[#allocation7 + $0x288] sm:$0xff]
    %v4273 = vld [vmem:[#allocation7 + $0x290] sm:$0xff]
    %v4274 = vld [vmem:[#allocation7 + $0x298] sm:$0xff]
    %v4275 = vld [vmem:[#allocation7 + $0x2a0] sm:$0xff]
    %v4276 = vld [vmem:[#allocation7 + $0x2a8] sm:$0xff]
    %v4277 = vld [vmem:[#allocation7 + $0x2b0] sm:$0xff]
    %v4278 = vld [vmem:[#allocation7 + $0x2b8] sm:$0xff]
    %v4279 = vld [vmem:[#allocation7 + $0x2c0] sm:$0xff]
    %v4280 = vld [vmem:[#allocation7 + $0x2c8] sm:$0xff]
    %v4281 = vld [vmem:[#allocation7 + $0x2d0] sm:$0xff]
    %v4282 = vld [vmem:[#allocation7 + $0x2d8] sm:$0xff]
    %v4283 = vld [vmem:[#allocation7 + $0x2e0] sm:$0xff]
    %v4284 = vld [vmem:[#allocation7 + $0x2e8] sm:$0xff]
    %v4285 = vld [vmem:[#allocation7 + $0x2f0] sm:$0xff]
    %v4286 = vld [vmem:[#allocation7 + $0x2f8] sm:$0xff]
    %v4287 = vld [vmem:[#allocation7 + $0x300] sm:$0xff]
    %v4288 = vld [vmem:[#allocation7 + $0x308] sm:$0xff]
    %v4289 = vld [vmem:[#allocation7 + $0x310] sm:$0xff]
    %v4290 = vld [vmem:[#allocation7 + $0x318] sm:$0xff]
    %v4291 = vld [vmem:[#allocation7 + $0x320] sm:$0xff]
    %v4292 = vld [vmem:[#allocation7 + $0x328] sm:$0xff]
    %v4293 = vld [vmem:[#allocation7 + $0x330] sm:$0xff]
    %v4294 = vld [vmem:[#allocation7 + $0x338] sm:$0xff]
    %v4295 = vld [vmem:[#allocation7 + $0x340] sm:$0xff]
    %v4296 = vld [vmem:[#allocation7 + $0x348] sm:$0xff]
    %v4297 = vld [vmem:[#allocation7 + $0x350] sm:$0xff]
    %v4298 = vld [vmem:[#allocation7 + $0x358] sm:$0xff]
    %v4299 = vld [vmem:[#allocation7 + $0x360] sm:$0xff]
    %v4300 = vld [vmem:[#allocation7 + $0x368] sm:$0xff]
    %v4301 = vld [vmem:[#allocation7 + $0x370] sm:$0xff]
    %v4302 = vld [vmem:[#allocation7 + $0x378] sm:$0xff]
    %v4303 = vld [vmem:[#allocation7 + $0x380] sm:$0xff]
    %v4304 = vld [vmem:[#allocation7 + $0x388] sm:$0xff]
    %v4305 = vld [vmem:[#allocation7 + $0x390] sm:$0xff]
    %v4306 = vld [vmem:[#allocation7 + $0x398] sm:$0xff]
    %v4307 = vld [vmem:[#allocation7 + $0x3a0] sm:$0xff]
    %v4308 = vld [vmem:[#allocation7 + $0x3a8] sm:$0xff]
    %v4309 = vld [vmem:[#allocation7 + $0x3b0] sm:$0xff]
    %v4310 = vld [vmem:[#allocation7 + $0x3b8] sm:$0xff]
    %v4311 = vld [vmem:[#allocation7 + $0x3c0] sm:$0xff]
    %v4312 = vld [vmem:[#allocation7 + $0x3c8] sm:$0xff]
    %v4313 = vld [vmem:[#allocation7 + $0x3d0] sm:$0xff]
    %v4314 = vld [vmem:[#allocation7 + $0x3d8] sm:$0xff]
    %v4315 = vld [vmem:[#allocation7 + $0x3e0] sm:$0xff]
    %v4316 = vld [vmem:[#allocation7 + $0x3e8] sm:$0xff]
    %v4317 = vld [vmem:[#allocation7 + $0x3f0] sm:$0xff]
    %v4318 = vld [vmem:[#allocation7 + $0x3f8] sm:$0xff]
    %v4319 = vld [vmem:[%s12] sm:$0x3]
    %v4321 = vlaneseq
    %v4322 = vshrl.u32 %v4321, 7
    %v4323 = vsub.s32 0, %v4322
    %v4324 = vrot.slane %v4319, %v4323
    %v4325 = vlaneseq
    %v4326 = vshrl.u32 %v4325, 7
    %v4327 = vsub.s32 1, %v4326
    %v4328 = vrot.slane %v4319, %v4327
    %4331 = vmatprep.subr.mxu0 %v4192
    %4332 = vmatpush1.msra.mxu0 %v4191
    %4333 = vmatprep.subr.mxu0 %v4194
    %4334 = vmatpush1.msra.mxu0 %v4193
    %4335 = vmatprep.subr.mxu0 %v4196
    %4336 = vmatpush1.msra.mxu0 %v4195
    %4337 = vmatprep.subr.mxu0 %v4198
    %4338 = vmatpush1.msra.mxu0 %v4197
    %4339 = vmatprep.subr.mxu0 %v4200
    %4340 = vmatpush1.msra.mxu0 %v4199
    %4341 = vmatprep.subr.mxu0 %v4202
    %4342 = vmatpush1.msra.mxu0 %v4201
    %4343 = vmatprep.subr.mxu0 %v4204
    %4344 = vmatpush1.msra.mxu0 %v4203
    %4345 = vmatprep.subr.mxu0 %v4206
    %4346 = vmatpush1.msra.mxu0 %v4205
    %4347 = vmatprep.subr.mxu0 %v4208
    %4348 = vmatpush1.msra.mxu0 %v4207
    %4349 = vmatprep.subr.mxu0 %v4210
    %4350 = vmatpush1.msra.mxu0 %v4209
    %4351 = vmatprep.subr.mxu0 %v4212
    %4352 = vmatpush1.msra.mxu0 %v4211
    %4353 = vmatprep.subr.mxu0 %v4214
    %4354 = vmatpush1.msra.mxu0 %v4213
    %4355 = vmatprep.subr.mxu0 %v4216
    %4356 = vmatpush1.msra.mxu0 %v4215
    %4357 = vmatprep.subr.mxu0 %v4218
    %4358 = vmatpush1.msra.mxu0 %v4217
    %4359 = vmatprep.subr.mxu0 %v4220
    %4360 = vmatpush1.msra.mxu0 %v4219
    %4361 = vmatprep.subr.mxu0 %v4222
    %4362 = vmatpush1.msra.mxu0 %v4221
    %4363 = vmatprep.subr.mxu0 %v4224
    %4364 = vmatpush1.msra.mxu0 %v4223
    %4365 = vmatprep.subr.mxu0 %v4226
    %4366 = vmatpush1.msra.mxu0 %v4225
    %4367 = vmatprep.subr.mxu0 %v4228
    %4368 = vmatpush1.msra.mxu0 %v4227
    %4369 = vmatprep.subr.mxu0 %v4230
    %4370 = vmatpush1.msra.mxu0 %v4229
    %4371 = vmatprep.subr.mxu0 %v4232
    %4372 = vmatpush1.msra.mxu0 %v4231
    %4373 = vmatprep.subr.mxu0 %v4234
    %4374 = vmatpush1.msra.mxu0 %v4233
    %4375 = vmatprep.subr.mxu0 %v4236
    %4376 = vmatpush1.msra.mxu0 %v4235
    %4377 = vmatprep.subr.mxu0 %v4238
    %4378 = vmatpush1.msra.mxu0 %v4237
    %4379 = vmatprep.subr.mxu0 %v4240
    %4380 = vmatpush1.msra.mxu0 %v4239
    %4381 = vmatprep.subr.mxu0 %v4242
    %4382 = vmatpush1.msra.mxu0 %v4241
    %4383 = vmatprep.subr.mxu0 %v4244
    %4384 = vmatpush1.msra.mxu0 %v4243
    %4385 = vmatprep.subr.mxu0 %v4246
    %4386 = vmatpush1.msra.mxu0 %v4245
    %4387 = vmatprep.subr.mxu0 %v4248
    %4388 = vmatpush1.msra.mxu0 %v4247
    %4389 = vmatprep.subr.mxu0 %v4250
    %4390 = vmatpush1.msra.mxu0 %v4249
    %4391 = vmatprep.subr.mxu0 %v4252
    %4392 = vmatpush1.msra.mxu0 %v4251
    %4393 = vmatprep.subr.mxu0 %v4254
    %4394 = vmatpush1.msra.mxu0 %v4253
    %4395 = vmatprep.mubr.f32.mxu0 %v4188
    %4396 = vmatmul.mubr.f32.gmra.mrb[0].mxu0 %v4187
    %v4397 = vpop.f32.mrb[0].mxu0
    %v4398 = vadd.f32 %v4324, %v4397
    %v4399 = vpop.f32.mrb[0].mxu0
    %v4400 = vadd.f32 %v4328, %v4399
    %4401 = vdwg.mxu0
    %4402 = vmatprep.subr.mxu0 %v4256
    %4403 = vmatpush1.msra.mxu0 %v4255
    %4404 = vmatprep.subr.mxu0 %v4258
    %4405 = vmatpush1.msra.mxu0 %v4257
    %4406 = vmatprep.subr.mxu0 %v4260
    %4407 = vmatpush1.msra.mxu0 %v4259
    %4408 = vmatprep.subr.mxu0 %v4262
    %4409 = vmatpush1.msra.mxu0 %v4261
    %4410 = vmatprep.subr.mxu0 %v4264
    %4411 = vmatpush1.msra.mxu0 %v4263
    %4412 = vmatprep.subr.mxu0 %v4266
    %4413 = vmatpush1.msra.mxu0 %v4265
    %4414 = vmatprep.subr.mxu0 %v4268
    %4415 = vmatpush1.msra.mxu0 %v4267
    %4416 = vmatprep.subr.mxu0 %v4270
    %4417 = vmatpush1.msra.mxu0 %v4269
    %4418 = vmatprep.subr.mxu0 %v4272
    %4419 = vmatpush1.msra.mxu0 %v4271
    %4420 = vmatprep.subr.mxu0 %v4274
    %4421 = vmatpush1.msra.mxu0 %v4273
    %4422 = vmatprep.subr.mxu0 %v4276
    %4423 = vmatpush1.msra.mxu0 %v4275
    %4424 = vmatprep.subr.mxu0 %v4278
    %4425 = vmatpush1.msra.mxu0 %v4277
    %4426 = vmatprep.subr.mxu0 %v4280
    %4427 = vmatpush1.msra.mxu0 %v4279
    %4428 = vmatprep.subr.mxu0 %v4282
    %4429 = vmatpush1.msra.mxu0 %v4281
    %4430 = vmatprep.subr.mxu0 %v4284
    %4431 = vmatpush1.msra.mxu0 %v4283
    %4432 = vmatprep.subr.mxu0 %v4286
    %4433 = vmatpush1.msra.mxu0 %v4285
    %4434 = vmatprep.subr.mxu0 %v4288
    %4435 = vmatpush1.msra.mxu0 %v4287
    %4436 = vmatprep.subr.mxu0 %v4290
    %4437 = vmatpush1.msra.mxu0 %v4289
    %4438 = vmatprep.subr.mxu0 %v4292
    %4439 = vmatpush1.msra.mxu0 %v4291
    %4440 = vmatprep.subr.mxu0 %v4294
    %4441 = vmatpush1.msra.mxu0 %v4293
    %4442 = vmatprep.subr.mxu0 %v4296
    %4443 = vmatpush1.msra.mxu0 %v4295
    %4444 = vmatprep.subr.mxu0 %v4298
    %4445 = vmatpush1.msra.mxu0 %v4297
    %4446 = vmatprep.subr.mxu0 %v4300
    %4447 = vmatpush1.msra.mxu0 %v4299
    %4448 = vmatprep.subr.mxu0 %v4302
    %4449 = vmatpush1.msra.mxu0 %v4301
    %4450 = vmatprep.subr.mxu0 %v4304
    %4451 = vmatpush1.msra.mxu0 %v4303
    %4452 = vmatprep.subr.mxu0 %v4306
    %4453 = vmatpush1.msra.mxu0 %v4305
    %4454 = vmatprep.subr.mxu0 %v4308
    %4455 = vmatpush1.msra.mxu0 %v4307
    %4456 = vmatprep.subr.mxu0 %v4310
    %4457 = vmatpush1.msra.mxu0 %v4309
    %4458 = vmatprep.subr.mxu0 %v4312
    %4459 = vmatpush1.msra.mxu0 %v4311
    %4460 = vmatprep.subr.mxu0 %v4314
    %4461 = vmatpush1.msra.mxu0 %v4313
    %4462 = vmatprep.subr.mxu0 %v4316
    %4463 = vmatpush1.msra.mxu0 %v4315
    %4464 = vmatprep.subr.mxu0 %v4318
    %4465 = vmatpush1.msra.mxu0 %v4317
    %4466 = vmatprep.mubr.f32.mxu0 %v4190
    %4467 = vmatmul.mubr.f32.gmra.mrb[0].mxu0 %v4189
    %v4468 = vpop.f32.mrb[0].mxu0
    %v4469 = vadd.f32 %v4398, %v4468
    %v4470 = vpop.f32.mrb[0].mxu0
    %v4471 = vadd.f32 %v4400, %v4470
    %4472 = vdwg.mxu0
    %v4473 = vmax.f32 %v4469, 0.0
    %v4474 = vmax.f32 %v4471, 0.0
    %v4475 = vld [vmem:[#allocation8] sm:$0xff]
    %v4476 = vld [vmem:[#allocation8 + $0x8] sm:$0xff]
    %v4477 = vld [vmem:[#allocation8 + $0x10] sm:$0xff]
    %v4478 = vld [vmem:[#allocation8 + $0x18] sm:$0xff]
    %v4479 = vld [vmem:[#allocation8 + $0x20] sm:$0xff]
    %v4480 = vld [vmem:[#allocation8 + $0x28] sm:$0xff]
    %v4481 = vld [vmem:[#allocation8 + $0x30] sm:$0xff]
    %v4482 = vld [vmem:[#allocation8 + $0x38] sm:$0xff]
    %v4483 = vld [vmem:[#allocation8 + $0x40] sm:$0xff]
    %v4484 = vld [vmem:[#allocation8 + $0x48] sm:$0xff]
    %v4485 = vld [vmem:[#allocation8 + $0x50] sm:$0xff]
    %v4486 = vld [vmem:[#allocation8 + $0x58] sm:$0xff]
    %v4487 = vld [vmem:[#allocation8 + $0x60] sm:$0xff]
    %v4488 = vld [vmem:[#allocation8 + $0x68] sm:$0xff]
    %v4489 = vld [vmem:[#allocation8 + $0x70] sm:$0xff]
    %v4490 = vld [vmem:[#allocation8 + $0x78] sm:$0xff]
    %v4491 = vld [vmem:[#allocation8 + $0x80] sm:$0xff]
    %v4492 = vld [vmem:[#allocation8 + $0x88] sm:$0xff]
    %v4493 = vld [vmem:[#allocation8 + $0x90] sm:$0xff]
    %v4494 = vld [vmem:[#allocation8 + $0x98] sm:$0xff]
    %v4495 = vld [vmem:[#allocation8 + $0xa0] sm:$0xff]
    %v4496 = vld [vmem:[#allocation8 + $0xa8] sm:$0xff]
    %v4497 = vld [vmem:[#allocation8 + $0xb0] sm:$0xff]
    %v4498 = vld [vmem:[#allocation8 + $0xb8] sm:$0xff]
    %v4499 = vld [vmem:[#allocation8 + $0xc0] sm:$0xff]
    %v4500 = vld [vmem:[#allocation8 + $0xc8] sm:$0xff]
    %v4501 = vld [vmem:[#allocation8 + $0xd0] sm:$0xff]
    %v4502 = vld [vmem:[#allocation8 + $0xd8] sm:$0xff]
    %v4503 = vld [vmem:[#allocation8 + $0xe0] sm:$0xff]
    %v4504 = vld [vmem:[#allocation8 + $0xe8] sm:$0xff]
    %v4505 = vld [vmem:[#allocation8 + $0xf0] sm:$0xff]
    %v4506 = vld [vmem:[#allocation8 + $0xf8] sm:$0xff]
    %v4507 = vld [vmem:[%s14] sm:$0x1]
    %v4509 = vlaneseq
    %v4510 = vshrl.u32 %v4509, 7
    %v4511 = vsub.s32 0, %v4510
    %v4512 = vrot.slane %v4507, %v4511
    %4514 = vmatprep.subr.mxu0 0.0
    %4515 = vmatpush1.msra.mxu0 %v4475
    %4516 = vmatprep.subr.mxu0 0.0
    %4517 = vmatpush1.msra.mxu0 %v4476
    %4518 = vmatprep.subr.mxu0 0.0
    %4519 = vmatpush1.msra.mxu0 %v4477
    %4520 = vmatprep.subr.mxu0 0.0
    %4521 = vmatpush1.msra.mxu0 %v4478
    %4522 = vmatprep.subr.mxu0 0.0
    %4523 = vmatpush1.msra.mxu0 %v4479
    %4524 = vmatprep.subr.mxu0 0.0
    %4525 = vmatpush1.msra.mxu0 %v4480
    %4526 = vmatprep.subr.mxu0 0.0
    %4527 = vmatpush1.msra.mxu0 %v4481
    %4528 = vmatprep.subr.mxu0 0.0
    %4529 = vmatpush1.msra.mxu0 %v4482
    %4530 = vmatprep.subr.mxu0 0.0
    %4531 = vmatpush1.msra.mxu0 %v4483
    %4532 = vmatprep.subr.mxu0 0.0
    %4533 = vmatpush1.msra.mxu0 %v4484
    %4534 = vmatprep.subr.mxu0 0.0
    %4535 = vmatpush1.msra.mxu0 %v4485
    %4536 = vmatprep.subr.mxu0 0.0
    %4537 = vmatpush1.msra.mxu0 %v4486
    %4538 = vmatprep.subr.mxu0 0.0
    %4539 = vmatpush1.msra.mxu0 %v4487
    %4540 = vmatprep.subr.mxu0 0.0
    %4541 = vmatpush1.msra.mxu0 %v4488
    %4542 = vmatprep.subr.mxu0 0.0
    %4543 = vmatpush1.msra.mxu0 %v4489
    %4544 = vmatprep.subr.mxu0 0.0
    %4545 = vmatpush1.msra.mxu0 %v4490
    %4546 = vmatprep.subr.mxu0 0.0
    %4547 = vmatpush1.msra.mxu0 %v4491
    %4548 = vmatprep.subr.mxu0 0.0
    %4549 = vmatpush1.msra.mxu0 %v4492
    %4550 = vmatprep.subr.mxu0 0.0
    %4551 = vmatpush1.msra.mxu0 %v4493
    %4552 = vmatprep.subr.mxu0 0.0
    %4553 = vmatpush1.msra.mxu0 %v4494
    %4554 = vmatprep.subr.mxu0 0.0
    %4555 = vmatpush1.msra.mxu0 %v4495
    %4556 = vmatprep.subr.mxu0 0.0
    %4557 = vmatpush1.msra.mxu0 %v4496
    %4558 = vmatprep.subr.mxu0 0.0
    %4559 = vmatpush1.msra.mxu0 %v4497
    %4560 = vmatprep.subr.mxu0 0.0
    %4561 = vmatpush1.msra.mxu0 %v4498
    %4562 = vmatprep.subr.mxu0 0.0
    %4563 = vmatpush1.msra.mxu0 %v4499
    %4564 = vmatprep.subr.mxu0 0.0
    %4565 = vmatpush1.msra.mxu0 %v4500
    %4566 = vmatprep.subr.mxu0 0.0
    %4567 = vmatpush1.msra.mxu0 %v4501
    %4568 = vmatprep.subr.mxu0 0.0
    %4569 = vmatpush1.msra.mxu0 %v4502
    %4570 = vmatprep.subr.mxu0 0.0
    %4571 = vmatpush1.msra.mxu0 %v4503
    %4572 = vmatprep.subr.mxu0 0.0
    %4573 = vmatpush1.msra.mxu0 %v4504
    %4574 = vmatprep.subr.mxu0 0.0
    %4575 = vmatpush1.msra.mxu0 %v4505
    %4576 = vmatprep.subr.mxu0 0.0
    %4577 = vmatpush1.msra.mxu0 %v4506
    %4578 = vmatprep.mubr.f32.mxu0 %v4474
    %4579 = vmatmul.mubr.f32.gmra.mrb[0].mxu0 %v4473
    %v4580 = vpop.f32.mrb[0].mxu0
    %v4581 = vadd.f32 %v4512, %v4580
    %v4582 = vpop.f32.mrb[0].mxu0
    %4583 = vdwg.mxu0
    %4584 = vst [vmem:[#allocation10] sm:$0x3] %v4581
    // Predicated region
    $region78: #{lmodel_forward.1} parent=1 // pred_check
      _
    $region79: #{lmodel_forward.1} parent=1 // pred_check_branch
      %4586 = sbr.rel (0) target = $region81
    $region80: #{lmodel_forward.1} parent=1 // pred_region
      %s4588 = ssub.s32 32, 32
      %4589 = vsyncadd [#allocation4], %s4588
      %s4591 = sshll.u32 [#allocation10], 4
      %s4592 = int_to_ptr.vmem [resolvable:$true] %s4591
      %4594 = dma.vmem_to_hbm [thread:$0]  %s4592, 32, %s15, [#allocation4]
    $region81: #{lmodel_forward.1} parent=1 // pred_fallthru
      _
    // Predicated region
    $region82: #{lmodel_forward.1} parent=1 // pred_check
      _
    $region83: #{lmodel_forward.1} parent=1 // pred_check_branch
      %4596 = sbr.rel (0) target = $region85
    $region84: #{lmodel_forward.1} parent=1 // pred_region
      %4597 = dma.done [#allocation4], 32
    $region85: #{lmodel_forward.1} parent=1 // pred_fallthru
      _
    %4598 = vsyncpa [#allocation3], 1
    %4599 = vsyncpa [#allocation6], 1
    %4600 = vsyncpa [#allocation9], 1
    %4601 = vsyncpa [#allocation4], 1

</llo_original>
